<compile_context>
chip_gen: v7x
topology: tpu7x:2x2x1
jax: 0.10.0
libtpu: 0.0.40
codegen_flags: <defaults>
</compile_context>

<pallas_src>
import functools
import math

import jax
import jax.numpy as jnp
from jax import lax
from jax.experimental import pallas as pl
from jax.experimental.pallas import tpu as pltpu


def _fused_attention_kernel(x_ref, wq_ref, wk_ref, wv_ref, bq_ref, bk_ref, bv_ref,
                            wo_ref, bo_ref, o_ref,
                            q_hm, k_hm, v_hm, ctx_ref, *,
                            n_heads, d_head, kv_block, causal, approx_recip):
    """One batch element, fully fused:
       in_proj -> head-major relayout -> per-q-group / per-kv-block attention with
       softmax over the HEAD axis -> quirky row-major relayout (ctx scratch) ->
       out_proj.

    x_ref holds the q-group-permuted rows of x (see wrapper):
        kernel row t = j*G + a  <->  original row a*H + j,   G = S // H.

    Shapes:
      x_ref : (1, S, E)           wq/wk/wv/wo_ref : (E, E)      bq/bk/bv/bo_ref : (1, E) f32
      o_ref : (1, H, G, E)        q_hm/k_hm/v_hm  : (H, S, dh)  ctx_ref : (H, G, E)
    """
    H, dh = n_heads, d_head
    S = x_ref.shape[1]
    G = S // H
    num_kv = S // kv_block
    cd = x_ref.dtype                 # MXU-input (compute) dtype
    f32 = jnp.float32

    x_all = x_ref[0]                                                  # (S, E)

    # ---- in_proj: full-sequence matmuls (good MXU row fill), f32 accumulation.
    # TODO(synk): torch.sqrt(int) bug in the original module; math.sqrt used here.
    scale = jnp.float32(1.0 / math.sqrt(dh))
    # Fold 1/sqrt(d_head) into q (O(S*E) multiplies instead of O(H*S^2)).
    q_full = ((jnp.dot(x_all, wq_ref[...], preferred_element_type=f32)
               + bq_ref[...]) * scale).astype(cd)                     # (S, E)
    k_full = (jnp.dot(x_all, wk_ref[...], preferred_element_type=f32)
              + bk_ref[...]).astype(cd)                               # (S, E)
    v_full = (jnp.dot(x_all, wv_ref[...], preferred_element_type=f32)
              + bv_ref[...]).astype(cd)                               # (S, E)

    # ---- one-time head-major relayout (H lane slices per tensor, outside hot loops).
    for h in range(H):
        sl = slice(h * dh, (h + 1) * dh)
        q_hm[h] = q_full[:, sl]
        k_hm[h] = k_full[:, sl]
        v_hm[h] = v_full[:, sl]

    if causal:
        # Hoisted out of the loops.  True sequence position of kernel key column c
        # (rows/keys were permuted by the wrapper): pos(c) = (c % G)*H + c // G.
        col_idx = lax.broadcasted_iota(jnp.int32, (1, G, S), 2)
        col_pos = (col_idx % G) * H + col_idx // G                    # (1, G, S)
        row_base = lax.broadcasted_iota(jnp.int32, (1, G, S), 1) * H  # a*H, (1, G, S)

    # ---- per q-group attention, KV-blocked (exact: softmax normalizes over heads,
    # so every key column is independent — no rescaling needed across blocks).
    for j in range(H):              # q-group j handles original rows {a*H + j}
        q_j = q_hm[:, j * G:(j + 1) * G, :]                           # (H, G, dh)
        acc = jnp.zeros((H, G, dh), f32)
        for kv in range(num_kv):    # TODO(synk): lax.fori_loop for very long S
            k0 = kv * kv_block
            k_blk = k_hm[:, k0:k0 + kv_block, :]                      # (H, Skv, dh)
            v_blk = v_hm[:, k0:k0 + kv_block, :]                      # (H, Skv, dh)

            s = jnp.einsum('hgd,hkd->hgk', q_j, k_blk,
                           preferred_element_type=f32)                # (H, G, Skv)
            if causal:
                # Module masks before scaling; masking with -inf after folding the
                # scale into q is equivalent.  (This path is numerically degenerate
                # for the module's head-axis softmax — all heads are -inf for k>q,
                # which matches the reference NaNs by design.)
                mask = (col_pos[:, :, k0:k0 + kv_block]
                        > row_base[:, :, k0:k0 + kv_block] + j)       # (1, G, Skv)
                s = jnp.where(mask, -jnp.inf, s)

            # Softmax over the HEAD axis (dim=1 of (B,H,S,S)), as the module does.
            m = jnp.max(s, axis=0, keepdims=True)                     # (1, G, Skv)
            e = jnp.exp(s - m)                                        # (H, G, Skv)
            denom = jnp.sum(e, axis=0, keepdims=True)                 # (1, G, Skv)
            inv = pl.reciprocal(denom, approx=approx_recip)           # EUP slot
            p = (e * inv).astype(cd)                                  # (H, G, Skv)

            acc = acc + jnp.einsum('hgk,hkd->hgd', p, v_blk,
                                   preferred_element_type=f32)        # (H, G, dh)

        # One coalesced column-stripe store per q-group (H total, not H^2).
        # ctx[h, a, j*dh:(j+1)*dh] is exactly where the module's row-major
        # (B,H,S,dh)->(B,S,E) reshape puts head h / output row h*G+a.
        ctx_ref[:, :, j * dh:(j + 1) * dh] = acc.astype(cd)

    # ---- fused out_proj on the ctx scratch; lane-dense (G, E) output stores.
    wo = wo_ref[...]
    bo = bo_ref[...]
    for h in range(H):
        o_ref[0, h] = (jnp.dot(ctx_ref[h], wo, preferred_element_type=f32)
                       + bo).astype(o_ref.dtype)


def _vmem_limit_bytes(S, E, H, G, dh, skv, cd_bytes, out_bytes):
    """Over-approximate the VMEM footprint ((8,128)-padded) and add headroom."""
    def padded(rows, cols, itemsize):
        return (-(-rows // 8) * 8) * (-(-cols // 128) * 128) * itemsize
    est = 0
    est += 2 * padded(S, E, cd_bytes)            # x block (double-buffered)
    est += 2 * H * padded(G, E, out_bytes)       # output block (double-buffered)
    est += 2 * 4 * padded(E, E, cd_bytes)        # resident weights (x2 safety)
    est += 2 * 4 * padded(1, E, 4)               # biases
    est += 3 * H * padded(S, dh, cd_bytes)       # q/k/v head-major scratch
    est += H * padded(G, E, cd_bytes)            # ctx scratch
    est += 3 * padded(S, E, 4)                   # in_proj f32 intermediates
    est += 4 * H * padded(G, skv, 4)             # score/exp/prob live set
    est += 2 * H * padded(G, dh, 4)              # PV accumulator
    return int(min(max(2 * est + (8 << 20), 32 << 20), 100 << 20))


def self_attention(x, w_in, b_in, w_out, b_out, n_heads, causal_mask=False, *,
                   compute_dtype=jnp.bfloat16, approx_reciprocal=True,
                   kv_block_size=None):
    """Pallas forward of the SelfAttention module.

    x     : (B, S, E)
    w_in  : (E, 3E)  (= torch in_proj.weight.T),  b_in  : (3E,)
    w_out : (E, E)   (= torch out_proj.weight.T), b_out : (E,)
    """
    B, S, E = x.shape
    assert E % n_heads == 0, "d_embed must be divisible by n_heads"
    d_head = E // n_heads
    assert S % n_heads == 0, (
        "this kernel requires seq_length % n_heads == 0 (needed to realize the "
        "module's row-major head reshape as static block stores)")
    # TODO(synk): support S % n_heads != 0 (fall back to an unfused out_proj).
    G = S // n_heads
    f32 = jnp.float32

    if kv_block_size is None:
        kv_block_size = min(S, 256)      # bounds the (H, G, Skv) f32 score tile
    if S % kv_block_size != 0:
        kv_block_size = S                # TODO(synk): ragged KV tail handling

    # Split in_proj into Q/K/V (same column order as torch's chunk(3, dim=-1));
    # weights go to the compute dtype (bf16 by default), biases stay f32.
    w_q = w_in[:, :E].astype(compute_dtype)
    w_k = w_in[:, E:2 * E].astype(compute_dtype)
    w_v = w_in[:, 2 * E:].astype(compute_dtype)
    b_q = b_in[:E].reshape(1, E).astype(f32)
    b_k = b_in[E:2 * E].reshape(1, E).astype(f32)
    b_v = b_in[2 * E:].reshape(1, E).astype(f32)
    w_o = w_out.astype(compute_dtype)
    b_o = b_out.reshape(1, E).astype(f32)

    # Regroup query rows so group j (original rows {a*n_heads + j}) is contiguous.
    # Pure wrapper-side layout plumbing; keeps every in-kernel slice/store static.
    x_perm = (x.reshape(B, G, n_heads, E)
               .transpose(0, 2, 1, 3)
               .reshape(B, S, E)
               .astype(compute_dtype))

    kernel = functools.partial(_fused_attention_kernel, n_heads=n_heads,
                               d_head=d_head, kv_block=kv_block_size,
                               causal=causal_mask, approx_recip=approx_reciprocal)

    cd_bytes = jnp.dtype(compute_dtype).itemsize
    out_bytes = jnp.dtype(x.dtype).itemsize
    vmem_limit = _vmem_limit_bytes(S, E, n_heads, G, d_head, kv_block_size,
                                   cd_bytes, out_bytes)

    out4 = pl.pallas_call(
        kernel,
        out_shape=jax.ShapeDtypeStruct((B, n_heads, G, E), x.dtype),
        grid=(B,),
        in_specs=[
            pl.BlockSpec((1, S, E), lambda b: (b, 0, 0)),   # x (q-group permuted)
            pl.BlockSpec((E, E), lambda b: (0, 0)),         # w_q   (resident)
            pl.BlockSpec((E, E), lambda b: (0, 0)),         # w_k
            pl.BlockSpec((E, E), lambda b: (0, 0)),         # w_v
            pl.BlockSpec((1, E), lambda b: (0, 0)),         # b_q
            pl.BlockSpec((1, E), lambda b: (0, 0)),         # b_k
            pl.BlockSpec((1, E), lambda b: (0, 0)),         # b_v
            pl.BlockSpec((E, E), lambda b: (0, 0)),         # w_out
            pl.BlockSpec((1, E), lambda b: (0, 0)),         # b_out
        ],
        out_specs=pl.BlockSpec((1, n_heads, G, E), lambda b: (b, 0, 0, 0)),
        scratch_shapes=[
            pltpu.VMEM((n_heads, S, d_head), compute_dtype),   # q head-major
            pltpu.VMEM((n_heads, S, d_head), compute_dtype),   # k head-major
            pltpu.VMEM((n_heads, S, d_head), compute_dtype),   # v head-major
            pltpu.VMEM((n_heads, G, E), compute_dtype),        # ctx (quirky reshape)
        ],
        compiler_params=pltpu.CompilerParams(
            dimension_semantics=("parallel",),
            vmem_limit_bytes=vmem_limit),
    )(x_perm, w_q, w_k, w_v, b_q, b_k, b_v, w_o, b_o)

    # Kernel row (h, a) is final output row h*G + a: a plain row-major merge.
    return out4.reshape(B, S, E)


def reference(x, w_in, b_in, w_out, b_out, n_heads, causal_mask=False):
    """Plain-JAX mirror of the PyTorch forward (for validation)."""
    B, S, E = x.shape
    d_head = E // n_heads
    qkv = x @ w_in + b_in
    q, k, v = jnp.split(qkv, 3, axis=-1)
    q = q.reshape(B, S, n_heads, d_head).transpose(0, 2, 1, 3)
    k = k.reshape(B, S, n_heads, d_head).transpose(0, 2, 1, 3)
    v = v.reshape(B, S, n_heads, d_head).transpose(0, 2, 1, 3)
    weight = jnp.einsum('bhqd,bhkd->bhqk', q, k)
    if causal_mask:
        mask = jnp.triu(jnp.ones((S, S), dtype=bool), 1)
        weight = jnp.where(mask, -jnp.inf, weight)
    weight = weight / math.sqrt(d_head)
    weight = jax.nn.softmax(weight, axis=1)   # dim=1 (heads), as written in the module
    out = jnp.einsum('bhqk,bhkd->bhqd', weight, v)
    out = out.reshape(B, S, E)                # no transpose back, as written
    return out @ w_out + b_out


if __name__ == "__main__":
    B, S, E, H = 2, 8, 32, 4   # batch, seq, d_embed, n_heads (d_head = 8)
    key = jax.random.PRNGKey(0)
    k0, k1, k2, k3, k4 = jax.random.split(key, 5)

    x = jax.random.normal(k0, (B, S, E), jnp.float32)
    w_in = jax.random.normal(k1, (E, 3 * E), jnp.float32) * 0.1
    b_in = jax.random.normal(k2, (3 * E,), jnp.float32) * 0.1
    w_out = jax.random.normal(k3, (E, E), jnp.float32) * 0.1
    b_out = jax.random.normal(k4, (E,), jnp.float32) * 0.1

    ref = reference(x, w_in, b_in, w_out, b_out, H, causal_mask=False)

    # 1) Exact-math path (f32 MXU inputs, exact reciprocal): tight check of the fused
    #    structure (q-group permutation, KV blocking, ctx relayout, out_proj fusion).
    out_f32 = self_attention(x, w_in, b_in, w_out, b_out, H, causal_mask=False,
                             compute_dtype=jnp.float32, approx_reciprocal=False)
    out_f32 = jax.block_until_ready(out_f32)
    assert out_f32.shape == (B, S, E)
    assert jnp.allclose(out_f32, ref, atol=1e-4, rtol=1e-4), "f32 path != reference"

    # 2) Production path (bf16 MXU inputs + approximate reciprocal): loose check.
    out_bf16 = self_attention(x, w_in, b_in, w_out, b_out, H, causal_mask=False)
    out_bf16 = jax.block_until_ready(out_bf16)
    assert out_bf16.shape == (B, S, E)
    assert jnp.allclose(out_bf16, ref, atol=5e-2, rtol=5e-2), "bf16 path != reference"

    print("KERNEL_OK")
</pallas_src>

<mosaic_0001>
module attributes {stable_mosaic.version = 11 : i64} {
  func.func @_fused_attention_kernel(%arg0: i32, %arg1: memref<1x8x32xf32, #tpu.memory_space<vmem>>, %arg2: memref<32x32xf32, #tpu.memory_space<vmem>>, %arg3: memref<32x32xf32, #tpu.memory_space<vmem>>, %arg4: memref<32x32xf32, #tpu.memory_space<vmem>>, %arg5: memref<1x32xf32, #tpu.memory_space<vmem>>, %arg6: memref<1x32xf32, #tpu.memory_space<vmem>>, %arg7: memref<1x32xf32, #tpu.memory_space<vmem>>, %arg8: memref<32x32xf32, #tpu.memory_space<vmem>>, %arg9: memref<1x32xf32, #tpu.memory_space<vmem>>, %arg10: memref<1x4x2x32xf32, #tpu.memory_space<vmem>>, %arg11: memref<4x8x8xf32, #tpu.memory_space<vmem>>, %arg12: memref<4x8x8xf32, #tpu.memory_space<vmem>>, %arg13: memref<4x8x8xf32, #tpu.memory_space<vmem>>, %arg14: memref<4x2x32xf32, #tpu.memory_space<vmem>>) attributes {dimension_semantics = [#tpu.dimension_semantics<parallel>], iteration_bounds = array<i64: 2>, scalar_prefetch = 0 : i64, scratch_operands = 4 : i64, tpu.core_type = #tpu.core_type<tc>, window_params = [{transform_indices = @transform_0, window_bounds = array<i64: 1, 8, 32>}, {pipeline_mode = #tpu.pipeline_mode<synchronous>, transform_indices = @transform_1, window_bounds = array<i64: 32, 32>}, {pipeline_mode = #tpu.pipeline_mode<synchronous>, transform_indices = @transform_2, window_bounds = array<i64: 32, 32>}, {pipeline_mode = #tpu.pipeline_mode<synchronous>, transform_indices = @transform_3, window_bounds = array<i64: 32, 32>}, {pipeline_mode = #tpu.pipeline_mode<synchronous>, transform_indices = @transform_4, window_bounds = array<i64: 1, 32>}, {pipeline_mode = #tpu.pipeline_mode<synchronous>, transform_indices = @transform_5, window_bounds = array<i64: 1, 32>}, {pipeline_mode = #tpu.pipeline_mode<synchronous>, transform_indices = @transform_6, window_bounds = array<i64: 1, 32>}, {pipeline_mode = #tpu.pipeline_mode<synchronous>, transform_indices = @transform_7, window_bounds = array<i64: 32, 32>}, {pipeline_mode = #tpu.pipeline_mode<synchronous>, transform_indices = @transform_8, window_bounds = array<i64: 1, 32>}, {transform_indices = @transform_9, window_bounds = array<i64: 1, 4, 2, 32>}]} {
    %c0 = arith.constant 0 : index
    %c0_0 = arith.constant 0 : index
    %c0_1 = arith.constant 0 : index
    %0 = vector.load %arg1[%c0, %c0_0, %c0_1] : memref<1x8x32xf32, #tpu.memory_space<vmem>>, vector<1x8x32xf32>
    %1 = vector.shape_cast %0 : vector<1x8x32xf32> to vector<8x32xf32>
    %c0_2 = arith.constant 0 : index
    %c0_3 = arith.constant 0 : index
    %2 = vector.load %arg2[%c0_2, %c0_3] : memref<32x32xf32, #tpu.memory_space<vmem>>, vector<32x32xf32>
    %cst = arith.constant dense<0.000000e+00> : vector<8x32xf32>
    %3 = tpu.matmul %1, %2, %cst {dimension_numbers = #tpu.dot_dimension_numbers<[1], [0], [0], [1], [0, 0, 1, 1], [], []>} : vector<8x32xf32>, vector<32x32xf32>, vector<8x32xf32> -> vector<8x32xf32>
    %c0_4 = arith.constant 0 : index
    %c0_5 = arith.constant 0 : index
    %4 = vector.load %arg5[%c0_4, %c0_5] : memref<1x32xf32, #tpu.memory_space<vmem>>, vector<1x32xf32>
    %5 = vector.broadcast %4 : vector<1x32xf32> to vector<8x32xf32>
    %6 = arith.addf %3, %5 : vector<8x32xf32>
    %cst_6 = arith.constant 0.353553385 : f32
    %7 = vector.broadcast %cst_6 : f32 to vector<8x32xf32>
    %8 = arith.mulf %6, %7 : vector<8x32xf32>
    %c0_7 = arith.constant 0 : index
    %c0_8 = arith.constant 0 : index
    %9 = vector.load %arg3[%c0_7, %c0_8] : memref<32x32xf32, #tpu.memory_space<vmem>>, vector<32x32xf32>
    %cst_9 = arith.constant dense<0.000000e+00> : vector<8x32xf32>
    %10 = tpu.matmul %1, %9, %cst_9 {dimension_numbers = #tpu.dot_dimension_numbers<[1], [0], [0], [1], [0, 0, 1, 1], [], []>} : vector<8x32xf32>, vector<32x32xf32>, vector<8x32xf32> -> vector<8x32xf32>
    %c0_10 = arith.constant 0 : index
    %c0_11 = arith.constant 0 : index
    %11 = vector.load %arg6[%c0_10, %c0_11] : memref<1x32xf32, #tpu.memory_space<vmem>>, vector<1x32xf32>
    %12 = vector.broadcast %11 : vector<1x32xf32> to vector<8x32xf32>
    %13 = arith.addf %10, %12 : vector<8x32xf32>
    %c0_12 = arith.constant 0 : index
    %c0_13 = arith.constant 0 : index
    %14 = vector.load %arg4[%c0_12, %c0_13] : memref<32x32xf32, #tpu.memory_space<vmem>>, vector<32x32xf32>
    %cst_14 = arith.constant dense<0.000000e+00> : vector<8x32xf32>
    %15 = tpu.matmul %1, %14, %cst_14 {dimension_numbers = #tpu.dot_dimension_numbers<[1], [0], [0], [1], [0, 0, 1, 1], [], []>} : vector<8x32xf32>, vector<32x32xf32>, vector<8x32xf32> -> vector<8x32xf32>
    %c0_15 = arith.constant 0 : index
    %c0_16 = arith.constant 0 : index
    %16 = vector.load %arg7[%c0_15, %c0_16] : memref<1x32xf32, #tpu.memory_space<vmem>>, vector<1x32xf32>
    %17 = vector.broadcast %16 : vector<1x32xf32> to vector<8x32xf32>
    %18 = arith.addf %15, %17 : vector<8x32xf32>
    %19 = vector.extract_strided_slice %8 {offsets = [0, 0], sizes = [8, 8], strides = [1, 1]} : vector<8x32xf32> to vector<8x8xf32>
    %c0_17 = arith.constant 0 : index
    %c0_18 = arith.constant 0 : index
    %c0_19 = arith.constant 0 : index
    %20 = vector.load %arg11[%c0_17, %c0_18, %c0_19] : memref<4x8x8xf32, #tpu.memory_space<vmem>>, vector<1x8x8xf32>
    %21 = vector.shape_cast %20 : vector<1x8x8xf32> to vector<8x8xf32>
    %22 = vector.shape_cast %19 : vector<8x8xf32> to vector<1x8x8xf32>
    tpu.vector_store %arg11[%c0_17, %c0_18, %c0_19], %22 {strides = array<i32>} : memref<4x8x8xf32, #tpu.memory_space<vmem>>, vector<1x8x8xf32>,
    %23 = vector.extract_strided_slice %13 {offsets = [0, 0], sizes = [8, 8], strides = [1, 1]} : vector<8x32xf32> to vector<8x8xf32>
    %c0_20 = arith.constant 0 : index
    %c0_21 = arith.constant 0 : index
    %c0_22 = arith.constant 0 : index
    %24 = vector.load %arg12[%c0_20, %c0_21, %c0_22] : memref<4x8x8xf32, #tpu.memory_space<vmem>>, vector<1x8x8xf32>
    %25 = vector.shape_cast %24 : vector<1x8x8xf32> to vector<8x8xf32>
    %26 = vector.shape_cast %23 : vector<8x8xf32> to vector<1x8x8xf32>
    tpu.vector_store %arg12[%c0_20, %c0_21, %c0_22], %26 {strides = array<i32>} : memref<4x8x8xf32, #tpu.memory_space<vmem>>, vector<1x8x8xf32>,
    %27 = vector.extract_strided_slice %18 {offsets = [0, 0], sizes = [8, 8], strides = [1, 1]} : vector<8x32xf32> to vector<8x8xf32>
    %c0_23 = arith.constant 0 : index
    %c0_24 = arith.constant 0 : index
    %c0_25 = arith.constant 0 : index
    %28 = vector.load %arg13[%c0_23, %c0_24, %c0_25] : memref<4x8x8xf32, #tpu.memory_space<vmem>>, vector<1x8x8xf32>
    %29 = vector.shape_cast %28 : vector<1x8x8xf32> to vector<8x8xf32>
    %30 = vector.shape_cast %27 : vector<8x8xf32> to vector<1x8x8xf32>
    tpu.vector_store %arg13[%c0_23, %c0_24, %c0_25], %30 {strides = array<i32>} : memref<4x8x8xf32, #tpu.memory_space<vmem>>, vector<1x8x8xf32>,
    %31 = vector.extract_strided_slice %8 {offsets = [0, 8], sizes = [8, 8], strides = [1, 1]} : vector<8x32xf32> to vector<8x8xf32>
    %c1 = arith.constant 1 : index
    %c0_26 = arith.constant 0 : index
    %c0_27 = arith.constant 0 : index
    %32 = vector.load %arg11[%c1, %c0_26, %c0_27] : memref<4x8x8xf32, #tpu.memory_space<vmem>>, vector<1x8x8xf32>
    %33 = vector.shape_cast %32 : vector<1x8x8xf32> to vector<8x8xf32>
    %34 = vector.shape_cast %31 : vector<8x8xf32> to vector<1x8x8xf32>
    tpu.vector_store %arg11[%c1, %c0_26, %c0_27], %34 {strides = array<i32>} : memref<4x8x8xf32, #tpu.memory_space<vmem>>, vector<1x8x8xf32>,
    %35 = vector.extract_strided_slice %13 {offsets = [0, 8], sizes = [8, 8], strides = [1, 1]} : vector<8x32xf32> to vector<8x8xf32>
    %c1_28 = arith.constant 1 : index
    %c0_29 = arith.constant 0 : index
    %c0_30 = arith.constant 0 : index
    %36 = vector.load %arg12[%c1_28, %c0_29, %c0_30] : memref<4x8x8xf32, #tpu.memory_space<vmem>>, vector<1x8x8xf32>
    %37 = vector.shape_cast %36 : vector<1x8x8xf32> to vector<8x8xf32>
    %38 = vector.shape_cast %35 : vector<8x8xf32> to vector<1x8x8xf32>
    tpu.vector_store %arg12[%c1_28, %c0_29, %c0_30], %38 {strides = array<i32>} : memref<4x8x8xf32, #tpu.memory_space<vmem>>, vector<1x8x8xf32>,
    %39 = vector.extract_strided_slice %18 {offsets = [0, 8], sizes = [8, 8], strides = [1, 1]} : vector<8x32xf32> to vector<8x8xf32>
    %c1_31 = arith.constant 1 : index
    %c0_32 = arith.constant 0 : index
    %c0_33 = arith.constant 0 : index
    %40 = vector.load %arg13[%c1_31, %c0_32, %c0_33] : memref<4x8x8xf32, #tpu.memory_space<vmem>>, vector<1x8x8xf32>
    %41 = vector.shape_cast %40 : vector<1x8x8xf32> to vector<8x8xf32>
    %42 = vector.shape_cast %39 : vector<8x8xf32> to vector<1x8x8xf32>
    tpu.vector_store %arg13[%c1_31, %c0_32, %c0_33], %42 {strides = array<i32>} : memref<4x8x8xf32, #tpu.memory_space<vmem>>, vector<1x8x8xf32>,
    %43 = vector.extract_strided_slice %8 {offsets = [0, 16], sizes = [8, 8], strides = [1, 1]} : vector<8x32xf32> to vector<8x8xf32>
    %c2 = arith.constant 2 : index
    %c0_34 = arith.constant 0 : index
    %c0_35 = arith.constant 0 : index
    %44 = vector.load %arg11[%c2, %c0_34, %c0_35] : memref<4x8x8xf32, #tpu.memory_space<vmem>>, vector<1x8x8xf32>
    %45 = vector.shape_cast %44 : vector<1x8x8xf32> to vector<8x8xf32>
    %46 = vector.shape_cast %43 : vector<8x8xf32> to vector<1x8x8xf32>
    tpu.vector_store %arg11[%c2, %c0_34, %c0_35], %46 {strides = array<i32>} : memref<4x8x8xf32, #tpu.memory_space<vmem>>, vector<1x8x8xf32>,
    %47 = vector.extract_strided_slice %13 {offsets = [0, 16], sizes = [8, 8], strides = [1, 1]} : vector<8x32xf32> to vector<8x8xf32>
    %c2_36 = arith.constant 2 : index
    %c0_37 = arith.constant 0 : index
    %c0_38 = arith.constant 0 : index
    %48 = vector.load %arg12[%c2_36, %c0_37, %c0_38] : memref<4x8x8xf32, #tpu.memory_space<vmem>>, vector<1x8x8xf32>
    %49 = vector.shape_cast %48 : vector<1x8x8xf32> to vector<8x8xf32>
    %50 = vector.shape_cast %47 : vector<8x8xf32> to vector<1x8x8xf32>
    tpu.vector_store %arg12[%c2_36, %c0_37, %c0_38], %50 {strides = array<i32>} : memref<4x8x8xf32, #tpu.memory_space<vmem>>, vector<1x8x8xf32>,
    %51 = vector.extract_strided_slice %18 {offsets = [0, 16], sizes = [8, 8], strides = [1, 1]} : vector<8x32xf32> to vector<8x8xf32>
    %c2_39 = arith.constant 2 : index
    %c0_40 = arith.constant 0 : index
    %c0_41 = arith.constant 0 : index
    %52 = vector.load %arg13[%c2_39, %c0_40, %c0_41] : memref<4x8x8xf32, #tpu.memory_space<vmem>>, vector<1x8x8xf32>
    %53 = vector.shape_cast %52 : vector<1x8x8xf32> to vector<8x8xf32>
    %54 = vector.shape_cast %51 : vector<8x8xf32> to vector<1x8x8xf32>
    tpu.vector_store %arg13[%c2_39, %c0_40, %c0_41], %54 {strides = array<i32>} : memref<4x8x8xf32, #tpu.memory_space<vmem>>, vector<1x8x8xf32>,
    %55 = vector.extract_strided_slice %8 {offsets = [0, 24], sizes = [8, 8], strides = [1, 1]} : vector<8x32xf32> to vector<8x8xf32>
    %c3 = arith.constant 3 : index
    %c0_42 = arith.constant 0 : index
    %c0_43 = arith.constant 0 : index
    %56 = vector.load %arg11[%c3, %c0_42, %c0_43] : memref<4x8x8xf32, #tpu.memory_space<vmem>>, vector<1x8x8xf32>
    %57 = vector.shape_cast %56 : vector<1x8x8xf32> to vector<8x8xf32>
    %58 = vector.shape_cast %55 : vector<8x8xf32> to vector<1x8x8xf32>
    tpu.vector_store %arg11[%c3, %c0_42, %c0_43], %58 {strides = array<i32>} : memref<4x8x8xf32, #tpu.memory_space<vmem>>, vector<1x8x8xf32>,
    %59 = vector.extract_strided_slice %13 {offsets = [0, 24], sizes = [8, 8], strides = [1, 1]} : vector<8x32xf32> to vector<8x8xf32>
    %c3_44 = arith.constant 3 : index
    %c0_45 = arith.constant 0 : index
    %c0_46 = arith.constant 0 : index
    %60 = vector.load %arg12[%c3_44, %c0_45, %c0_46] : memref<4x8x8xf32, #tpu.memory_space<vmem>>, vector<1x8x8xf32>
    %61 = vector.shape_cast %60 : vector<1x8x8xf32> to vector<8x8xf32>
    %62 = vector.shape_cast %59 : vector<8x8xf32> to vector<1x8x8xf32>
    tpu.vector_store %arg12[%c3_44, %c0_45, %c0_46], %62 {strides = array<i32>} : memref<4x8x8xf32, #tpu.memory_space<vmem>>, vector<1x8x8xf32>,
    %63 = vector.extract_strided_slice %18 {offsets = [0, 24], sizes = [8, 8], strides = [1, 1]} : vector<8x32xf32> to vector<8x8xf32>
    %c3_47 = arith.constant 3 : index
    %c0_48 = arith.constant 0 : index
    %c0_49 = arith.constant 0 : index
    %64 = vector.load %arg13[%c3_47, %c0_48, %c0_49] : memref<4x8x8xf32, #tpu.memory_space<vmem>>, vector<1x8x8xf32>
    %65 = vector.shape_cast %64 : vector<1x8x8xf32> to vector<8x8xf32>
    %66 = vector.shape_cast %63 : vector<8x8xf32> to vector<1x8x8xf32>
    tpu.vector_store %arg13[%c3_47, %c0_48, %c0_49], %66 {strides = array<i32>} : memref<4x8x8xf32, #tpu.memory_space<vmem>>, vector<1x8x8xf32>,
    %c0_50 = arith.constant 0 : index
    %c0_51 = arith.constant 0 : index
    %c0_52 = arith.constant 0 : index
    %67 = vector.load %arg11[%c0_50, %c0_51, %c0_52] : memref<4x8x8xf32, #tpu.memory_space<vmem>>, vector<4x2x8xf32>
    %cst_53 = arith.constant 0.000000e+00 : f32
    %68 = vector.broadcast %cst_53 : f32 to vector<4x2x8xf32>
    %c0_54 = arith.constant 0 : index
    %c0_55 = arith.constant 0 : index
    %c0_56 = arith.constant 0 : index
    %69 = vector.load %arg12[%c0_54, %c0_55, %c0_56] : memref<4x8x8xf32, #tpu.memory_space<vmem>>, vector<4x8x8xf32>
    %c0_57 = arith.constant 0 : index
    %c0_58 = arith.constant 0 : index
    %c0_59 = arith.constant 0 : index
    %70 = vector.load %arg13[%c0_57, %c0_58, %c0_59] : memref<4x8x8xf32, #tpu.memory_space<vmem>>, vector<4x8x8xf32>
    "tpu.trace_start"() <{level = 10 : i32, message = "hgd,hkd->hgk"}> : () -> ()
    %cst_60 = arith.constant dense<0.000000e+00> : vector<4x2x8xf32>
    %71 = tpu.matmul %67, %69, %cst_60 {dimension_numbers = #tpu.dot_dimension_numbers<[2], [2], [1], [1], [0, 0, 0, 1, 1, 1], [0], [0]>} : vector<4x2x8xf32>, vector<4x8x8xf32>, vector<4x2x8xf32> -> vector<4x2x8xf32>
    "tpu.trace_stop"() : () -> ()
    %cst_61 = arith.constant dense<0xFF800000> : vector<2x8xf32>
    %72 = vector.multi_reduction <maximumf>, %71, %cst_61 [0] : vector<4x2x8xf32> to vector<2x8xf32>
    %73 = vector.shape_cast %72 : vector<2x8xf32> to vector<1x2x8xf32>
    %74 = vector.broadcast %73 : vector<1x2x8xf32> to vector<4x2x8xf32>
    %75 = arith.subf %71, %74 : vector<4x2x8xf32>
    %76 = math.exp %75 : vector<4x2x8xf32>
    %cst_62 = arith.constant dense<0.000000e+00> : vector<2x8xf32>
    %77 = vector.multi_reduction <add>, %76, %cst_62 [0] : vector<4x2x8xf32> to vector<2x8xf32>
    %78 = vector.shape_cast %77 : vector<2x8xf32> to vector<1x2x8xf32>
    %79 = tpu.reciprocal %78 : vector<1x2x8xf32> -> vector<1x2x8xf32>
    %80 = vector.broadcast %79 : vector<1x2x8xf32> to vector<4x2x8xf32>
    %81 = arith.mulf %76, %80 : vector<4x2x8xf32>
    "tpu.trace_start"() <{level = 10 : i32, message = "hgk,hkd->hgd"}> : () -> ()
    %cst_63 = arith.constant dense<0.000000e+00> : vector<4x2x8xf32>
    %82 = tpu.matmul %81, %70, %cst_63 {dimension_numbers = #tpu.dot_dimension_numbers<[2], [1], [1], [2], [0, 0, 0, 1, 1, 2], [0], [0]>} : vector<4x2x8xf32>, vector<4x8x8xf32>, vector<4x2x8xf32> -> vector<4x2x8xf32>
    "tpu.trace_stop"() : () -> ()
    %83 = arith.addf %68, %82 : vector<4x2x8xf32>
    %c0_64 = arith.constant 0 : index
    %c0_65 = arith.constant 0 : index
    %c0_66 = arith.constant 0 : index
    %84 = vector.load %arg14[%c0_64, %c0_65, %c0_66] : memref<4x2x32xf32, #tpu.memory_space<vmem>>, vector<4x2x8xf32>
    tpu.vector_store %arg14[%c0_64, %c0_65, %c0_66], %83 {strides = array<i32>} : memref<4x2x32xf32, #tpu.memory_space<vmem>>, vector<4x2x8xf32>,
    %c0_67 = arith.constant 0 : index
    %c2_68 = arith.constant 2 : index
    %c0_69 = arith.constant 0 : index
    %85 = vector.load %arg11[%c0_67, %c2_68, %c0_69] : memref<4x8x8xf32, #tpu.memory_space<vmem>>, vector<4x2x8xf32>
    %cst_70 = arith.constant 0.000000e+00 : f32
    %86 = vector.broadcast %cst_70 : f32 to vector<4x2x8xf32>
    %c0_71 = arith.constant 0 : index
    %c0_72 = arith.constant 0 : index
    %c0_73 = arith.constant 0 : index
    %87 = vector.load %arg12[%c0_71, %c0_72, %c0_73] : memref<4x8x8xf32, #tpu.memory_space<vmem>>, vector<4x8x8xf32>
    %c0_74 = arith.constant 0 : index
    %c0_75 = arith.constant 0 : index
    %c0_76 = arith.constant 0 : index
    %88 = vector.load %arg13[%c0_74, %c0_75, %c0_76] : memref<4x8x8xf32, #tpu.memory_space<vmem>>, vector<4x8x8xf32>
    "tpu.trace_start"() <{level = 10 : i32, message = "hgd,hkd->hgk"}> : () -> ()
    %cst_77 = arith.constant dense<0.000000e+00> : vector<4x2x8xf32>
    %89 = tpu.matmul %85, %87, %cst_77 {dimension_numbers = #tpu.dot_dimension_numbers<[2], [2], [1], [1], [0, 0, 0, 1, 1, 1], [0], [0]>} : vector<4x2x8xf32>, vector<4x8x8xf32>, vector<4x2x8xf32> -> vector<4x2x8xf32>
    "tpu.trace_stop"() : () -> ()
    %cst_78 = arith.constant dense<0xFF800000> : vector<2x8xf32>
    %90 = vector.multi_reduction <maximumf>, %89, %cst_78 [0] : vector<4x2x8xf32> to vector<2x8xf32>
    %91 = vector.shape_cast %90 : vector<2x8xf32> to vector<1x2x8xf32>
    %92 = vector.broadcast %91 : vector<1x2x8xf32> to vector<4x2x8xf32>
    %93 = arith.subf %89, %92 : vector<4x2x8xf32>
    %94 = math.exp %93 : vector<4x2x8xf32>
    %cst_79 = arith.constant dense<0.000000e+00> : vector<2x8xf32>
    %95 = vector.multi_reduction <add>, %94, %cst_79 [0] : vector<4x2x8xf32> to vector<2x8xf32>
    %96 = vector.shape_cast %95 : vector<2x8xf32> to vector<1x2x8xf32>
    %97 = tpu.reciprocal %96 : vector<1x2x8xf32> -> vector<1x2x8xf32>
    %98 = vector.broadcast %97 : vector<1x2x8xf32> to vector<4x2x8xf32>
    %99 = arith.mulf %94, %98 : vector<4x2x8xf32>
    "tpu.trace_start"() <{level = 10 : i32, message = "hgk,hkd->hgd"}> : () -> ()
    %cst_80 = arith.constant dense<0.000000e+00> : vector<4x2x8xf32>
    %100 = tpu.matmul %99, %88, %cst_80 {dimension_numbers = #tpu.dot_dimension_numbers<[2], [1], [1], [2], [0, 0, 0, 1, 1, 2], [0], [0]>} : vector<4x2x8xf32>, vector<4x8x8xf32>, vector<4x2x8xf32> -> vector<4x2x8xf32>
    "tpu.trace_stop"() : () -> ()
    %101 = arith.addf %86, %100 : vector<4x2x8xf32>
    %c0_81 = arith.constant 0 : index
    %c0_82 = arith.constant 0 : index
    %c8 = arith.constant 8 : index
    %102 = vector.load %arg14[%c0_81, %c0_82, %c8] : memref<4x2x32xf32, #tpu.memory_space<vmem>>, vector<4x2x8xf32>
    tpu.vector_store %arg14[%c0_81, %c0_82, %c8], %101 {strides = array<i32>} : memref<4x2x32xf32, #tpu.memory_space<vmem>>, vector<4x2x8xf32>,
    %c0_83 = arith.constant 0 : index
    %c4 = arith.constant 4 : index
    %c0_84 = arith.constant 0 : index
    %103 = vector.load %arg11[%c0_83, %c4, %c0_84] : memref<4x8x8xf32, #tpu.memory_space<vmem>>, vector<4x2x8xf32>
    %cst_85 = arith.constant 0.000000e+00 : f32
    %104 = vector.broadcast %cst_85 : f32 to vector<4x2x8xf32>
    %c0_86 = arith.constant 0 : index
    %c0_87 = arith.constant 0 : index
    %c0_88 = arith.constant 0 : index
    %105 = vector.load %arg12[%c0_86, %c0_87, %c0_88] : memref<4x8x8xf32, #tpu.memory_space<vmem>>, vector<4x8x8xf32>
    %c0_89 = arith.constant 0 : index
    %c0_90 = arith.constant 0 : index
    %c0_91 = arith.constant 0 : index
    %106 = vector.load %arg13[%c0_89, %c0_90, %c0_91] : memref<4x8x8xf32, #tpu.memory_space<vmem>>, vector<4x8x8xf32>
    "tpu.trace_start"() <{level = 10 : i32, message = "hgd,hkd->hgk"}> : () -> ()
    %cst_92 = arith.constant dense<0.000000e+00> : vector<4x2x8xf32>
    %107 = tpu.matmul %103, %105, %cst_92 {dimension_numbers = #tpu.dot_dimension_numbers<[2], [2], [1], [1], [0, 0, 0, 1, 1, 1], [0], [0]>} : vector<4x2x8xf32>, vector<4x8x8xf32>, vector<4x2x8xf32> -> vector<4x2x8xf32>
    "tpu.trace_stop"() : () -> ()
    %cst_93 = arith.constant dense<0xFF800000> : vector<2x8xf32>
    %108 = vector.multi_reduction <maximumf>, %107, %cst_93 [0] : vector<4x2x8xf32> to vector<2x8xf32>
    %109 = vector.shape_cast %108 : vector<2x8xf32> to vector<1x2x8xf32>
    %110 = vector.broadcast %109 : vector<1x2x8xf32> to vector<4x2x8xf32>
    %111 = arith.subf %107, %110 : vector<4x2x8xf32>
    %112 = math.exp %111 : vector<4x2x8xf32>
    %cst_94 = arith.constant dense<0.000000e+00> : vector<2x8xf32>
    %113 = vector.multi_reduction <add>, %112, %cst_94 [0] : vector<4x2x8xf32> to vector<2x8xf32>
    %114 = vector.shape_cast %113 : vector<2x8xf32> to vector<1x2x8xf32>
    %115 = tpu.reciprocal %114 : vector<1x2x8xf32> -> vector<1x2x8xf32>
    %116 = vector.broadcast %115 : vector<1x2x8xf32> to vector<4x2x8xf32>
    %117 = arith.mulf %112, %116 : vector<4x2x8xf32>
    "tpu.trace_start"() <{level = 10 : i32, message = "hgk,hkd->hgd"}> : () -> ()
    %cst_95 = arith.constant dense<0.000000e+00> : vector<4x2x8xf32>
    %118 = tpu.matmul %117, %106, %cst_95 {dimension_numbers = #tpu.dot_dimension_numbers<[2], [1], [1], [2], [0, 0, 0, 1, 1, 2], [0], [0]>} : vector<4x2x8xf32>, vector<4x8x8xf32>, vector<4x2x8xf32> -> vector<4x2x8xf32>
    "tpu.trace_stop"() : () -> ()
    %119 = arith.addf %104, %118 : vector<4x2x8xf32>
    %c0_96 = arith.constant 0 : index
    %c0_97 = arith.constant 0 : index
    %c16 = arith.constant 16 : index
    %120 = vector.load %arg14[%c0_96, %c0_97, %c16] : memref<4x2x32xf32, #tpu.memory_space<vmem>>, vector<4x2x8xf32>
    tpu.vector_store %arg14[%c0_96, %c0_97, %c16], %119 {strides = array<i32>} : memref<4x2x32xf32, #tpu.memory_space<vmem>>, vector<4x2x8xf32>,
    %c0_98 = arith.constant 0 : index
    %c6 = arith.constant 6 : index
    %c0_99 = arith.constant 0 : index
    %121 = vector.load %arg11[%c0_98, %c6, %c0_99] : memref<4x8x8xf32, #tpu.memory_space<vmem>>, vector<4x2x8xf32>
    %cst_100 = arith.constant 0.000000e+00 : f32
    %122 = vector.broadcast %cst_100 : f32 to vector<4x2x8xf32>
    %c0_101 = arith.constant 0 : index
    %c0_102 = arith.constant 0 : index
    %c0_103 = arith.constant 0 : index
    %123 = vector.load %arg12[%c0_101, %c0_102, %c0_103] : memref<4x8x8xf32, #tpu.memory_space<vmem>>, vector<4x8x8xf32>
    %c0_104 = arith.constant 0 : index
    %c0_105 = arith.constant 0 : index
    %c0_106 = arith.constant 0 : index
    %124 = vector.load %arg13[%c0_104, %c0_105, %c0_106] : memref<4x8x8xf32, #tpu.memory_space<vmem>>, vector<4x8x8xf32>
    "tpu.trace_start"() <{level = 10 : i32, message = "hgd,hkd->hgk"}> : () -> ()
    %cst_107 = arith.constant dense<0.000000e+00> : vector<4x2x8xf32>
    %125 = tpu.matmul %121, %123, %cst_107 {dimension_numbers = #tpu.dot_dimension_numbers<[2], [2], [1], [1], [0, 0, 0, 1, 1, 1], [0], [0]>} : vector<4x2x8xf32>, vector<4x8x8xf32>, vector<4x2x8xf32> -> vector<4x2x8xf32>
    "tpu.trace_stop"() : () -> ()
    %cst_108 = arith.constant dense<0xFF800000> : vector<2x8xf32>
    %126 = vector.multi_reduction <maximumf>, %125, %cst_108 [0] : vector<4x2x8xf32> to vector<2x8xf32>
    %127 = vector.shape_cast %126 : vector<2x8xf32> to vector<1x2x8xf32>
    %128 = vector.broadcast %127 : vector<1x2x8xf32> to vector<4x2x8xf32>
    %129 = arith.subf %125, %128 : vector<4x2x8xf32>
    %130 = math.exp %129 : vector<4x2x8xf32>
    %cst_109 = arith.constant dense<0.000000e+00> : vector<2x8xf32>
    %131 = vector.multi_reduction <add>, %130, %cst_109 [0] : vector<4x2x8xf32> to vector<2x8xf32>
    %132 = vector.shape_cast %131 : vector<2x8xf32> to vector<1x2x8xf32>
    %133 = tpu.reciprocal %132 : vector<1x2x8xf32> -> vector<1x2x8xf32>
    %134 = vector.broadcast %133 : vector<1x2x8xf32> to vector<4x2x8xf32>
    %135 = arith.mulf %130, %134 : vector<4x2x8xf32>
    "tpu.trace_start"() <{level = 10 : i32, message = "hgk,hkd->hgd"}> : () -> ()
    %cst_110 = arith.constant dense<0.000000e+00> : vector<4x2x8xf32>
    %136 = tpu.matmul %135, %124, %cst_110 {dimension_numbers = #tpu.dot_dimension_numbers<[2], [1], [1], [2], [0, 0, 0, 1, 1, 2], [0], [0]>} : vector<4x2x8xf32>, vector<4x8x8xf32>, vector<4x2x8xf32> -> vector<4x2x8xf32>
    "tpu.trace_stop"() : () -> ()
    %137 = arith.addf %122, %136 : vector<4x2x8xf32>
    %c0_111 = arith.constant 0 : index
    %c0_112 = arith.constant 0 : index
    %c24 = arith.constant 24 : index
    %138 = vector.load %arg14[%c0_111, %c0_112, %c24] : memref<4x2x32xf32, #tpu.memory_space<vmem>>, vector<4x2x8xf32>
    tpu.vector_store %arg14[%c0_111, %c0_112, %c24], %137 {strides = array<i32>} : memref<4x2x32xf32, #tpu.memory_space<vmem>>, vector<4x2x8xf32>,
    %c0_113 = arith.constant 0 : index
    %c0_114 = arith.constant 0 : index
    %139 = vector.load %arg8[%c0_113, %c0_114] : memref<32x32xf32, #tpu.memory_space<vmem>>, vector<32x32xf32>
    %c0_115 = arith.constant 0 : index
    %c0_116 = arith.constant 0 : index
    %140 = vector.load %arg9[%c0_115, %c0_116] : memref<1x32xf32, #tpu.memory_space<vmem>>, vector<1x32xf32>
    %c0_117 = arith.constant 0 : index
    %c0_118 = arith.constant 0 : index
    %c0_119 = arith.constant 0 : index
    %141 = vector.load %arg14[%c0_117, %c0_118, %c0_119] : memref<4x2x32xf32, #tpu.memory_space<vmem>>, vector<1x2x32xf32>
    %142 = vector.shape_cast %141 : vector<1x2x32xf32> to vector<2x32xf32>
    %cst_120 = arith.constant dense<0.000000e+00> : vector<2x32xf32>
    %143 = tpu.matmul %142, %139, %cst_120 {dimension_numbers = #tpu.dot_dimension_numbers<[1], [0], [0], [1], [0, 0, 1, 1], [], []>} : vector<2x32xf32>, vector<32x32xf32>, vector<2x32xf32> -> vector<2x32xf32>
    %144 = vector.broadcast %140 : vector<1x32xf32> to vector<2x32xf32>
    %145 = arith.addf %143, %144 : vector<2x32xf32>
    %c0_121 = arith.constant 0 : index
    %c0_122 = arith.constant 0 : index
    %c0_123 = arith.constant 0 : index
    %c0_124 = arith.constant 0 : index
    %146 = vector.load %arg10[%c0_121, %c0_122, %c0_123, %c0_124] : memref<1x4x2x32xf32, #tpu.memory_space<vmem>>, vector<1x1x2x32xf32>
    %147 = vector.shape_cast %146 : vector<1x1x2x32xf32> to vector<2x32xf32>
    %148 = vector.shape_cast %145 : vector<2x32xf32> to vector<1x1x2x32xf32>
    tpu.vector_store %arg10[%c0_121, %c0_122, %c0_123, %c0_124], %148 {strides = array<i32>} : memref<1x4x2x32xf32, #tpu.memory_space<vmem>>, vector<1x1x2x32xf32>,
    %c1_125 = arith.constant 1 : index
    %c0_126 = arith.constant 0 : index
    %c0_127 = arith.constant 0 : index
    %149 = vector.load %arg14[%c1_125, %c0_126, %c0_127] : memref<4x2x32xf32, #tpu.memory_space<vmem>>, vector<1x2x32xf32>
    %150 = vector.shape_cast %149 : vector<1x2x32xf32> to vector<2x32xf32>
    %cst_128 = arith.constant dense<0.000000e+00> : vector<2x32xf32>
    %151 = tpu.matmul %150, %139, %cst_128 {dimension_numbers = #tpu.dot_dimension_numbers<[1], [0], [0], [1], [0, 0, 1, 1], [], []>} : vector<2x32xf32>, vector<32x32xf32>, vector<2x32xf32> -> vector<2x32xf32>
    %152 = vector.broadcast %140 : vector<1x32xf32> to vector<2x32xf32>
    %153 = arith.addf %151, %152 : vector<2x32xf32>
    %c0_129 = arith.constant 0 : index
    %c1_130 = arith.constant 1 : index
    %c0_131 = arith.constant 0 : index
    %c0_132 = arith.constant 0 : index
    %154 = vector.load %arg10[%c0_129, %c1_130, %c0_131, %c0_132] : memref<1x4x2x32xf32, #tpu.memory_space<vmem>>, vector<1x1x2x32xf32>
    %155 = vector.shape_cast %154 : vector<1x1x2x32xf32> to vector<2x32xf32>
    %156 = vector.shape_cast %153 : vector<2x32xf32> to vector<1x1x2x32xf32>
    tpu.vector_store %arg10[%c0_129, %c1_130, %c0_131, %c0_132], %156 {strides = array<i32>} : memref<1x4x2x32xf32, #tpu.memory_space<vmem>>, vector<1x1x2x32xf32>,
    %c2_133 = arith.constant 2 : index
    %c0_134 = arith.constant 0 : index
    %c0_135 = arith.constant 0 : index
    %157 = vector.load %arg14[%c2_133, %c0_134, %c0_135] : memref<4x2x32xf32, #tpu.memory_space<vmem>>, vector<1x2x32xf32>
    %158 = vector.shape_cast %157 : vector<1x2x32xf32> to vector<2x32xf32>
    %cst_136 = arith.constant dense<0.000000e+00> : vector<2x32xf32>
    %159 = tpu.matmul %158, %139, %cst_136 {dimension_numbers = #tpu.dot_dimension_numbers<[1], [0], [0], [1], [0, 0, 1, 1], [], []>} : vector<2x32xf32>, vector<32x32xf32>, vector<2x32xf32> -> vector<2x32xf32>
    %160 = vector.broadcast %140 : vector<1x32xf32> to vector<2x32xf32>
    %161 = arith.addf %159, %160 : vector<2x32xf32>
    %c0_137 = arith.constant 0 : index
    %c2_138 = arith.constant 2 : index
    %c0_139 = arith.constant 0 : index
    %c0_140 = arith.constant 0 : index
    %162 = vector.load %arg10[%c0_137, %c2_138, %c0_139, %c0_140] : memref<1x4x2x32xf32, #tpu.memory_space<vmem>>, vector<1x1x2x32xf32>
    %163 = vector.shape_cast %162 : vector<1x1x2x32xf32> to vector<2x32xf32>
    %164 = vector.shape_cast %161 : vector<2x32xf32> to vector<1x1x2x32xf32>
    tpu.vector_store %arg10[%c0_137, %c2_138, %c0_139, %c0_140], %164 {strides = array<i32>} : memref<1x4x2x32xf32, #tpu.memory_space<vmem>>, vector<1x1x2x32xf32>,
    %c3_141 = arith.constant 3 : index
    %c0_142 = arith.constant 0 : index
    %c0_143 = arith.constant 0 : index
    %165 = vector.load %arg14[%c3_141, %c0_142, %c0_143] : memref<4x2x32xf32, #tpu.memory_space<vmem>>, vector<1x2x32xf32>
    %166 = vector.shape_cast %165 : vector<1x2x32xf32> to vector<2x32xf32>
    %cst_144 = arith.constant dense<0.000000e+00> : vector<2x32xf32>
    %167 = tpu.matmul %166, %139, %cst_144 {dimension_numbers = #tpu.dot_dimension_numbers<[1], [0], [0], [1], [0, 0, 1, 1], [], []>} : vector<2x32xf32>, vector<32x32xf32>, vector<2x32xf32> -> vector<2x32xf32>
    %168 = vector.broadcast %140 : vector<1x32xf32> to vector<2x32xf32>
    %169 = arith.addf %167, %168 : vector<2x32xf32>
    %c0_145 = arith.constant 0 : index
    %c3_146 = arith.constant 3 : index
    %c0_147 = arith.constant 0 : index
    %c0_148 = arith.constant 0 : index
    %170 = vector.load %arg10[%c0_145, %c3_146, %c0_147, %c0_148] : memref<1x4x2x32xf32, #tpu.memory_space<vmem>>, vector<1x1x2x32xf32>
    %171 = vector.shape_cast %170 : vector<1x1x2x32xf32> to vector<2x32xf32>
    %172 = vector.shape_cast %169 : vector<2x32xf32> to vector<1x1x2x32xf32>
    tpu.vector_store %arg10[%c0_145, %c3_146, %c0_147, %c0_148], %172 {strides = array<i32>} : memref<1x4x2x32xf32, #tpu.memory_space<vmem>>, vector<1x1x2x32xf32>,
    return
  }
  func.func @transform_0(%arg0: i32) -> (i32, i32, i32) {
    %c0_i32 = arith.constant 0 : i32
    %c0_i32_0 = arith.constant 0 : i32
    %c0_i32_1 = arith.constant 0 : i32
    return %arg0, %c0_i32, %c0_i32_0 : i32, i32, i32
  }
  func.func @transform_1(%arg0: i32) -> (i32, i32) {
    %c0_i32 = arith.constant 0 : i32
    %c0_i32_0 = arith.constant 0 : i32
    %c0_i32_1 = arith.constant 0 : i32
    return %c0_i32, %c0_i32_0 : i32, i32
  }
  func.func @transform_2(%arg0: i32) -> (i32, i32) {
    %c0_i32 = arith.constant 0 : i32
    %c0_i32_0 = arith.constant 0 : i32
    %c0_i32_1 = arith.constant 0 : i32
    return %c0_i32, %c0_i32_0 : i32, i32
  }
  func.func @transform_3(%arg0: i32) -> (i32, i32) {
    %c0_i32 = arith.constant 0 : i32
    %c0_i32_0 = arith.constant 0 : i32
    %c0_i32_1 = arith.constant 0 : i32
    return %c0_i32, %c0_i32_0 : i32, i32
  }
  func.func @transform_4(%arg0: i32) -> (i32, i32) {
    %c0_i32 = arith.constant 0 : i32
    %c0_i32_0 = arith.constant 0 : i32
    %c0_i32_1 = arith.constant 0 : i32
    return %c0_i32, %c0_i32_0 : i32, i32
  }
  func.func @transform_5(%arg0: i32) -> (i32, i32) {
    %c0_i32 = arith.constant 0 : i32
    %c0_i32_0 = arith.constant 0 : i32
    %c0_i32_1 = arith.constant 0 : i32
    return %c0_i32, %c0_i32_0 : i32, i32
  }
  func.func @transform_6(%arg0: i32) -> (i32, i32) {
    %c0_i32 = arith.constant 0 : i32
    %c0_i32_0 = arith.constant 0 : i32
    %c0_i32_1 = arith.constant 0 : i32
    return %c0_i32, %c0_i32_0 : i32, i32
  }
  func.func @transform_7(%arg0: i32) -> (i32, i32) {
    %c0_i32 = arith.constant 0 : i32
    %c0_i32_0 = arith.constant 0 : i32
    %c0_i32_1 = arith.constant 0 : i32
    return %c0_i32, %c0_i32_0 : i32, i32
  }
  func.func @transform_8(%arg0: i32) -> (i32, i32) {
    %c0_i32 = arith.constant 0 : i32
    %c0_i32_0 = arith.constant 0 : i32
    %c0_i32_1 = arith.constant 0 : i32
    return %c0_i32, %c0_i32_0 : i32, i32
  }
  func.func @transform_9(%arg0: i32) -> (i32, i32, i32, i32) {
    %c0_i32 = arith.constant 0 : i32
    %c0_i32_0 = arith.constant 0 : i32
    %c0_i32_1 = arith.constant 0 : i32
    %c0_i32_2 = arith.constant 0 : i32
    return %arg0, %c0_i32, %c0_i32_0, %c0_i32_1 : i32, i32, i32, i32
  }
}

</mosaic_0001>

<llo_original>
// kernel: tpu_custom_call.1
$region0: #{tpu_custom_call.1}
  #allocation0 [shape = 'u32[]', space=smem, size = 0x4, offset = 0x4, fixed_abs, tag = 'smem constant byte address 0x4 - core index']
  #allocation1 [shape = 'u32[144,128]{1,0:T(1,128)}', space=vmem, size = 0x12000, scoped, tag = 'internal scratch']
  #allocation2 [shape = 'f32[4,8,8]{2,1,0:T(8,128)}', space=vmem, size = 0x4000, scoped, tag = 'scratch operand']
  #allocation3 [shape = 'f32[4,8,8]{2,1,0:T(8,128)}', space=vmem, size = 0x4000, scoped, tag = 'scratch operand']
  #allocation4 [shape = 'f32[4,8,8]{2,1,0:T(8,128)}', space=vmem, size = 0x4000, scoped, tag = 'scratch operand']
  #allocation5 [shape = 'f32[4,2,32]{2,1,0:T(2,128)}', space=vmem, size = 0x1000, scoped, tag = 'scratch operand']
  %s0 = inlined_call_operand.hbm [shape: f32[2,8,32], index: 0, kind: input, shape index: {}]
  %s1 = inlined_call_operand.hbm [shape: f32[32,32], index: 1, kind: input, shape index: {}]
  %s2 = inlined_call_operand.hbm [shape: f32[32,32], index: 2, kind: input, shape index: {}]
  %s3 = inlined_call_operand.hbm [shape: f32[32,32], index: 3, kind: input, shape index: {}]
  %s4 = inlined_call_operand.vmem [shape: f32[1,32], index: 4, kind: input, shape index: {}]
  %s5 = inlined_call_operand.vmem [shape: f32[1,32], index: 5, kind: input, shape index: {}]
  %s6 = inlined_call_operand.vmem [shape: f32[1,32], index: 6, kind: input, shape index: {}]
  %s7 = inlined_call_operand.hbm [shape: f32[32,32], index: 7, kind: input, shape index: {}]
  %s8 = inlined_call_operand.vmem [shape: f32[1,32], index: 8, kind: input, shape index: {}]
  %s9 = inlined_call_operand.hbm [shape: f32[2,4,2,32], index: 9, kind: output, shape index: {}]
  %s10 = sld [smem:[#allocation0]]
  $region89: #{tpu_custom_call.1} parent=0
    _
  %s12 = ssub.s32 1, %s10
  %s13 = scalar_select 0, %s12, %s10
  $region1: #{tpu_custom_call.1} parent=0
    #allocation6 [shape = 'u8[8192]{0}', space=vmem, size = 0x2000, scoped, tag = 'input window, operand 0']
    #allocation7 [shape = 's32[2]{0}', space=sflag, size = 0x8, scoped, tag = 'scoped memory for tpu_custom_call.1']
    #allocation8 [shape = 's32[2]{0}', space=sflag, size = 0x8, scoped, tag = 'scoped memory for tpu_custom_call.1']
    #allocation9 [shape = 'u8[16384]{0}', space=vmem, size = 0x4000, scoped, tag = 'input window, operand 1, single buffered']
    #allocation10 [shape = 's32[1]{0}', space=sflag, size = 0x4, scoped, tag = 'scoped memory for tpu_custom_call.1']
    #allocation11 [shape = 'u8[16384]{0}', space=vmem, size = 0x4000, scoped, tag = 'input window, operand 2, single buffered']
    #allocation12 [shape = 'u8[16384]{0}', space=vmem, size = 0x4000, scoped, tag = 'input window, operand 3, single buffered']
    #allocation13 [shape = 's32[1]{0}', space=sflag, size = 0x4, scoped, tag = 'scoped memory for tpu_custom_call.1']
    #allocation14 [shape = 'u8[16384]{0}', space=vmem, size = 0x4000, scoped, tag = 'input window, operand 7, single buffered']
    #allocation15 [shape = 'u8[8192]{0}', space=vmem, size = 0x2000, scoped, tag = 'output window, operand 0']
    %14 = vsyncpa [#allocation7], 0
    %s15 = scalar_lea.sflag [#allocation7], 1
    %16 = vsyncpa %s15, 0
    %17 = vsyncpa [#allocation10], 0
    %18 = vsyncpa [#allocation13], 0
    %19 = vsyncpa [#allocation8], 0
    %s20 = scalar_lea.sflag [#allocation8], 1
    %21 = vsyncpa %s20, 0
    loop: start=0, step=1, limit=4
    $region2: #{tpu_custom_call.1} parent=1 // loop_pre_header
      _
    $region3: #{tpu_custom_call.1} parent=1 // loop_header
      %s23 = sphi 0, %s27
      %p24 = scmp.ge.s32.totalorder %s23, 4
      %s33 = sphi 0, %s35
      %s36 = sphi 0, %s33
      %s37 = sphi 0, %s36
      %s53 = sphi 0, %s37
      %s57 = sphi 0, %s57
      %s59 = sphi 0, %s57
      %s60 = sphi 0, %s59
      %s74 = sphi 0, %s60
      %s78 = sphi 0, %s78
      %s80 = sphi 0, %s78
      %s81 = sphi 0, %s80
      %s95 = sphi 0, %s81
      %s99 = sphi 0, %s99
      %s101 = sphi 0, %s99
      %s102 = sphi 0, %s101
      %s116 = sphi 0, %s102
      %s120 = sphi 0, %s120
      %s122 = sphi 0, %s120
      %s123 = sphi 0, %s122
      %s137 = sphi 0, %s123
      %s141 = sphi 0, %s141
      %s143 = sphi 0, %s141
      %s144 = sphi 0, %s143
      %s158 = sphi 0, %s144
      %s162 = sphi 0, %s162
      %s164 = sphi 0, %s162
      %s165 = sphi 0, %s164
      %s179 = sphi 0, %s165
      %s183 = sphi 0, %s183
      %s185 = sphi 0, %s183
      %s186 = sphi 0, %s185
      %s200 = sphi 0, %s186
      %s204 = sphi 0, %s204
      %s206 = sphi 0, %s204
      %s207 = sphi 0, %s206
      %s221 = sphi 0, %s207
      %s227 = sphi 0, %s229
      %s230 = sphi 0, %s227
      %s231 = sphi 0, %s230
      %s247 = sphi 0, %s231
    $region4: #{tpu_custom_call.1} parent=1 // loop_header_branch
      %26 = sbr.rel (%p24) target = $region8
    $region5: #{tpu_custom_call.1} parent=1 // loop_body
      %s28 = ssub.s32 %s23, 1
      %s29 = ssub.s32 %s23, 2
      %s30 = sadd.s32 %s23, 1
      %s31 = ssub.s32 %s23, %s30
      %p32 = scmp.eq.s32.totalorder %s31, 0
      %s34 = sadd.s32 %s33, 1
      %s35 = scalar_select %p32, %s33, %s34
      %p38 = pneg %p32
      %p39 = scmp.eq.s32.totalorder %s23, 1
      %p40 = por %p38, %p39
      %p41 = scmp.ne.s32.totalorder %s33, %s36
      %p42 = scmp.eq.s32.totalorder %s23, 0
      %p43 = por %p41, %p42
      %p44 = scmp.ne.s32.totalorder %s33, %s36
      %p45 = scmp.eq.s32.totalorder %s28, 1
      %p46 = por %p44, %p45
      %p47 = scmp.ne.s32.totalorder %s36, %s37
      %p48 = scmp.eq.s32.totalorder %s28, 0
      %p49 = por %p47, %p48
      %p50 = scmp.ne.s32.totalorder %s36, %s37
      %p51 = scmp.eq.s32.totalorder %s29, 1
      %p52 = por %p50, %p51
      %p54 = scmp.ne.s32.totalorder %s37, %s53
      %p55 = scmp.eq.s32.totalorder %s29, 0
      %p56 = por %p54, %p55
      %s58 = sadd.s32 %s57, 1
      %p61 = scmp.eq.s32.totalorder %s23, 1
      %p62 = scmp.ne.s32.totalorder %s57, %s59
      %p63 = scmp.eq.s32.totalorder %s23, 0
      %p64 = por %p62, %p63
      %p65 = scmp.ne.s32.totalorder %s57, %s59
      %p66 = scmp.eq.s32.totalorder %s28, 1
      %p67 = por %p65, %p66
      %p68 = scmp.ne.s32.totalorder %s59, %s60
      %p69 = scmp.eq.s32.totalorder %s28, 0
      %p70 = por %p68, %p69
      %p71 = scmp.ne.s32.totalorder %s59, %s60
      %p72 = scmp.eq.s32.totalorder %s29, 1
      %p73 = por %p71, %p72
      %p75 = scmp.ne.s32.totalorder %s60, %s74
      %p76 = scmp.eq.s32.totalorder %s29, 0
      %p77 = por %p75, %p76
      %s79 = sadd.s32 %s78, 1
      %p82 = scmp.eq.s32.totalorder %s23, 1
      %p83 = scmp.ne.s32.totalorder %s78, %s80
      %p84 = scmp.eq.s32.totalorder %s23, 0
      %p85 = por %p83, %p84
      %p86 = scmp.ne.s32.totalorder %s78, %s80
      %p87 = scmp.eq.s32.totalorder %s28, 1
      %p88 = por %p86, %p87
      %p89 = scmp.ne.s32.totalorder %s80, %s81
      %p90 = scmp.eq.s32.totalorder %s28, 0
      %p91 = por %p89, %p90
      %p92 = scmp.ne.s32.totalorder %s80, %s81
      %p93 = scmp.eq.s32.totalorder %s29, 1
      %p94 = por %p92, %p93
      %p96 = scmp.ne.s32.totalorder %s81, %s95
      %p97 = scmp.eq.s32.totalorder %s29, 0
      %p98 = por %p96, %p97
      %s100 = sadd.s32 %s99, 1
      %p103 = scmp.eq.s32.totalorder %s23, 1
      %p104 = scmp.ne.s32.totalorder %s99, %s101
      %p105 = scmp.eq.s32.totalorder %s23, 0
      %p106 = por %p104, %p105
      %p107 = scmp.ne.s32.totalorder %s99, %s101
      %p108 = scmp.eq.s32.totalorder %s28, 1
      %p109 = por %p107, %p108
      %p110 = scmp.ne.s32.totalorder %s101, %s102
      %p111 = scmp.eq.s32.totalorder %s28, 0
      %p112 = por %p110, %p111
      %p113 = scmp.ne.s32.totalorder %s101, %s102
      %p114 = scmp.eq.s32.totalorder %s29, 1
      %p115 = por %p113, %p114
      %p117 = scmp.ne.s32.totalorder %s102, %s116
      %p118 = scmp.eq.s32.totalorder %s29, 0
      %p119 = por %p117, %p118
      %s121 = sadd.s32 %s120, 1
      %p124 = scmp.eq.s32.totalorder %s23, 1
      %p125 = scmp.ne.s32.totalorder %s120, %s122
      %p126 = scmp.eq.s32.totalorder %s23, 0
      %p127 = por %p125, %p126
      %p128 = scmp.ne.s32.totalorder %s120, %s122
      %p129 = scmp.eq.s32.totalorder %s28, 1
      %p130 = por %p128, %p129
      %p131 = scmp.ne.s32.totalorder %s122, %s123
      %p132 = scmp.eq.s32.totalorder %s28, 0
      %p133 = por %p131, %p132
      %p134 = scmp.ne.s32.totalorder %s122, %s123
      %p135 = scmp.eq.s32.totalorder %s29, 1
      %p136 = por %p134, %p135
      %p138 = scmp.ne.s32.totalorder %s123, %s137
      %p139 = scmp.eq.s32.totalorder %s29, 0
      %p140 = por %p138, %p139
      %s142 = sadd.s32 %s141, 1
      %p145 = scmp.eq.s32.totalorder %s23, 1
      %p146 = scmp.ne.s32.totalorder %s141, %s143
      %p147 = scmp.eq.s32.totalorder %s23, 0
      %p148 = por %p146, %p147
      %p149 = scmp.ne.s32.totalorder %s141, %s143
      %p150 = scmp.eq.s32.totalorder %s28, 1
      %p151 = por %p149, %p150
      %p152 = scmp.ne.s32.totalorder %s143, %s144
      %p153 = scmp.eq.s32.totalorder %s28, 0
      %p154 = por %p152, %p153
      %p155 = scmp.ne.s32.totalorder %s143, %s144
      %p156 = scmp.eq.s32.totalorder %s29, 1
      %p157 = por %p155, %p156
      %p159 = scmp.ne.s32.totalorder %s144, %s158
      %p160 = scmp.eq.s32.totalorder %s29, 0
      %p161 = por %p159, %p160
      %s163 = sadd.s32 %s162, 1
      %p166 = scmp.eq.s32.totalorder %s23, 1
      %p167 = scmp.ne.s32.totalorder %s162, %s164
      %p168 = scmp.eq.s32.totalorder %s23, 0
      %p169 = por %p167, %p168
      %p170 = scmp.ne.s32.totalorder %s162, %s164
      %p171 = scmp.eq.s32.totalorder %s28, 1
      %p172 = por %p170, %p171
      %p173 = scmp.ne.s32.totalorder %s164, %s165
      %p174 = scmp.eq.s32.totalorder %s28, 0
      %p175 = por %p173, %p174
      %p176 = scmp.ne.s32.totalorder %s164, %s165
      %p177 = scmp.eq.s32.totalorder %s29, 1
      %p178 = por %p176, %p177
      %p180 = scmp.ne.s32.totalorder %s165, %s179
      %p181 = scmp.eq.s32.totalorder %s29, 0
      %p182 = por %p180, %p181
      %s184 = sadd.s32 %s183, 1
      %p187 = scmp.eq.s32.totalorder %s23, 1
      %p188 = scmp.ne.s32.totalorder %s183, %s185
      %p189 = scmp.eq.s32.totalorder %s23, 0
      %p190 = por %p188, %p189
      %p191 = scmp.ne.s32.totalorder %s183, %s185
      %p192 = scmp.eq.s32.totalorder %s28, 1
      %p193 = por %p191, %p192
      %p194 = scmp.ne.s32.totalorder %s185, %s186
      %p195 = scmp.eq.s32.totalorder %s28, 0
      %p196 = por %p194, %p195
      %p197 = scmp.ne.s32.totalorder %s185, %s186
      %p198 = scmp.eq.s32.totalorder %s29, 1
      %p199 = por %p197, %p198
      %p201 = scmp.ne.s32.totalorder %s186, %s200
      %p202 = scmp.eq.s32.totalorder %s29, 0
      %p203 = por %p201, %p202
      %s205 = sadd.s32 %s204, 1
      %p208 = scmp.eq.s32.totalorder %s23, 1
      %p209 = scmp.ne.s32.totalorder %s204, %s206
      %p210 = scmp.eq.s32.totalorder %s23, 0
      %p211 = por %p209, %p210
      %p212 = scmp.ne.s32.totalorder %s204, %s206
      %p213 = scmp.eq.s32.totalorder %s28, 1
      %p214 = por %p212, %p213
      %p215 = scmp.ne.s32.totalorder %s206, %s207
      %p216 = scmp.eq.s32.totalorder %s28, 0
      %p217 = por %p215, %p216
      %p218 = scmp.ne.s32.totalorder %s206, %s207
      %p219 = scmp.eq.s32.totalorder %s29, 1
      %p220 = por %p218, %p219
      %p222 = scmp.ne.s32.totalorder %s207, %s221
      %p223 = scmp.eq.s32.totalorder %s29, 0
      %p224 = por %p222, %p223
      %s225 = ssub.s32 %s23, %s30
      %p226 = scmp.eq.s32.totalorder %s225, 0
      %s228 = sadd.s32 %s227, 1
      %s229 = scalar_select %p226, %s227, %s228
      %p232 = pneg %p226
      %p233 = scmp.eq.s32.totalorder %s23, 1
      %p234 = por %p232, %p233
      %p235 = scmp.ne.s32.totalorder %s227, %s230
      %p236 = scmp.eq.s32.totalorder %s23, 0
      %p237 = por %p235, %p236
      %p238 = scmp.ne.s32.totalorder %s227, %s230
      %p239 = scmp.eq.s32.totalorder %s28, 1
      %p240 = por %p238, %p239
      %p241 = scmp.ne.s32.totalorder %s230, %s231
      %p242 = scmp.eq.s32.totalorder %s28, 0
      %p243 = por %p241, %p242
      %p244 = scmp.ne.s32.totalorder %s230, %s231
      %p245 = scmp.eq.s32.totalorder %s29, 1
      %p246 = por %p244, %p245
      %p248 = scmp.ne.s32.totalorder %s231, %s247
      %p249 = scmp.eq.s32.totalorder %s29, 0
      %p250 = por %p248, %p249
      %p251 = scmp.le.s32.totalorder 1, %s23
      %p252 = scmp.lt.s32.totalorder %s23, 3
      %p253 = pnand %p251, %p252
      %p254 = pneg %p253
      // Predicated region
      $region9: #{tpu_custom_call.1} parent=5 // pred_check
        _
      $region10: #{tpu_custom_call.1} parent=5 // pred_check_branch
        %256 = sbr.rel (%p253) target = $region12
      $region11: #{tpu_custom_call.1} parent=5 // pred_region
        %s257 = ssub.s32 %s23, 1
        // Predicated region
        $region13: #{tpu_custom_call.1} parent=11 // pred_check
          %p258 = pneg %p70
        $region14: #{tpu_custom_call.1} parent=11 // pred_check_branch
          %260 = sbr.rel (%p258) target = $region16
        $region15: #{tpu_custom_call.1} parent=11 // pred_region
          %s262 = ssub.s32 512, 512
          %263 = vsyncadd [#allocation10], %s262
          %s264 = sshll.u32 [#allocation9], 4
          %s265 = int_to_ptr.vmem [resolvable:$true] %s264
          %270 = dma.hbm_to_vmem [thread:$0]  %s1, 512, %s265, [#allocation10], 128, 128, 8
        $region16: #{tpu_custom_call.1} parent=11 // pred_fallthru
          _
        // Predicated region
        $region17: #{tpu_custom_call.1} parent=11 // pred_check
          %p271 = pneg %p91
        $region18: #{tpu_custom_call.1} parent=11 // pred_check_branch
          %273 = sbr.rel (%p271) target = $region20
        $region19: #{tpu_custom_call.1} parent=11 // pred_region
          %s275 = ssub.s32 512, 512
          %276 = vsyncadd [#allocation10], %s275
          %s277 = sshll.u32 [#allocation11], 4
          %s278 = int_to_ptr.vmem [resolvable:$true] %s277
          %283 = dma.hbm_to_vmem [thread:$0]  %s2, 512, %s278, [#allocation10], 128, 128, 8
        $region20: #{tpu_custom_call.1} parent=11 // pred_fallthru
          _
        // Predicated region
        $region21: #{tpu_custom_call.1} parent=11 // pred_check
          %p284 = pneg %p112
        $region22: #{tpu_custom_call.1} parent=11 // pred_check_branch
          %286 = sbr.rel (%p284) target = $region24
        $region23: #{tpu_custom_call.1} parent=11 // pred_region
          %s288 = ssub.s32 512, 512
          %289 = vsyncadd [#allocation13], %s288
          %s290 = sshll.u32 [#allocation12], 4
          %s291 = int_to_ptr.vmem [resolvable:$true] %s290
          %296 = dma.hbm_to_vmem [thread:$0]  %s3, 512, %s291, [#allocation13], 128, 128, 8
        $region24: #{tpu_custom_call.1} parent=11 // pred_fallthru
          _
        // Predicated region
        $region25: #{tpu_custom_call.1} parent=11 // pred_check
          %p297 = pneg %p133
        $region26: #{tpu_custom_call.1} parent=11 // pred_check_branch
          %299 = sbr.rel (%p297) target = $region28
        $region27: #{tpu_custom_call.1} parent=11 // pred_region
          _
        $region28: #{tpu_custom_call.1} parent=11 // pred_fallthru
          _
        // Predicated region
        $region29: #{tpu_custom_call.1} parent=11 // pred_check
          %p300 = pneg %p154
        $region30: #{tpu_custom_call.1} parent=11 // pred_check_branch
          %302 = sbr.rel (%p300) target = $region32
        $region31: #{tpu_custom_call.1} parent=11 // pred_region
          _
        $region32: #{tpu_custom_call.1} parent=11 // pred_fallthru
          _
        // Predicated region
        $region33: #{tpu_custom_call.1} parent=11 // pred_check
          %p303 = pneg %p175
        $region34: #{tpu_custom_call.1} parent=11 // pred_check_branch
          %305 = sbr.rel (%p303) target = $region36
        $region35: #{tpu_custom_call.1} parent=11 // pred_region
          _
        $region36: #{tpu_custom_call.1} parent=11 // pred_fallthru
          _
        // Predicated region
        $region37: #{tpu_custom_call.1} parent=11 // pred_check
          %p306 = pneg %p196
        $region38: #{tpu_custom_call.1} parent=11 // pred_check_branch
          %308 = sbr.rel (%p306) target = $region40
        $region39: #{tpu_custom_call.1} parent=11 // pred_region
          %s310 = ssub.s32 512, 512
          %311 = vsyncadd [#allocation13], %s310
          %s312 = sshll.u32 [#allocation14], 4
          %s313 = int_to_ptr.vmem [resolvable:$true] %s312
          %318 = dma.hbm_to_vmem [thread:$0]  %s7, 512, %s313, [#allocation13], 128, 128, 8
        $region40: #{tpu_custom_call.1} parent=11 // pred_fallthru
          _
        // Predicated region
        $region41: #{tpu_custom_call.1} parent=11 // pred_check
          %p319 = pneg %p217
        $region42: #{tpu_custom_call.1} parent=11 // pred_check_branch
          %321 = sbr.rel (%p319) target = $region44
        $region43: #{tpu_custom_call.1} parent=11 // pred_region
          _
        $region44: #{tpu_custom_call.1} parent=11 // pred_fallthru
          _
      $region12: #{tpu_custom_call.1} parent=5 // pred_fallthru
        _
      %p322 = scmp.lt.s32.totalorder %s23, 2
      // Predicated region
      $region45: #{tpu_custom_call.1} parent=5 // pred_check
        %p323 = pneg %p322
      $region46: #{tpu_custom_call.1} parent=5 // pred_check_branch
        %325 = sbr.rel (%p323) target = $region48
      $region47: #{tpu_custom_call.1} parent=5 // pred_region
        // Predicated region
        $region49: #{tpu_custom_call.1} parent=47 // pred_check
          %p326 = pneg %p43
        $region50: #{tpu_custom_call.1} parent=47 // pred_check_branch
          %328 = sbr.rel (%p326) target = $region52
        $region51: #{tpu_custom_call.1} parent=47 // pred_region
          %s329 = sand.u32 %s33, 1
          %s330 = scalar_lea.sflag [#allocation7], %s329
          %s331 = sand.u32 %s33, 1
          %s332 = smul.addr %s331, 8
          %s333 = scalar_lea.vmem [#allocation6], %s332
          %s335 = ssub.s32 128, 128
          %336 = vsyncadd %s330, %s335
          %s337 = smul.addr %s23, 128
          %s338 = scalar_lea.hbm %s0, %s337
          %s340 = sshll.u32 %s333, 4
          %s341 = int_to_ptr.vmem [resolvable:$true] %s340
          %343 = dma.hbm_to_vmem [thread:$0]  %s338, 128, %s341, %s330
        $region52: #{tpu_custom_call.1} parent=47 // pred_fallthru
          _
      $region48: #{tpu_custom_call.1} parent=5 // pred_fallthru
        _
      %p344 = scmp.le.s32.totalorder 1, %s23
      %p345 = scmp.lt.s32.totalorder %s23, 3
      %p346 = pnand %p344, %p345
      %p347 = pneg %p346
      // Predicated region
      $region53: #{tpu_custom_call.1} parent=5 // pred_check
        _
      $region54: #{tpu_custom_call.1} parent=5 // pred_check_branch
        %349 = sbr.rel (%p346) target = $region56
      $region55: #{tpu_custom_call.1} parent=5 // pred_region
        %s350 = ssub.s32 %s23, 1
        %s351 = sand.u32 %s36, 1
        %s352 = scalar_lea.sflag [#allocation7], %s351
        %s353 = sand.u32 %s36, 1
        %s354 = smul.addr %s353, 8
        %s355 = scalar_lea.vmem [#allocation6], %s354
        // Predicated region
        $region57: #{tpu_custom_call.1} parent=55 // pred_check
          %p356 = pneg %p49
        $region58: #{tpu_custom_call.1} parent=55 // pred_check_branch
          %358 = sbr.rel (%p356) target = $region60
        $region59: #{tpu_custom_call.1} parent=55 // pred_region
          %359 = dma.done %s352, 128
        $region60: #{tpu_custom_call.1} parent=55 // pred_fallthru
          _
        // Predicated region
        $region61: #{tpu_custom_call.1} parent=55 // pred_check
          %p360 = pneg %p70
        $region62: #{tpu_custom_call.1} parent=55 // pred_check_branch
          %362 = sbr.rel (%p360) target = $region64
        $region63: #{tpu_custom_call.1} parent=55 // pred_region
          %363 = dma.done [#allocation10], 512
        $region64: #{tpu_custom_call.1} parent=55 // pred_fallthru
          _
        // Predicated region
        $region65: #{tpu_custom_call.1} parent=55 // pred_check
          %p364 = pneg %p91
        $region66: #{tpu_custom_call.1} parent=55 // pred_check_branch
          %366 = sbr.rel (%p364) target = $region68
        $region67: #{tpu_custom_call.1} parent=55 // pred_region
          %367 = dma.done [#allocation10], 512
        $region68: #{tpu_custom_call.1} parent=55 // pred_fallthru
          _
        // Predicated region
        $region69: #{tpu_custom_call.1} parent=55 // pred_check
          %p368 = pneg %p112
        $region70: #{tpu_custom_call.1} parent=55 // pred_check_branch
          %370 = sbr.rel (%p368) target = $region72
        $region71: #{tpu_custom_call.1} parent=55 // pred_region
          %371 = dma.done [#allocation13], 512
        $region72: #{tpu_custom_call.1} parent=55 // pred_fallthru
          _
        // Predicated region
        $region73: #{tpu_custom_call.1} parent=55 // pred_check
          %p372 = pneg %p196
        $region74: #{tpu_custom_call.1} parent=55 // pred_check_branch
          %374 = sbr.rel (%p372) target = $region76
        $region75: #{tpu_custom_call.1} parent=55 // pred_region
          %375 = dma.done [#allocation13], 512
        $region76: #{tpu_custom_call.1} parent=55 // pred_fallthru
          _
        %s376 = sand.u32 %s36, 1
        %s377 = scalar_lea.sflag [#allocation7], %s376
        %s378 = sand.u32 %s36, 1
        %s379 = smul.addr %s378, 8
        %s380 = scalar_lea.vmem [#allocation6], %s379
        %p381 = pneg %p49
        %p382 = pneg %p46
        %p383 = pneg %p70
        %p384 = pneg %p67
        %p385 = pneg %p91
        %p386 = pneg %p88
        %p387 = pneg %p112
        %p388 = pneg %p109
        %p389 = pneg %p133
        %p390 = pneg %p130
        %p391 = pneg %p154
        %p392 = pneg %p151
        %p393 = pneg %p175
        %p394 = pneg %p172
        %p395 = pneg %p196
        %p396 = pneg %p193
        %p397 = pneg %p217
        %p398 = pneg %p214
        %p399 = pneg %p243
        %p400 = pneg %p240
        %s401 = sand.u32 %s230, 1
        %s402 = scalar_lea.sflag [#allocation8], %s401
        %s403 = sand.u32 %s230, 1
        %s404 = smul.addr %s403, 8
        %s405 = scalar_lea.vmem [#allocation15], %s404
        %v406 = vld [vmem:[%s355] sm:$0xff]
        %v407 = vld [vmem:[#allocation9] sm:$0xff]
        %v408 = vld [vmem:[#allocation9 + $0x8] sm:$0xff]
        %v409 = vld [vmem:[#allocation9 + $0x10] sm:$0xff]
        %v410 = vld [vmem:[#allocation9 + $0x18] sm:$0xff]
        %v411 = vld [vmem:[%s4] sm:$0x1]
        %v413 = vlaneseq
        %v414 = vshrl.u32 %v413, 7
        %v415 = vsub.s32 0, %v414
        %v416 = vrot.slane %v411, %v415
        %vm418 = vcmask 261120
        %v420 = vsel %vm418, %v406, 0
        %422 = vmatprep.subr.mxu0 0.0
        %423 = vmatpush1.msra.mxu0 %v407
        %424 = vmatprep.subr.mxu0 0.0
        %425 = vmatpush1.msra.mxu0 %v408
        %426 = vmatprep.subr.mxu0 0.0
        %427 = vmatpush1.msra.mxu0 %v409
        %428 = vmatprep.subr.mxu0 0.0
        %429 = vmatpush1.msra.mxu0 %v410
        %430 = vmatprep.subr.mxu0 0.0
        %431 = vmatpush1.msra.mxu0 0.0
        %432 = vmatprep.subr.mxu0 0.0
        %433 = vmatpush1.msra.mxu0 0.0
        %434 = vmatprep.subr.mxu0 0.0
        %435 = vmatpush1.msra.mxu0 0.0
        %436 = vmatprep.subr.mxu0 0.0
        %437 = vmatpush1.msra.mxu0 0.0
        %438 = vmatprep.subr.mxu0 0.0
        %439 = vmatpush1.msra.mxu0 0.0
        %440 = vmatprep.subr.mxu0 0.0
        %441 = vmatpush1.msra.mxu0 0.0
        %442 = vmatprep.subr.mxu0 0.0
        %443 = vmatpush1.msra.mxu0 0.0
        %444 = vmatprep.subr.mxu0 0.0
        %445 = vmatpush1.msra.mxu0 0.0
        %446 = vmatprep.subr.mxu0 0.0
        %447 = vmatpush1.msra.mxu0 0.0
        %448 = vmatprep.subr.mxu0 0.0
        %449 = vmatpush1.msra.mxu0 0.0
        %450 = vmatprep.subr.mxu0 0.0
        %451 = vmatpush1.msra.mxu0 0.0
        %452 = vmatprep.subr.mxu0 0.0
        %453 = vmatpush1.msra.mxu0 0.0
        %454 = vmatprep.subr.mxu0 0.0
        %455 = vmatpush1.msra.mxu0 0.0
        %456 = vmatprep.subr.mxu0 0.0
        %457 = vmatpush1.msra.mxu0 0.0
        %458 = vmatprep.subr.mxu0 0.0
        %459 = vmatpush1.msra.mxu0 0.0
        %460 = vmatprep.subr.mxu0 0.0
        %461 = vmatpush1.msra.mxu0 0.0
        %462 = vmatprep.subr.mxu0 0.0
        %463 = vmatpush1.msra.mxu0 0.0
        %464 = vmatprep.subr.mxu0 0.0
        %465 = vmatpush1.msra.mxu0 0.0
        %466 = vmatprep.subr.mxu0 0.0
        %467 = vmatpush1.msra.mxu0 0.0
        %468 = vmatprep.subr.mxu0 0.0
        %469 = vmatpush1.msra.mxu0 0.0
        %470 = vmatprep.subr.mxu0 0.0
        %471 = vmatpush1.msra.mxu0 0.0
        %472 = vmatprep.subr.mxu0 0.0
        %473 = vmatpush1.msra.mxu0 0.0
        %474 = vmatprep.subr.mxu0 0.0
        %475 = vmatpush1.msra.mxu0 0.0
        %476 = vmatprep.subr.mxu0 0.0
        %477 = vmatpush1.msra.mxu0 0.0
        %478 = vmatprep.subr.mxu0 0.0
        %479 = vmatpush1.msra.mxu0 0.0
        %480 = vmatprep.subr.mxu0 0.0
        %481 = vmatpush1.msra.mxu0 0.0
        %482 = vmatprep.subr.mxu0 0.0
        %483 = vmatpush1.msra.mxu0 0.0
        %484 = vmatprep.subr.mxu0 0.0
        %485 = vmatpush1.msra.mxu0 0.0
        %486 = vmatprep.mubr.f32.mxu0 0.0
        %487 = vmatmul.mubr.f32.gmra.mrb[0].mxu0 %v420
        %v488 = vpop.f32.mrb[0].mxu0
        %v489 = vadd.f32 %v416, %v488
        %v490 = vpop.f32.mrb[0].mxu0
        %491 = vdwg.mxu0
        %v492 = vmul.f32 %v489, 0.35355338
        %v493 = vld [vmem:[#allocation11] sm:$0xff]
        %v494 = vld [vmem:[#allocation11 + $0x8] sm:$0xff]
        %v495 = vld [vmem:[#allocation11 + $0x10] sm:$0xff]
        %v496 = vld [vmem:[#allocation11 + $0x18] sm:$0xff]
        %v497 = vld [vmem:[%s5] sm:$0x1]
        %v499 = vlaneseq
        %v500 = vshrl.u32 %v499, 7
        %v501 = vsub.s32 0, %v500
        %v502 = vrot.slane %v497, %v501
        %504 = vmatprep.subr.mxu0 0.0
        %505 = vmatpush1.msra.mxu0 %v493
        %506 = vmatprep.subr.mxu0 0.0
        %507 = vmatpush1.msra.mxu0 %v494
        %508 = vmatprep.subr.mxu0 0.0
        %509 = vmatpush1.msra.mxu0 %v495
        %510 = vmatprep.subr.mxu0 0.0
        %511 = vmatpush1.msra.mxu0 %v496
        %512 = vmatprep.subr.mxu0 0.0
        %513 = vmatpush1.msra.mxu0 0.0
        %514 = vmatprep.subr.mxu0 0.0
        %515 = vmatpush1.msra.mxu0 0.0
        %516 = vmatprep.subr.mxu0 0.0
        %517 = vmatpush1.msra.mxu0 0.0
        %518 = vmatprep.subr.mxu0 0.0
        %519 = vmatpush1.msra.mxu0 0.0
        %520 = vmatprep.subr.mxu0 0.0
        %521 = vmatpush1.msra.mxu0 0.0
        %522 = vmatprep.subr.mxu0 0.0
        %523 = vmatpush1.msra.mxu0 0.0
        %524 = vmatprep.subr.mxu0 0.0
        %525 = vmatpush1.msra.mxu0 0.0
        %526 = vmatprep.subr.mxu0 0.0
        %527 = vmatpush1.msra.mxu0 0.0
        %528 = vmatprep.subr.mxu0 0.0
        %529 = vmatpush1.msra.mxu0 0.0
        %530 = vmatprep.subr.mxu0 0.0
        %531 = vmatpush1.msra.mxu0 0.0
        %532 = vmatprep.subr.mxu0 0.0
        %533 = vmatpush1.msra.mxu0 0.0
        %534 = vmatprep.subr.mxu0 0.0
        %535 = vmatpush1.msra.mxu0 0.0
        %536 = vmatprep.subr.mxu0 0.0
        %537 = vmatpush1.msra.mxu0 0.0
        %538 = vmatprep.subr.mxu0 0.0
        %539 = vmatpush1.msra.mxu0 0.0
        %540 = vmatprep.subr.mxu0 0.0
        %541 = vmatpush1.msra.mxu0 0.0
        %542 = vmatprep.subr.mxu0 0.0
        %543 = vmatpush1.msra.mxu0 0.0
        %544 = vmatprep.subr.mxu0 0.0
        %545 = vmatpush1.msra.mxu0 0.0
        %546 = vmatprep.subr.mxu0 0.0
        %547 = vmatpush1.msra.mxu0 0.0
        %548 = vmatprep.subr.mxu0 0.0
        %549 = vmatpush1.msra.mxu0 0.0
        %550 = vmatprep.subr.mxu0 0.0
        %551 = vmatpush1.msra.mxu0 0.0
        %552 = vmatprep.subr.mxu0 0.0
        %553 = vmatpush1.msra.mxu0 0.0
        %554 = vmatprep.subr.mxu0 0.0
        %555 = vmatpush1.msra.mxu0 0.0
        %556 = vmatprep.subr.mxu0 0.0
        %557 = vmatpush1.msra.mxu0 0.0
        %558 = vmatprep.subr.mxu0 0.0
        %559 = vmatpush1.msra.mxu0 0.0
        %560 = vmatprep.subr.mxu0 0.0
        %561 = vmatpush1.msra.mxu0 0.0
        %562 = vmatprep.subr.mxu0 0.0
        %563 = vmatpush1.msra.mxu0 0.0
        %564 = vmatprep.subr.mxu0 0.0
        %565 = vmatpush1.msra.mxu0 0.0
        %566 = vmatprep.subr.mxu0 0.0
        %567 = vmatpush1.msra.mxu0 0.0
        %568 = vmatprep.mubr.f32.mxu0 0.0
        %569 = vmatmul.mubr.f32.gmra.mrb[0].mxu0 %v420
        %v570 = vpop.f32.mrb[0].mxu0
        %v571 = vadd.f32 %v502, %v570
        %v572 = vpop.f32.mrb[0].mxu0
        %573 = vdwg.mxu0
        %v574 = vld [vmem:[#allocation12] sm:$0xff]
        %v575 = vld [vmem:[#allocation12 + $0x8] sm:$0xff]
        %v576 = vld [vmem:[#allocation12 + $0x10] sm:$0xff]
        %v577 = vld [vmem:[#allocation12 + $0x18] sm:$0xff]
        %v578 = vld [vmem:[%s6] sm:$0x1]
        %v580 = vlaneseq
        %v581 = vshrl.u32 %v580, 7
        %v582 = vsub.s32 0, %v581
        %v583 = vrot.slane %v578, %v582
        %585 = vmatprep.subr.mxu0 0.0
        %586 = vmatpush1.msra.mxu0 %v574
        %587 = vmatprep.subr.mxu0 0.0
        %588 = vmatpush1.msra.mxu0 %v575
        %589 = vmatprep.subr.mxu0 0.0
        %590 = vmatpush1.msra.mxu0 %v576
        %591 = vmatprep.subr.mxu0 0.0
        %592 = vmatpush1.msra.mxu0 %v577
        %593 = vmatprep.subr.mxu0 0.0
        %594 = vmatpush1.msra.mxu0 0.0
        %595 = vmatprep.subr.mxu0 0.0
        %596 = vmatpush1.msra.mxu0 0.0
        %597 = vmatprep.subr.mxu0 0.0
        %598 = vmatpush1.msra.mxu0 0.0
        %599 = vmatprep.subr.mxu0 0.0
        %600 = vmatpush1.msra.mxu0 0.0
        %601 = vmatprep.subr.mxu0 0.0
        %602 = vmatpush1.msra.mxu0 0.0
        %603 = vmatprep.subr.mxu0 0.0
        %604 = vmatpush1.msra.mxu0 0.0
        %605 = vmatprep.subr.mxu0 0.0
        %606 = vmatpush1.msra.mxu0 0.0
        %607 = vmatprep.subr.mxu0 0.0
        %608 = vmatpush1.msra.mxu0 0.0
        %609 = vmatprep.subr.mxu0 0.0
        %610 = vmatpush1.msra.mxu0 0.0
        %611 = vmatprep.subr.mxu0 0.0
        %612 = vmatpush1.msra.mxu0 0.0
        %613 = vmatprep.subr.mxu0 0.0
        %614 = vmatpush1.msra.mxu0 0.0
        %615 = vmatprep.subr.mxu0 0.0
        %616 = vmatpush1.msra.mxu0 0.0
        %617 = vmatprep.subr.mxu0 0.0
        %618 = vmatpush1.msra.mxu0 0.0
        %619 = vmatprep.subr.mxu0 0.0
        %620 = vmatpush1.msra.mxu0 0.0
        %621 = vmatprep.subr.mxu0 0.0
        %622 = vmatpush1.msra.mxu0 0.0
        %623 = vmatprep.subr.mxu0 0.0
        %624 = vmatpush1.msra.mxu0 0.0
        %625 = vmatprep.subr.mxu0 0.0
        %626 = vmatpush1.msra.mxu0 0.0
        %627 = vmatprep.subr.mxu0 0.0
        %628 = vmatpush1.msra.mxu0 0.0
        %629 = vmatprep.subr.mxu0 0.0
        %630 = vmatpush1.msra.mxu0 0.0
        %631 = vmatprep.subr.mxu0 0.0
        %632 = vmatpush1.msra.mxu0 0.0
        %633 = vmatprep.subr.mxu0 0.0
        %634 = vmatpush1.msra.mxu0 0.0
        %635 = vmatprep.subr.mxu0 0.0
        %636 = vmatpush1.msra.mxu0 0.0
        %637 = vmatprep.subr.mxu0 0.0
        %638 = vmatpush1.msra.mxu0 0.0
        %639 = vmatprep.subr.mxu0 0.0
        %640 = vmatpush1.msra.mxu0 0.0
        %641 = vmatprep.subr.mxu0 0.0
        %642 = vmatpush1.msra.mxu0 0.0
        %643 = vmatprep.subr.mxu0 0.0
        %644 = vmatpush1.msra.mxu0 0.0
        %645 = vmatprep.subr.mxu0 0.0
        %646 = vmatpush1.msra.mxu0 0.0
        %647 = vmatprep.subr.mxu0 0.0
        %648 = vmatpush1.msra.mxu0 0.0
        %649 = vmatprep.mubr.f32.mxu0 0.0
        %650 = vmatmul.mubr.f32.gmra.mrb[0].mxu0 %v420
        %v651 = vpop.f32.mrb[0].mxu0
        %v652 = vadd.f32 %v583, %v651
        %v653 = vpop.f32.mrb[0].mxu0
        %654 = vdwg.mxu0
        %vm655 = vcmask 64512
        %656 = vst.msk [vmem:[#allocation2] sm:$0xff] %vm655, %v492
        %657 = vst.msk [vmem:[#allocation3] sm:$0xff] %vm655, %v571
        %658 = vst.msk [vmem:[#allocation4] sm:$0xff] %vm655, %v652
        %660 = vrot.lane.b32.xlu0 %v492, 120
        %v661 = vpop.permute.xlu0 %660
        %s663 = scalar_lea.vmem [#allocation2], 8
        %664 = vst.msk [vmem:[%s663] sm:$0xff] %vm655, %v661
        %666 = vrot.lane.b32.xlu0 %v571, 120
        %v667 = vpop.permute.xlu0 %666
        %s669 = scalar_lea.vmem [#allocation3], 8
        %670 = vst.msk [vmem:[%s669] sm:$0xff] %vm655, %v667
        %672 = vrot.lane.b32.xlu0 %v652, 120
        %v673 = vpop.permute.xlu0 %672
        %s675 = scalar_lea.vmem [#allocation4], 8
        %676 = vst.msk [vmem:[%s675] sm:$0xff] %vm655, %v673
        %677 = vrot.lane.b32.xlu0 %v492, 112
        %v678 = vpop.permute.xlu0 %677
        %s680 = scalar_lea.vmem [#allocation2], 16
        %681 = vst.msk [vmem:[%s680] sm:$0xff] %vm655, %v678
        %682 = vrot.lane.b32.xlu0 %v571, 112
        %v683 = vpop.permute.xlu0 %682
        %s685 = scalar_lea.vmem [#allocation3], 16
        %686 = vst.msk [vmem:[%s685] sm:$0xff] %vm655, %v683
        %687 = vrot.lane.b32.xlu0 %v652, 112
        %v688 = vpop.permute.xlu0 %687
        %s690 = scalar_lea.vmem [#allocation4], 16
        %691 = vst.msk [vmem:[%s690] sm:$0xff] %vm655, %v688
        %692 = vrot.lane.b32.xlu0 %v492, 104
        %v693 = vpop.permute.xlu0 %692
        %s695 = scalar_lea.vmem [#allocation2], 24
        %696 = vst.msk [vmem:[%s695] sm:$0xff] %vm655, %v693
        %697 = vrot.lane.b32.xlu0 %v571, 104
        %v698 = vpop.permute.xlu0 %697
        %s700 = scalar_lea.vmem [#allocation3], 24
        %701 = vst.msk [vmem:[%s700] sm:$0xff] %vm655, %v698
        %702 = vrot.lane.b32.xlu0 %v652, 104
        %v703 = vpop.permute.xlu0 %702
        %s705 = scalar_lea.vmem [#allocation4], 24
        %706 = vst.msk [vmem:[%s705] sm:$0xff] %vm655, %v703
        %v707 = vld [vmem:[#allocation2] sm:$0x3]
        %v708 = vld [vmem:[#allocation2 + $0x8] sm:$0x3]
        %v709 = vld [vmem:[#allocation2 + $0x10] sm:$0x3]
        %v710 = vld [vmem:[#allocation2 + $0x18] sm:$0x3]
        %v711 = vld [vmem:[#allocation3] sm:$0xff]
        %v712 = vld [vmem:[#allocation3 + $0x8] sm:$0xff]
        %v713 = vld [vmem:[#allocation3 + $0x10] sm:$0xff]
        %v714 = vld [vmem:[#allocation3 + $0x18] sm:$0xff]
        %v715 = vld [vmem:[#allocation4] sm:$0xff]
        %v716 = vld [vmem:[#allocation4 + $0x8] sm:$0xff]
        %v717 = vld [vmem:[#allocation4 + $0x10] sm:$0xff]
        %v718 = vld [vmem:[#allocation4 + $0x18] sm:$0xff]
        %v720 = vsel %vm655, %v707, 0
        %v723 = vsel %vm655, %v711, 0
        %725 = vmatprep.subr.mxu0 0.0
        %726 = vmatpush1.xpose.msra.mxu0 %v723
        %727 = vmatprep.subr.mxu0 0.0
        %728 = vmatpush1.xpose.msra.mxu0 0.0
        %729 = vmatprep.subr.mxu0 0.0
        %730 = vmatpush1.xpose.msra.mxu0 0.0
        %731 = vmatprep.subr.mxu0 0.0
        %732 = vmatpush1.xpose.msra.mxu0 0.0
        %733 = vmatprep.subr.mxu0 0.0
        %734 = vmatpush1.xpose.msra.mxu0 0.0
        %735 = vmatprep.subr.mxu0 0.0
        %736 = vmatpush1.xpose.msra.mxu0 0.0
        %737 = vmatprep.subr.mxu0 0.0
        %738 = vmatpush1.xpose.msra.mxu0 0.0
        %739 = vmatprep.subr.mxu0 0.0
        %740 = vmatpush1.xpose.msra.mxu0 0.0
        %741 = vmatprep.subr.mxu0 0.0
        %742 = vmatpush1.xpose.msra.mxu0 0.0
        %743 = vmatprep.subr.mxu0 0.0
        %744 = vmatpush1.xpose.msra.mxu0 0.0
        %745 = vmatprep.subr.mxu0 0.0
        %746 = vmatpush1.xpose.msra.mxu0 0.0
        %747 = vmatprep.subr.mxu0 0.0
        %748 = vmatpush1.xpose.msra.mxu0 0.0
        %749 = vmatprep.subr.mxu0 0.0
        %750 = vmatpush1.xpose.msra.mxu0 0.0
        %751 = vmatprep.subr.mxu0 0.0
        %752 = vmatpush1.xpose.msra.mxu0 0.0
        %753 = vmatprep.subr.mxu0 0.0
        %754 = vmatpush1.xpose.msra.mxu0 0.0
        %755 = vmatprep.subr.mxu0 0.0
        %756 = vmatpush1.xpose.msra.mxu0 0.0
        %757 = vmatprep.subr.mxu0 0.0
        %758 = vmatpush1.xpose.msra.mxu0 0.0
        %759 = vmatprep.subr.mxu0 0.0
        %760 = vmatpush1.xpose.msra.mxu0 0.0
        %761 = vmatprep.subr.mxu0 0.0
        %762 = vmatpush1.xpose.msra.mxu0 0.0
        %763 = vmatprep.subr.mxu0 0.0
        %764 = vmatpush1.xpose.msra.mxu0 0.0
        %765 = vmatprep.subr.mxu0 0.0
        %766 = vmatpush1.xpose.msra.mxu0 0.0
        %767 = vmatprep.subr.mxu0 0.0
        %768 = vmatpush1.xpose.msra.mxu0 0.0
        %769 = vmatprep.subr.mxu0 0.0
        %770 = vmatpush1.xpose.msra.mxu0 0.0
        %771 = vmatprep.subr.mxu0 0.0
        %772 = vmatpush1.xpose.msra.mxu0 0.0
        %773 = vmatprep.subr.mxu0 0.0
        %774 = vmatpush1.xpose.msra.mxu0 0.0
        %775 = vmatprep.subr.mxu0 0.0
        %776 = vmatpush1.xpose.msra.mxu0 0.0
        %777 = vmatprep.subr.mxu0 0.0
        %778 = vmatpush1.xpose.msra.mxu0 0.0
        %779 = vmatprep.subr.mxu0 0.0
        %780 = vmatpush1.xpose.msra.mxu0 0.0
        %781 = vmatprep.subr.mxu0 0.0
        %782 = vmatpush1.xpose.msra.mxu0 0.0
        %783 = vmatprep.subr.mxu0 0.0
        %784 = vmatpush1.xpose.msra.mxu0 0.0
        %785 = vmatprep.subr.mxu0 0.0
        %786 = vmatpush1.xpose.msra.mxu0 0.0
        %787 = vmatprep.subr.mxu0 0.0
        %788 = vmatpush1.xpose.msra.mxu0 0.0
        %789 = vmatprep.mubr.f32.mxu0 0.0
        %790 = vmatmul.mubr.f32.gmra.mrb[0].mxu0 %v720
        %v791 = vpop.f32.mrb[0].mxu0
        %v792 = vadd.f32 0.0, %v791
        %v793 = vpop.f32.mrb[0].mxu0
        %794 = vdwg.mxu0
        %v796 = vsel %vm655, %v708, 0
        %v799 = vsel %vm655, %v712, 0
        %801 = vmatprep.subr.mxu0 0.0
        %802 = vmatpush1.xpose.msra.mxu0 %v799
        %803 = vmatprep.subr.mxu0 0.0
        %804 = vmatpush1.xpose.msra.mxu0 0.0
        %805 = vmatprep.subr.mxu0 0.0
        %806 = vmatpush1.xpose.msra.mxu0 0.0
        %807 = vmatprep.subr.mxu0 0.0
        %808 = vmatpush1.xpose.msra.mxu0 0.0
        %809 = vmatprep.subr.mxu0 0.0
        %810 = vmatpush1.xpose.msra.mxu0 0.0
        %811 = vmatprep.subr.mxu0 0.0
        %812 = vmatpush1.xpose.msra.mxu0 0.0
        %813 = vmatprep.subr.mxu0 0.0
        %814 = vmatpush1.xpose.msra.mxu0 0.0
        %815 = vmatprep.subr.mxu0 0.0
        %816 = vmatpush1.xpose.msra.mxu0 0.0
        %817 = vmatprep.subr.mxu0 0.0
        %818 = vmatpush1.xpose.msra.mxu0 0.0
        %819 = vmatprep.subr.mxu0 0.0
        %820 = vmatpush1.xpose.msra.mxu0 0.0
        %821 = vmatprep.subr.mxu0 0.0
        %822 = vmatpush1.xpose.msra.mxu0 0.0
        %823 = vmatprep.subr.mxu0 0.0
        %824 = vmatpush1.xpose.msra.mxu0 0.0
        %825 = vmatprep.subr.mxu0 0.0
        %826 = vmatpush1.xpose.msra.mxu0 0.0
        %827 = vmatprep.subr.mxu0 0.0
        %828 = vmatpush1.xpose.msra.mxu0 0.0
        %829 = vmatprep.subr.mxu0 0.0
        %830 = vmatpush1.xpose.msra.mxu0 0.0
        %831 = vmatprep.subr.mxu0 0.0
        %832 = vmatpush1.xpose.msra.mxu0 0.0
        %833 = vmatprep.subr.mxu0 0.0
        %834 = vmatpush1.xpose.msra.mxu0 0.0
        %835 = vmatprep.subr.mxu0 0.0
        %836 = vmatpush1.xpose.msra.mxu0 0.0
        %837 = vmatprep.subr.mxu0 0.0
        %838 = vmatpush1.xpose.msra.mxu0 0.0
        %839 = vmatprep.subr.mxu0 0.0
        %840 = vmatpush1.xpose.msra.mxu0 0.0
        %841 = vmatprep.subr.mxu0 0.0
        %842 = vmatpush1.xpose.msra.mxu0 0.0
        %843 = vmatprep.subr.mxu0 0.0
        %844 = vmatpush1.xpose.msra.mxu0 0.0
        %845 = vmatprep.subr.mxu0 0.0
        %846 = vmatpush1.xpose.msra.mxu0 0.0
        %847 = vmatprep.subr.mxu0 0.0
        %848 = vmatpush1.xpose.msra.mxu0 0.0
        %849 = vmatprep.subr.mxu0 0.0
        %850 = vmatpush1.xpose.msra.mxu0 0.0
        %851 = vmatprep.subr.mxu0 0.0
        %852 = vmatpush1.xpose.msra.mxu0 0.0
        %853 = vmatprep.subr.mxu0 0.0
        %854 = vmatpush1.xpose.msra.mxu0 0.0
        %855 = vmatprep.subr.mxu0 0.0
        %856 = vmatpush1.xpose.msra.mxu0 0.0
        %857 = vmatprep.subr.mxu0 0.0
        %858 = vmatpush1.xpose.msra.mxu0 0.0
        %859 = vmatprep.subr.mxu0 0.0
        %860 = vmatpush1.xpose.msra.mxu0 0.0
        %861 = vmatprep.subr.mxu0 0.0
        %862 = vmatpush1.xpose.msra.mxu0 0.0
        %863 = vmatprep.subr.mxu0 0.0
        %864 = vmatpush1.xpose.msra.mxu0 0.0
        %865 = vmatprep.mubr.f32.mxu0 0.0
        %866 = vmatmul.mubr.f32.gmra.mrb[0].mxu0 %v796
        %v867 = vpop.f32.mrb[0].mxu0
        %v868 = vadd.f32 0.0, %v867
        %v869 = vpop.f32.mrb[0].mxu0
        %870 = vdwg.mxu0
        %v872 = vsel %vm655, %v709, 0
        %v875 = vsel %vm655, %v713, 0
        %877 = vmatprep.subr.mxu0 0.0
        %878 = vmatpush1.xpose.msra.mxu0 %v875
        %879 = vmatprep.subr.mxu0 0.0
        %880 = vmatpush1.xpose.msra.mxu0 0.0
        %881 = vmatprep.subr.mxu0 0.0
        %882 = vmatpush1.xpose.msra.mxu0 0.0
        %883 = vmatprep.subr.mxu0 0.0
        %884 = vmatpush1.xpose.msra.mxu0 0.0
        %885 = vmatprep.subr.mxu0 0.0
        %886 = vmatpush1.xpose.msra.mxu0 0.0
        %887 = vmatprep.subr.mxu0 0.0
        %888 = vmatpush1.xpose.msra.mxu0 0.0
        %889 = vmatprep.subr.mxu0 0.0
        %890 = vmatpush1.xpose.msra.mxu0 0.0
        %891 = vmatprep.subr.mxu0 0.0
        %892 = vmatpush1.xpose.msra.mxu0 0.0
        %893 = vmatprep.subr.mxu0 0.0
        %894 = vmatpush1.xpose.msra.mxu0 0.0
        %895 = vmatprep.subr.mxu0 0.0
        %896 = vmatpush1.xpose.msra.mxu0 0.0
        %897 = vmatprep.subr.mxu0 0.0
        %898 = vmatpush1.xpose.msra.mxu0 0.0
        %899 = vmatprep.subr.mxu0 0.0
        %900 = vmatpush1.xpose.msra.mxu0 0.0
        %901 = vmatprep.subr.mxu0 0.0
        %902 = vmatpush1.xpose.msra.mxu0 0.0
        %903 = vmatprep.subr.mxu0 0.0
        %904 = vmatpush1.xpose.msra.mxu0 0.0
        %905 = vmatprep.subr.mxu0 0.0
        %906 = vmatpush1.xpose.msra.mxu0 0.0
        %907 = vmatprep.subr.mxu0 0.0
        %908 = vmatpush1.xpose.msra.mxu0 0.0
        %909 = vmatprep.subr.mxu0 0.0
        %910 = vmatpush1.xpose.msra.mxu0 0.0
        %911 = vmatprep.subr.mxu0 0.0
        %912 = vmatpush1.xpose.msra.mxu0 0.0
        %913 = vmatprep.subr.mxu0 0.0
        %914 = vmatpush1.xpose.msra.mxu0 0.0
        %915 = vmatprep.subr.mxu0 0.0
        %916 = vmatpush1.xpose.msra.mxu0 0.0
        %917 = vmatprep.subr.mxu0 0.0
        %918 = vmatpush1.xpose.msra.mxu0 0.0
        %919 = vmatprep.subr.mxu0 0.0
        %920 = vmatpush1.xpose.msra.mxu0 0.0
        %921 = vmatprep.subr.mxu0 0.0
        %922 = vmatpush1.xpose.msra.mxu0 0.0
        %923 = vmatprep.subr.mxu0 0.0
        %924 = vmatpush1.xpose.msra.mxu0 0.0
        %925 = vmatprep.subr.mxu0 0.0
        %926 = vmatpush1.xpose.msra.mxu0 0.0
        %927 = vmatprep.subr.mxu0 0.0
        %928 = vmatpush1.xpose.msra.mxu0 0.0
        %929 = vmatprep.subr.mxu0 0.0
        %930 = vmatpush1.xpose.msra.mxu0 0.0
        %931 = vmatprep.subr.mxu0 0.0
        %932 = vmatpush1.xpose.msra.mxu0 0.0
        %933 = vmatprep.subr.mxu0 0.0
        %934 = vmatpush1.xpose.msra.mxu0 0.0
        %935 = vmatprep.subr.mxu0 0.0
        %936 = vmatpush1.xpose.msra.mxu0 0.0
        %937 = vmatprep.subr.mxu0 0.0
        %938 = vmatpush1.xpose.msra.mxu0 0.0
        %939 = vmatprep.subr.mxu0 0.0
        %940 = vmatpush1.xpose.msra.mxu0 0.0
        %941 = vmatprep.mubr.f32.mxu0 0.0
        %942 = vmatmul.mubr.f32.gmra.mrb[0].mxu0 %v872
        %v943 = vpop.f32.mrb[0].mxu0
        %v944 = vadd.f32 0.0, %v943
        %v945 = vpop.f32.mrb[0].mxu0
        %946 = vdwg.mxu0
        %v948 = vsel %vm655, %v710, 0
        %v951 = vsel %vm655, %v714, 0
        %953 = vmatprep.subr.mxu0 0.0
        %954 = vmatpush1.xpose.msra.mxu0 %v951
        %955 = vmatprep.subr.mxu0 0.0
        %956 = vmatpush1.xpose.msra.mxu0 0.0
        %957 = vmatprep.subr.mxu0 0.0
        %958 = vmatpush1.xpose.msra.mxu0 0.0
        %959 = vmatprep.subr.mxu0 0.0
        %960 = vmatpush1.xpose.msra.mxu0 0.0
        %961 = vmatprep.subr.mxu0 0.0
        %962 = vmatpush1.xpose.msra.mxu0 0.0
        %963 = vmatprep.subr.mxu0 0.0
        %964 = vmatpush1.xpose.msra.mxu0 0.0
        %965 = vmatprep.subr.mxu0 0.0
        %966 = vmatpush1.xpose.msra.mxu0 0.0
        %967 = vmatprep.subr.mxu0 0.0
        %968 = vmatpush1.xpose.msra.mxu0 0.0
        %969 = vmatprep.subr.mxu0 0.0
        %970 = vmatpush1.xpose.msra.mxu0 0.0
        %971 = vmatprep.subr.mxu0 0.0
        %972 = vmatpush1.xpose.msra.mxu0 0.0
        %973 = vmatprep.subr.mxu0 0.0
        %974 = vmatpush1.xpose.msra.mxu0 0.0
        %975 = vmatprep.subr.mxu0 0.0
        %976 = vmatpush1.xpose.msra.mxu0 0.0
        %977 = vmatprep.subr.mxu0 0.0
        %978 = vmatpush1.xpose.msra.mxu0 0.0
        %979 = vmatprep.subr.mxu0 0.0
        %980 = vmatpush1.xpose.msra.mxu0 0.0
        %981 = vmatprep.subr.mxu0 0.0
        %982 = vmatpush1.xpose.msra.mxu0 0.0
        %983 = vmatprep.subr.mxu0 0.0
        %984 = vmatpush1.xpose.msra.mxu0 0.0
        %985 = vmatprep.subr.mxu0 0.0
        %986 = vmatpush1.xpose.msra.mxu0 0.0
        %987 = vmatprep.subr.mxu0 0.0
        %988 = vmatpush1.xpose.msra.mxu0 0.0
        %989 = vmatprep.subr.mxu0 0.0
        %990 = vmatpush1.xpose.msra.mxu0 0.0
        %991 = vmatprep.subr.mxu0 0.0
        %992 = vmatpush1.xpose.msra.mxu0 0.0
        %993 = vmatprep.subr.mxu0 0.0
        %994 = vmatpush1.xpose.msra.mxu0 0.0
        %995 = vmatprep.subr.mxu0 0.0
        %996 = vmatpush1.xpose.msra.mxu0 0.0
        %997 = vmatprep.subr.mxu0 0.0
        %998 = vmatpush1.xpose.msra.mxu0 0.0
        %999 = vmatprep.subr.mxu0 0.0
        %1000 = vmatpush1.xpose.msra.mxu0 0.0
        %1001 = vmatprep.subr.mxu0 0.0
        %1002 = vmatpush1.xpose.msra.mxu0 0.0
        %1003 = vmatprep.subr.mxu0 0.0
        %1004 = vmatpush1.xpose.msra.mxu0 0.0
        %1005 = vmatprep.subr.mxu0 0.0
        %1006 = vmatpush1.xpose.msra.mxu0 0.0
        %1007 = vmatprep.subr.mxu0 0.0
        %1008 = vmatpush1.xpose.msra.mxu0 0.0
        %1009 = vmatprep.subr.mxu0 0.0
        %1010 = vmatpush1.xpose.msra.mxu0 0.0
        %1011 = vmatprep.subr.mxu0 0.0
        %1012 = vmatpush1.xpose.msra.mxu0 0.0
        %1013 = vmatprep.subr.mxu0 0.0
        %1014 = vmatpush1.xpose.msra.mxu0 0.0
        %1015 = vmatprep.subr.mxu0 0.0
        %1016 = vmatpush1.xpose.msra.mxu0 0.0
        %1017 = vmatprep.mubr.f32.mxu0 0.0
        %1018 = vmatmul.mubr.f32.gmra.mrb[0].mxu0 %v948
        %v1019 = vpop.f32.mrb[0].mxu0
        %v1020 = vadd.f32 0.0, %v1019
        %v1021 = vpop.f32.mrb[0].mxu0
        %1022 = vdwg.mxu0
        %vm1023 = vcmask 58368
        %v1024 = vsel %vm1023, %v792, -inf
        %v1025 = vsel %vm1023, %v868, -inf
        %v1026 = vsel %vm1023, %v944, -inf
        %v1027 = vsel %vm1023, %v1020, -inf
        %v1028 = vmax.f32 %v1024, %v1025
        %v1029 = vmax.f32 %v1026, %v1027
        %v1030 = vmax.f32 %v1028, %v1029
        %v1031 = vsub.f32 %v792, %v1030
        %v1032 = vsub.f32 %v868, %v1030
        %v1033 = vsub.f32 %v944, %v1030
        %v1034 = vsub.f32 %v1020, %v1030
        %v1035 = vmul.f32 %v1031, 1.442695
        %v1036 = vpow.pop %v1035
        %v1037 = vmul.f32 %v1032, 1.442695
        %v1038 = vpow.pop %v1037
        %v1039 = vmul.f32 %v1033, 1.442695
        %v1040 = vpow.pop %v1039
        %v1041 = vmul.f32 %v1034, 1.442695
        %v1042 = vpow.pop %v1041
        %v1043 = vsel %vm1023, %v1036, 0.0
        %v1044 = vsel %vm1023, %v1038, 0.0
        %v1045 = vadd.f32 %v1043, %v1044
        %v1046 = vsel %vm1023, %v1040, 0.0
        %v1047 = vadd.f32 %v1045, %v1046
        %v1048 = vsel %vm1023, %v1042, 0.0
        %v1049 = vadd.f32 %v1047, %v1048
        %v1050 = vrcp.pop %v1049
        %v1051 = vmul.f32 %v1036, %v1050
        %v1052 = vmul.f32 %v1038, %v1050
        %v1053 = vmul.f32 %v1040, %v1050
        %v1054 = vmul.f32 %v1042, %v1050
        %v1056 = vsel %vm655, %v1051, 0
        %1058 = vmatprep.subr.mxu0 0.0
        %1059 = vmatpush1.msra.mxu0 %v715
        %1060 = vmatprep.subr.mxu0 0.0
        %1061 = vmatpush1.msra.mxu0 0.0
        %1062 = vmatprep.subr.mxu0 0.0
        %1063 = vmatpush1.msra.mxu0 0.0
        %1064 = vmatprep.subr.mxu0 0.0
        %1065 = vmatpush1.msra.mxu0 0.0
        %1066 = vmatprep.subr.mxu0 0.0
        %1067 = vmatpush1.msra.mxu0 0.0
        %1068 = vmatprep.subr.mxu0 0.0
        %1069 = vmatpush1.msra.mxu0 0.0
        %1070 = vmatprep.subr.mxu0 0.0
        %1071 = vmatpush1.msra.mxu0 0.0
        %1072 = vmatprep.subr.mxu0 0.0
        %1073 = vmatpush1.msra.mxu0 0.0
        %1074 = vmatprep.subr.mxu0 0.0
        %1075 = vmatpush1.msra.mxu0 0.0
        %1076 = vmatprep.subr.mxu0 0.0
        %1077 = vmatpush1.msra.mxu0 0.0
        %1078 = vmatprep.subr.mxu0 0.0
        %1079 = vmatpush1.msra.mxu0 0.0
        %1080 = vmatprep.subr.mxu0 0.0
        %1081 = vmatpush1.msra.mxu0 0.0
        %1082 = vmatprep.subr.mxu0 0.0
        %1083 = vmatpush1.msra.mxu0 0.0
        %1084 = vmatprep.subr.mxu0 0.0
        %1085 = vmatpush1.msra.mxu0 0.0
        %1086 = vmatprep.subr.mxu0 0.0
        %1087 = vmatpush1.msra.mxu0 0.0
        %1088 = vmatprep.subr.mxu0 0.0
        %1089 = vmatpush1.msra.mxu0 0.0
        %1090 = vmatprep.subr.mxu0 0.0
        %1091 = vmatpush1.msra.mxu0 0.0
        %1092 = vmatprep.subr.mxu0 0.0
        %1093 = vmatpush1.msra.mxu0 0.0
        %1094 = vmatprep.subr.mxu0 0.0
        %1095 = vmatpush1.msra.mxu0 0.0
        %1096 = vmatprep.subr.mxu0 0.0
        %1097 = vmatpush1.msra.mxu0 0.0
        %1098 = vmatprep.subr.mxu0 0.0
        %1099 = vmatpush1.msra.mxu0 0.0
        %1100 = vmatprep.subr.mxu0 0.0
        %1101 = vmatpush1.msra.mxu0 0.0
        %1102 = vmatprep.subr.mxu0 0.0
        %1103 = vmatpush1.msra.mxu0 0.0
        %1104 = vmatprep.subr.mxu0 0.0
        %1105 = vmatpush1.msra.mxu0 0.0
        %1106 = vmatprep.subr.mxu0 0.0
        %1107 = vmatpush1.msra.mxu0 0.0
        %1108 = vmatprep.subr.mxu0 0.0
        %1109 = vmatpush1.msra.mxu0 0.0
        %1110 = vmatprep.subr.mxu0 0.0
        %1111 = vmatpush1.msra.mxu0 0.0
        %1112 = vmatprep.subr.mxu0 0.0
        %1113 = vmatpush1.msra.mxu0 0.0
        %1114 = vmatprep.subr.mxu0 0.0
        %1115 = vmatpush1.msra.mxu0 0.0
        %1116 = vmatprep.subr.mxu0 0.0
        %1117 = vmatpush1.msra.mxu0 0.0
        %1118 = vmatprep.subr.mxu0 0.0
        %1119 = vmatpush1.msra.mxu0 0.0
        %1120 = vmatprep.subr.mxu0 0.0
        %1121 = vmatpush1.msra.mxu0 0.0
        %1122 = vmatprep.mubr.f32.mxu0 0.0
        %1123 = vmatmul.mubr.f32.gmra.mrb[0].mxu0 %v1056
        %v1124 = vpop.f32.mrb[0].mxu0
        %v1125 = vadd.f32 0.0, %v1124
        %v1126 = vpop.f32.mrb[0].mxu0
        %1127 = vdwg.mxu0
        %v1129 = vsel %vm655, %v1052, 0
        %1131 = vmatprep.subr.mxu0 0.0
        %1132 = vmatpush1.msra.mxu0 %v716
        %1133 = vmatprep.subr.mxu0 0.0
        %1134 = vmatpush1.msra.mxu0 0.0
        %1135 = vmatprep.subr.mxu0 0.0
        %1136 = vmatpush1.msra.mxu0 0.0
        %1137 = vmatprep.subr.mxu0 0.0
        %1138 = vmatpush1.msra.mxu0 0.0
        %1139 = vmatprep.subr.mxu0 0.0
        %1140 = vmatpush1.msra.mxu0 0.0
        %1141 = vmatprep.subr.mxu0 0.0
        %1142 = vmatpush1.msra.mxu0 0.0
        %1143 = vmatprep.subr.mxu0 0.0
        %1144 = vmatpush1.msra.mxu0 0.0
        %1145 = vmatprep.subr.mxu0 0.0
        %1146 = vmatpush1.msra.mxu0 0.0
        %1147 = vmatprep.subr.mxu0 0.0
        %1148 = vmatpush1.msra.mxu0 0.0
        %1149 = vmatprep.subr.mxu0 0.0
        %1150 = vmatpush1.msra.mxu0 0.0
        %1151 = vmatprep.subr.mxu0 0.0
        %1152 = vmatpush1.msra.mxu0 0.0
        %1153 = vmatprep.subr.mxu0 0.0
        %1154 = vmatpush1.msra.mxu0 0.0
        %1155 = vmatprep.subr.mxu0 0.0
        %1156 = vmatpush1.msra.mxu0 0.0
        %1157 = vmatprep.subr.mxu0 0.0
        %1158 = vmatpush1.msra.mxu0 0.0
        %1159 = vmatprep.subr.mxu0 0.0
        %1160 = vmatpush1.msra.mxu0 0.0
        %1161 = vmatprep.subr.mxu0 0.0
        %1162 = vmatpush1.msra.mxu0 0.0
        %1163 = vmatprep.subr.mxu0 0.0
        %1164 = vmatpush1.msra.mxu0 0.0
        %1165 = vmatprep.subr.mxu0 0.0
        %1166 = vmatpush1.msra.mxu0 0.0
        %1167 = vmatprep.subr.mxu0 0.0
        %1168 = vmatpush1.msra.mxu0 0.0
        %1169 = vmatprep.subr.mxu0 0.0
        %1170 = vmatpush1.msra.mxu0 0.0
        %1171 = vmatprep.subr.mxu0 0.0
        %1172 = vmatpush1.msra.mxu0 0.0
        %1173 = vmatprep.subr.mxu0 0.0
        %1174 = vmatpush1.msra.mxu0 0.0
        %1175 = vmatprep.subr.mxu0 0.0
        %1176 = vmatpush1.msra.mxu0 0.0
        %1177 = vmatprep.subr.mxu0 0.0
        %1178 = vmatpush1.msra.mxu0 0.0
        %1179 = vmatprep.subr.mxu0 0.0
        %1180 = vmatpush1.msra.mxu0 0.0
        %1181 = vmatprep.subr.mxu0 0.0
        %1182 = vmatpush1.msra.mxu0 0.0
        %1183 = vmatprep.subr.mxu0 0.0
        %1184 = vmatpush1.msra.mxu0 0.0
        %1185 = vmatprep.subr.mxu0 0.0
        %1186 = vmatpush1.msra.mxu0 0.0
        %1187 = vmatprep.subr.mxu0 0.0
        %1188 = vmatpush1.msra.mxu0 0.0
        %1189 = vmatprep.subr.mxu0 0.0
        %1190 = vmatpush1.msra.mxu0 0.0
        %1191 = vmatprep.subr.mxu0 0.0
        %1192 = vmatpush1.msra.mxu0 0.0
        %1193 = vmatprep.subr.mxu0 0.0
        %1194 = vmatpush1.msra.mxu0 0.0
        %1195 = vmatprep.mubr.f32.mxu0 0.0
        %1196 = vmatmul.mubr.f32.gmra.mrb[0].mxu0 %v1129
        %v1197 = vpop.f32.mrb[0].mxu0
        %v1198 = vadd.f32 0.0, %v1197
        %v1199 = vpop.f32.mrb[0].mxu0
        %1200 = vdwg.mxu0
        %v1202 = vsel %vm655, %v1053, 0
        %1204 = vmatprep.subr.mxu0 0.0
        %1205 = vmatpush1.msra.mxu0 %v717
        %1206 = vmatprep.subr.mxu0 0.0
        %1207 = vmatpush1.msra.mxu0 0.0
        %1208 = vmatprep.subr.mxu0 0.0
        %1209 = vmatpush1.msra.mxu0 0.0
        %1210 = vmatprep.subr.mxu0 0.0
        %1211 = vmatpush1.msra.mxu0 0.0
        %1212 = vmatprep.subr.mxu0 0.0
        %1213 = vmatpush1.msra.mxu0 0.0
        %1214 = vmatprep.subr.mxu0 0.0
        %1215 = vmatpush1.msra.mxu0 0.0
        %1216 = vmatprep.subr.mxu0 0.0
        %1217 = vmatpush1.msra.mxu0 0.0
        %1218 = vmatprep.subr.mxu0 0.0
        %1219 = vmatpush1.msra.mxu0 0.0
        %1220 = vmatprep.subr.mxu0 0.0
        %1221 = vmatpush1.msra.mxu0 0.0
        %1222 = vmatprep.subr.mxu0 0.0
        %1223 = vmatpush1.msra.mxu0 0.0
        %1224 = vmatprep.subr.mxu0 0.0
        %1225 = vmatpush1.msra.mxu0 0.0
        %1226 = vmatprep.subr.mxu0 0.0
        %1227 = vmatpush1.msra.mxu0 0.0
        %1228 = vmatprep.subr.mxu0 0.0
        %1229 = vmatpush1.msra.mxu0 0.0
        %1230 = vmatprep.subr.mxu0 0.0
        %1231 = vmatpush1.msra.mxu0 0.0
        %1232 = vmatprep.subr.mxu0 0.0
        %1233 = vmatpush1.msra.mxu0 0.0
        %1234 = vmatprep.subr.mxu0 0.0
        %1235 = vmatpush1.msra.mxu0 0.0
        %1236 = vmatprep.subr.mxu0 0.0
        %1237 = vmatpush1.msra.mxu0 0.0
        %1238 = vmatprep.subr.mxu0 0.0
        %1239 = vmatpush1.msra.mxu0 0.0
        %1240 = vmatprep.subr.mxu0 0.0
        %1241 = vmatpush1.msra.mxu0 0.0
        %1242 = vmatprep.subr.mxu0 0.0
        %1243 = vmatpush1.msra.mxu0 0.0
        %1244 = vmatprep.subr.mxu0 0.0
        %1245 = vmatpush1.msra.mxu0 0.0
        %1246 = vmatprep.subr.mxu0 0.0
        %1247 = vmatpush1.msra.mxu0 0.0
        %1248 = vmatprep.subr.mxu0 0.0
        %1249 = vmatpush1.msra.mxu0 0.0
        %1250 = vmatprep.subr.mxu0 0.0
        %1251 = vmatpush1.msra.mxu0 0.0
        %1252 = vmatprep.subr.mxu0 0.0
        %1253 = vmatpush1.msra.mxu0 0.0
        %1254 = vmatprep.subr.mxu0 0.0
        %1255 = vmatpush1.msra.mxu0 0.0
        %1256 = vmatprep.subr.mxu0 0.0
        %1257 = vmatpush1.msra.mxu0 0.0
        %1258 = vmatprep.subr.mxu0 0.0
        %1259 = vmatpush1.msra.mxu0 0.0
        %1260 = vmatprep.subr.mxu0 0.0
        %1261 = vmatpush1.msra.mxu0 0.0
        %1262 = vmatprep.subr.mxu0 0.0
        %1263 = vmatpush1.msra.mxu0 0.0
        %1264 = vmatprep.subr.mxu0 0.0
        %1265 = vmatpush1.msra.mxu0 0.0
        %1266 = vmatprep.subr.mxu0 0.0
        %1267 = vmatpush1.msra.mxu0 0.0
        %1268 = vmatprep.mubr.f32.mxu0 0.0
        %1269 = vmatmul.mubr.f32.gmra.mrb[0].mxu0 %v1202
        %v1270 = vpop.f32.mrb[0].mxu0
        %v1271 = vadd.f32 0.0, %v1270
        %v1272 = vpop.f32.mrb[0].mxu0
        %1273 = vdwg.mxu0
        %v1275 = vsel %vm655, %v1054, 0
        %1277 = vmatprep.subr.mxu0 0.0
        %1278 = vmatpush1.msra.mxu0 %v718
        %1279 = vmatprep.subr.mxu0 0.0
        %1280 = vmatpush1.msra.mxu0 0.0
        %1281 = vmatprep.subr.mxu0 0.0
        %1282 = vmatpush1.msra.mxu0 0.0
        %1283 = vmatprep.subr.mxu0 0.0
        %1284 = vmatpush1.msra.mxu0 0.0
        %1285 = vmatprep.subr.mxu0 0.0
        %1286 = vmatpush1.msra.mxu0 0.0
        %1287 = vmatprep.subr.mxu0 0.0
        %1288 = vmatpush1.msra.mxu0 0.0
        %1289 = vmatprep.subr.mxu0 0.0
        %1290 = vmatpush1.msra.mxu0 0.0
        %1291 = vmatprep.subr.mxu0 0.0
        %1292 = vmatpush1.msra.mxu0 0.0
        %1293 = vmatprep.subr.mxu0 0.0
        %1294 = vmatpush1.msra.mxu0 0.0
        %1295 = vmatprep.subr.mxu0 0.0
        %1296 = vmatpush1.msra.mxu0 0.0
        %1297 = vmatprep.subr.mxu0 0.0
        %1298 = vmatpush1.msra.mxu0 0.0
        %1299 = vmatprep.subr.mxu0 0.0
        %1300 = vmatpush1.msra.mxu0 0.0
        %1301 = vmatprep.subr.mxu0 0.0
        %1302 = vmatpush1.msra.mxu0 0.0
        %1303 = vmatprep.subr.mxu0 0.0
        %1304 = vmatpush1.msra.mxu0 0.0
        %1305 = vmatprep.subr.mxu0 0.0
        %1306 = vmatpush1.msra.mxu0 0.0
        %1307 = vmatprep.subr.mxu0 0.0
        %1308 = vmatpush1.msra.mxu0 0.0
        %1309 = vmatprep.subr.mxu0 0.0
        %1310 = vmatpush1.msra.mxu0 0.0
        %1311 = vmatprep.subr.mxu0 0.0
        %1312 = vmatpush1.msra.mxu0 0.0
        %1313 = vmatprep.subr.mxu0 0.0
        %1314 = vmatpush1.msra.mxu0 0.0
        %1315 = vmatprep.subr.mxu0 0.0
        %1316 = vmatpush1.msra.mxu0 0.0
        %1317 = vmatprep.subr.mxu0 0.0
        %1318 = vmatpush1.msra.mxu0 0.0
        %1319 = vmatprep.subr.mxu0 0.0
        %1320 = vmatpush1.msra.mxu0 0.0
        %1321 = vmatprep.subr.mxu0 0.0
        %1322 = vmatpush1.msra.mxu0 0.0
        %1323 = vmatprep.subr.mxu0 0.0
        %1324 = vmatpush1.msra.mxu0 0.0
        %1325 = vmatprep.subr.mxu0 0.0
        %1326 = vmatpush1.msra.mxu0 0.0
        %1327 = vmatprep.subr.mxu0 0.0
        %1328 = vmatpush1.msra.mxu0 0.0
        %1329 = vmatprep.subr.mxu0 0.0
        %1330 = vmatpush1.msra.mxu0 0.0
        %1331 = vmatprep.subr.mxu0 0.0
        %1332 = vmatpush1.msra.mxu0 0.0
        %1333 = vmatprep.subr.mxu0 0.0
        %1334 = vmatpush1.msra.mxu0 0.0
        %1335 = vmatprep.subr.mxu0 0.0
        %1336 = vmatpush1.msra.mxu0 0.0
        %1337 = vmatprep.subr.mxu0 0.0
        %1338 = vmatpush1.msra.mxu0 0.0
        %1339 = vmatprep.subr.mxu0 0.0
        %1340 = vmatpush1.msra.mxu0 0.0
        %1341 = vmatprep.mubr.f32.mxu0 0.0
        %1342 = vmatmul.mubr.f32.gmra.mrb[0].mxu0 %v1275
        %v1343 = vpop.f32.mrb[0].mxu0
        %v1344 = vadd.f32 0.0, %v1343
        %v1345 = vpop.f32.mrb[0].mxu0
        %1346 = vdwg.mxu0
        %1347 = vst.msk [vmem:[#allocation5] sm:$0x3] %vm1023, %v1125
        %1348 = vst.msk [vmem:[#allocation5 + $0x2] sm:$0x3] %vm1023, %v1198
        %1349 = vst.msk [vmem:[#allocation5 + $0x4] sm:$0x3] %vm1023, %v1271
        %1350 = vst.msk [vmem:[#allocation5 + $0x6] sm:$0x3] %vm1023, %v1344
        %v1351 = vld [vmem:[#allocation2 + $0x2] sm:$0x3]
        %v1352 = vld [vmem:[#allocation2 + $0xa] sm:$0x3]
        %v1353 = vld [vmem:[#allocation2 + $0x12] sm:$0x3]
        %v1354 = vld [vmem:[#allocation2 + $0x1a] sm:$0x3]
        %v1355 = vld [vmem:[#allocation3] sm:$0xff]
        %v1356 = vld [vmem:[#allocation3 + $0x8] sm:$0xff]
        %v1357 = vld [vmem:[#allocation3 + $0x10] sm:$0xff]
        %v1358 = vld [vmem:[#allocation3 + $0x18] sm:$0xff]
        %v1359 = vld [vmem:[#allocation4] sm:$0xff]
        %v1360 = vld [vmem:[#allocation4 + $0x8] sm:$0xff]
        %v1361 = vld [vmem:[#allocation4 + $0x10] sm:$0xff]
        %v1362 = vld [vmem:[#allocation4 + $0x18] sm:$0xff]
        %v1364 = vsel %vm655, %v1351, 0
        %v1367 = vsel %vm655, %v1355, 0
        %1369 = vmatprep.subr.mxu0 0.0
        %1370 = vmatpush1.xpose.msra.mxu0 %v1367
        %1371 = vmatprep.subr.mxu0 0.0
        %1372 = vmatpush1.xpose.msra.mxu0 0.0
        %1373 = vmatprep.subr.mxu0 0.0
        %1374 = vmatpush1.xpose.msra.mxu0 0.0
        %1375 = vmatprep.subr.mxu0 0.0
        %1376 = vmatpush1.xpose.msra.mxu0 0.0
        %1377 = vmatprep.subr.mxu0 0.0
        %1378 = vmatpush1.xpose.msra.mxu0 0.0
        %1379 = vmatprep.subr.mxu0 0.0
        %1380 = vmatpush1.xpose.msra.mxu0 0.0
        %1381 = vmatprep.subr.mxu0 0.0
        %1382 = vmatpush1.xpose.msra.mxu0 0.0
        %1383 = vmatprep.subr.mxu0 0.0
        %1384 = vmatpush1.xpose.msra.mxu0 0.0
        %1385 = vmatprep.subr.mxu0 0.0
        %1386 = vmatpush1.xpose.msra.mxu0 0.0
        %1387 = vmatprep.subr.mxu0 0.0
        %1388 = vmatpush1.xpose.msra.mxu0 0.0
        %1389 = vmatprep.subr.mxu0 0.0
        %1390 = vmatpush1.xpose.msra.mxu0 0.0
        %1391 = vmatprep.subr.mxu0 0.0
        %1392 = vmatpush1.xpose.msra.mxu0 0.0
        %1393 = vmatprep.subr.mxu0 0.0
        %1394 = vmatpush1.xpose.msra.mxu0 0.0
        %1395 = vmatprep.subr.mxu0 0.0
        %1396 = vmatpush1.xpose.msra.mxu0 0.0
        %1397 = vmatprep.subr.mxu0 0.0
        %1398 = vmatpush1.xpose.msra.mxu0 0.0
        %1399 = vmatprep.subr.mxu0 0.0
        %1400 = vmatpush1.xpose.msra.mxu0 0.0
        %1401 = vmatprep.subr.mxu0 0.0
        %1402 = vmatpush1.xpose.msra.mxu0 0.0
        %1403 = vmatprep.subr.mxu0 0.0
        %1404 = vmatpush1.xpose.msra.mxu0 0.0
        %1405 = vmatprep.subr.mxu0 0.0
        %1406 = vmatpush1.xpose.msra.mxu0 0.0
        %1407 = vmatprep.subr.mxu0 0.0
        %1408 = vmatpush1.xpose.msra.mxu0 0.0
        %1409 = vmatprep.subr.mxu0 0.0
        %1410 = vmatpush1.xpose.msra.mxu0 0.0
        %1411 = vmatprep.subr.mxu0 0.0
        %1412 = vmatpush1.xpose.msra.mxu0 0.0
        %1413 = vmatprep.subr.mxu0 0.0
        %1414 = vmatpush1.xpose.msra.mxu0 0.0
        %1415 = vmatprep.subr.mxu0 0.0
        %1416 = vmatpush1.xpose.msra.mxu0 0.0
        %1417 = vmatprep.subr.mxu0 0.0
        %1418 = vmatpush1.xpose.msra.mxu0 0.0
        %1419 = vmatprep.subr.mxu0 0.0
        %1420 = vmatpush1.xpose.msra.mxu0 0.0
        %1421 = vmatprep.subr.mxu0 0.0
        %1422 = vmatpush1.xpose.msra.mxu0 0.0
        %1423 = vmatprep.subr.mxu0 0.0
        %1424 = vmatpush1.xpose.msra.mxu0 0.0
        %1425 = vmatprep.subr.mxu0 0.0
        %1426 = vmatpush1.xpose.msra.mxu0 0.0
        %1427 = vmatprep.subr.mxu0 0.0
        %1428 = vmatpush1.xpose.msra.mxu0 0.0
        %1429 = vmatprep.subr.mxu0 0.0
        %1430 = vmatpush1.xpose.msra.mxu0 0.0
        %1431 = vmatprep.subr.mxu0 0.0
        %1432 = vmatpush1.xpose.msra.mxu0 0.0
        %1433 = vmatprep.mubr.f32.mxu0 0.0
        %1434 = vmatmul.mubr.f32.gmra.mrb[0].mxu0 %v1364
        %v1435 = vpop.f32.mrb[0].mxu0
        %v1436 = vadd.f32 0.0, %v1435
        %v1437 = vpop.f32.mrb[0].mxu0
        %1438 = vdwg.mxu0
        %v1440 = vsel %vm655, %v1352, 0
        %v1443 = vsel %vm655, %v1356, 0
        %1445 = vmatprep.subr.mxu0 0.0
        %1446 = vmatpush1.xpose.msra.mxu0 %v1443
        %1447 = vmatprep.subr.mxu0 0.0
        %1448 = vmatpush1.xpose.msra.mxu0 0.0
        %1449 = vmatprep.subr.mxu0 0.0
        %1450 = vmatpush1.xpose.msra.mxu0 0.0
        %1451 = vmatprep.subr.mxu0 0.0
        %1452 = vmatpush1.xpose.msra.mxu0 0.0
        %1453 = vmatprep.subr.mxu0 0.0
        %1454 = vmatpush1.xpose.msra.mxu0 0.0
        %1455 = vmatprep.subr.mxu0 0.0
        %1456 = vmatpush1.xpose.msra.mxu0 0.0
        %1457 = vmatprep.subr.mxu0 0.0
        %1458 = vmatpush1.xpose.msra.mxu0 0.0
        %1459 = vmatprep.subr.mxu0 0.0
        %1460 = vmatpush1.xpose.msra.mxu0 0.0
        %1461 = vmatprep.subr.mxu0 0.0
        %1462 = vmatpush1.xpose.msra.mxu0 0.0
        %1463 = vmatprep.subr.mxu0 0.0
        %1464 = vmatpush1.xpose.msra.mxu0 0.0
        %1465 = vmatprep.subr.mxu0 0.0
        %1466 = vmatpush1.xpose.msra.mxu0 0.0
        %1467 = vmatprep.subr.mxu0 0.0
        %1468 = vmatpush1.xpose.msra.mxu0 0.0
        %1469 = vmatprep.subr.mxu0 0.0
        %1470 = vmatpush1.xpose.msra.mxu0 0.0
        %1471 = vmatprep.subr.mxu0 0.0
        %1472 = vmatpush1.xpose.msra.mxu0 0.0
        %1473 = vmatprep.subr.mxu0 0.0
        %1474 = vmatpush1.xpose.msra.mxu0 0.0
        %1475 = vmatprep.subr.mxu0 0.0
        %1476 = vmatpush1.xpose.msra.mxu0 0.0
        %1477 = vmatprep.subr.mxu0 0.0
        %1478 = vmatpush1.xpose.msra.mxu0 0.0
        %1479 = vmatprep.subr.mxu0 0.0
        %1480 = vmatpush1.xpose.msra.mxu0 0.0
        %1481 = vmatprep.subr.mxu0 0.0
        %1482 = vmatpush1.xpose.msra.mxu0 0.0
        %1483 = vmatprep.subr.mxu0 0.0
        %1484 = vmatpush1.xpose.msra.mxu0 0.0
        %1485 = vmatprep.subr.mxu0 0.0
        %1486 = vmatpush1.xpose.msra.mxu0 0.0
        %1487 = vmatprep.subr.mxu0 0.0
        %1488 = vmatpush1.xpose.msra.mxu0 0.0
        %1489 = vmatprep.subr.mxu0 0.0
        %1490 = vmatpush1.xpose.msra.mxu0 0.0
        %1491 = vmatprep.subr.mxu0 0.0
        %1492 = vmatpush1.xpose.msra.mxu0 0.0
        %1493 = vmatprep.subr.mxu0 0.0
        %1494 = vmatpush1.xpose.msra.mxu0 0.0
        %1495 = vmatprep.subr.mxu0 0.0
        %1496 = vmatpush1.xpose.msra.mxu0 0.0
        %1497 = vmatprep.subr.mxu0 0.0
        %1498 = vmatpush1.xpose.msra.mxu0 0.0
        %1499 = vmatprep.subr.mxu0 0.0
        %1500 = vmatpush1.xpose.msra.mxu0 0.0
        %1501 = vmatprep.subr.mxu0 0.0
        %1502 = vmatpush1.xpose.msra.mxu0 0.0
        %1503 = vmatprep.subr.mxu0 0.0
        %1504 = vmatpush1.xpose.msra.mxu0 0.0
        %1505 = vmatprep.subr.mxu0 0.0
        %1506 = vmatpush1.xpose.msra.mxu0 0.0
        %1507 = vmatprep.subr.mxu0 0.0
        %1508 = vmatpush1.xpose.msra.mxu0 0.0
        %1509 = vmatprep.mubr.f32.mxu0 0.0
        %1510 = vmatmul.mubr.f32.gmra.mrb[0].mxu0 %v1440
        %v1511 = vpop.f32.mrb[0].mxu0
        %v1512 = vadd.f32 0.0, %v1511
        %v1513 = vpop.f32.mrb[0].mxu0
        %1514 = vdwg.mxu0
        %v1516 = vsel %vm655, %v1353, 0
        %v1519 = vsel %vm655, %v1357, 0
        %1521 = vmatprep.subr.mxu0 0.0
        %1522 = vmatpush1.xpose.msra.mxu0 %v1519
        %1523 = vmatprep.subr.mxu0 0.0
        %1524 = vmatpush1.xpose.msra.mxu0 0.0
        %1525 = vmatprep.subr.mxu0 0.0
        %1526 = vmatpush1.xpose.msra.mxu0 0.0
        %1527 = vmatprep.subr.mxu0 0.0
        %1528 = vmatpush1.xpose.msra.mxu0 0.0
        %1529 = vmatprep.subr.mxu0 0.0
        %1530 = vmatpush1.xpose.msra.mxu0 0.0
        %1531 = vmatprep.subr.mxu0 0.0
        %1532 = vmatpush1.xpose.msra.mxu0 0.0
        %1533 = vmatprep.subr.mxu0 0.0
        %1534 = vmatpush1.xpose.msra.mxu0 0.0
        %1535 = vmatprep.subr.mxu0 0.0
        %1536 = vmatpush1.xpose.msra.mxu0 0.0
        %1537 = vmatprep.subr.mxu0 0.0
        %1538 = vmatpush1.xpose.msra.mxu0 0.0
        %1539 = vmatprep.subr.mxu0 0.0
        %1540 = vmatpush1.xpose.msra.mxu0 0.0
        %1541 = vmatprep.subr.mxu0 0.0
        %1542 = vmatpush1.xpose.msra.mxu0 0.0
        %1543 = vmatprep.subr.mxu0 0.0
        %1544 = vmatpush1.xpose.msra.mxu0 0.0
        %1545 = vmatprep.subr.mxu0 0.0
        %1546 = vmatpush1.xpose.msra.mxu0 0.0
        %1547 = vmatprep.subr.mxu0 0.0
        %1548 = vmatpush1.xpose.msra.mxu0 0.0
        %1549 = vmatprep.subr.mxu0 0.0
        %1550 = vmatpush1.xpose.msra.mxu0 0.0
        %1551 = vmatprep.subr.mxu0 0.0
        %1552 = vmatpush1.xpose.msra.mxu0 0.0
        %1553 = vmatprep.subr.mxu0 0.0
        %1554 = vmatpush1.xpose.msra.mxu0 0.0
        %1555 = vmatprep.subr.mxu0 0.0
        %1556 = vmatpush1.xpose.msra.mxu0 0.0
        %1557 = vmatprep.subr.mxu0 0.0
        %1558 = vmatpush1.xpose.msra.mxu0 0.0
        %1559 = vmatprep.subr.mxu0 0.0
        %1560 = vmatpush1.xpose.msra.mxu0 0.0
        %1561 = vmatprep.subr.mxu0 0.0
        %1562 = vmatpush1.xpose.msra.mxu0 0.0
        %1563 = vmatprep.subr.mxu0 0.0
        %1564 = vmatpush1.xpose.msra.mxu0 0.0
        %1565 = vmatprep.subr.mxu0 0.0
        %1566 = vmatpush1.xpose.msra.mxu0 0.0
        %1567 = vmatprep.subr.mxu0 0.0
        %1568 = vmatpush1.xpose.msra.mxu0 0.0
        %1569 = vmatprep.subr.mxu0 0.0
        %1570 = vmatpush1.xpose.msra.mxu0 0.0
        %1571 = vmatprep.subr.mxu0 0.0
        %1572 = vmatpush1.xpose.msra.mxu0 0.0
        %1573 = vmatprep.subr.mxu0 0.0
        %1574 = vmatpush1.xpose.msra.mxu0 0.0
        %1575 = vmatprep.subr.mxu0 0.0
        %1576 = vmatpush1.xpose.msra.mxu0 0.0
        %1577 = vmatprep.subr.mxu0 0.0
        %1578 = vmatpush1.xpose.msra.mxu0 0.0
        %1579 = vmatprep.subr.mxu0 0.0
        %1580 = vmatpush1.xpose.msra.mxu0 0.0
        %1581 = vmatprep.subr.mxu0 0.0
        %1582 = vmatpush1.xpose.msra.mxu0 0.0
        %1583 = vmatprep.subr.mxu0 0.0
        %1584 = vmatpush1.xpose.msra.mxu0 0.0
        %1585 = vmatprep.mubr.f32.mxu0 0.0
        %1586 = vmatmul.mubr.f32.gmra.mrb[0].mxu0 %v1516
        %v1587 = vpop.f32.mrb[0].mxu0
        %v1588 = vadd.f32 0.0, %v1587
        %v1589 = vpop.f32.mrb[0].mxu0
        %1590 = vdwg.mxu0
        %v1592 = vsel %vm655, %v1354, 0
        %v1595 = vsel %vm655, %v1358, 0
        %1597 = vmatprep.subr.mxu0 0.0
        %1598 = vmatpush1.xpose.msra.mxu0 %v1595
        %1599 = vmatprep.subr.mxu0 0.0
        %1600 = vmatpush1.xpose.msra.mxu0 0.0
        %1601 = vmatprep.subr.mxu0 0.0
        %1602 = vmatpush1.xpose.msra.mxu0 0.0
        %1603 = vmatprep.subr.mxu0 0.0
        %1604 = vmatpush1.xpose.msra.mxu0 0.0
        %1605 = vmatprep.subr.mxu0 0.0
        %1606 = vmatpush1.xpose.msra.mxu0 0.0
        %1607 = vmatprep.subr.mxu0 0.0
        %1608 = vmatpush1.xpose.msra.mxu0 0.0
        %1609 = vmatprep.subr.mxu0 0.0
        %1610 = vmatpush1.xpose.msra.mxu0 0.0
        %1611 = vmatprep.subr.mxu0 0.0
        %1612 = vmatpush1.xpose.msra.mxu0 0.0
        %1613 = vmatprep.subr.mxu0 0.0
        %1614 = vmatpush1.xpose.msra.mxu0 0.0
        %1615 = vmatprep.subr.mxu0 0.0
        %1616 = vmatpush1.xpose.msra.mxu0 0.0
        %1617 = vmatprep.subr.mxu0 0.0
        %1618 = vmatpush1.xpose.msra.mxu0 0.0
        %1619 = vmatprep.subr.mxu0 0.0
        %1620 = vmatpush1.xpose.msra.mxu0 0.0
        %1621 = vmatprep.subr.mxu0 0.0
        %1622 = vmatpush1.xpose.msra.mxu0 0.0
        %1623 = vmatprep.subr.mxu0 0.0
        %1624 = vmatpush1.xpose.msra.mxu0 0.0
        %1625 = vmatprep.subr.mxu0 0.0
        %1626 = vmatpush1.xpose.msra.mxu0 0.0
        %1627 = vmatprep.subr.mxu0 0.0
        %1628 = vmatpush1.xpose.msra.mxu0 0.0
        %1629 = vmatprep.subr.mxu0 0.0
        %1630 = vmatpush1.xpose.msra.mxu0 0.0
        %1631 = vmatprep.subr.mxu0 0.0
        %1632 = vmatpush1.xpose.msra.mxu0 0.0
        %1633 = vmatprep.subr.mxu0 0.0
        %1634 = vmatpush1.xpose.msra.mxu0 0.0
        %1635 = vmatprep.subr.mxu0 0.0
        %1636 = vmatpush1.xpose.msra.mxu0 0.0
        %1637 = vmatprep.subr.mxu0 0.0
        %1638 = vmatpush1.xpose.msra.mxu0 0.0
        %1639 = vmatprep.subr.mxu0 0.0
        %1640 = vmatpush1.xpose.msra.mxu0 0.0
        %1641 = vmatprep.subr.mxu0 0.0
        %1642 = vmatpush1.xpose.msra.mxu0 0.0
        %1643 = vmatprep.subr.mxu0 0.0
        %1644 = vmatpush1.xpose.msra.mxu0 0.0
        %1645 = vmatprep.subr.mxu0 0.0
        %1646 = vmatpush1.xpose.msra.mxu0 0.0
        %1647 = vmatprep.subr.mxu0 0.0
        %1648 = vmatpush1.xpose.msra.mxu0 0.0
        %1649 = vmatprep.subr.mxu0 0.0
        %1650 = vmatpush1.xpose.msra.mxu0 0.0
        %1651 = vmatprep.subr.mxu0 0.0
        %1652 = vmatpush1.xpose.msra.mxu0 0.0
        %1653 = vmatprep.subr.mxu0 0.0
        %1654 = vmatpush1.xpose.msra.mxu0 0.0
        %1655 = vmatprep.subr.mxu0 0.0
        %1656 = vmatpush1.xpose.msra.mxu0 0.0
        %1657 = vmatprep.subr.mxu0 0.0
        %1658 = vmatpush1.xpose.msra.mxu0 0.0
        %1659 = vmatprep.subr.mxu0 0.0
        %1660 = vmatpush1.xpose.msra.mxu0 0.0
        %1661 = vmatprep.mubr.f32.mxu0 0.0
        %1662 = vmatmul.mubr.f32.gmra.mrb[0].mxu0 %v1592
        %v1663 = vpop.f32.mrb[0].mxu0
        %v1664 = vadd.f32 0.0, %v1663
        %v1665 = vpop.f32.mrb[0].mxu0
        %1666 = vdwg.mxu0
        %v1667 = vsel %vm1023, %v1436, -inf
        %v1668 = vsel %vm1023, %v1512, -inf
        %v1669 = vsel %vm1023, %v1588, -inf
        %v1670 = vsel %vm1023, %v1664, -inf
        %v1671 = vmax.f32 %v1667, %v1668
        %v1672 = vmax.f32 %v1669, %v1670
        %v1673 = vmax.f32 %v1671, %v1672
        %v1674 = vsub.f32 %v1436, %v1673
        %v1675 = vsub.f32 %v1512, %v1673
        %v1676 = vsub.f32 %v1588, %v1673
        %v1677 = vsub.f32 %v1664, %v1673
        %v1678 = vmul.f32 %v1674, 1.442695
        %v1679 = vpow.pop %v1678
        %v1680 = vmul.f32 %v1675, 1.442695
        %v1681 = vpow.pop %v1680
        %v1682 = vmul.f32 %v1676, 1.442695
        %v1683 = vpow.pop %v1682
        %v1684 = vmul.f32 %v1677, 1.442695
        %v1685 = vpow.pop %v1684
        %v1686 = vsel %vm1023, %v1679, 0.0
        %v1687 = vsel %vm1023, %v1681, 0.0
        %v1688 = vadd.f32 %v1686, %v1687
        %v1689 = vsel %vm1023, %v1683, 0.0
        %v1690 = vadd.f32 %v1688, %v1689
        %v1691 = vsel %vm1023, %v1685, 0.0
        %v1692 = vadd.f32 %v1690, %v1691
        %v1693 = vrcp.pop %v1692
        %v1694 = vmul.f32 %v1679, %v1693
        %v1695 = vmul.f32 %v1681, %v1693
        %v1696 = vmul.f32 %v1683, %v1693
        %v1697 = vmul.f32 %v1685, %v1693
        %v1699 = vsel %vm655, %v1694, 0
        %1701 = vmatprep.subr.mxu0 0.0
        %1702 = vmatpush1.msra.mxu0 %v1359
        %1703 = vmatprep.subr.mxu0 0.0
        %1704 = vmatpush1.msra.mxu0 0.0
        %1705 = vmatprep.subr.mxu0 0.0
        %1706 = vmatpush1.msra.mxu0 0.0
        %1707 = vmatprep.subr.mxu0 0.0
        %1708 = vmatpush1.msra.mxu0 0.0
        %1709 = vmatprep.subr.mxu0 0.0
        %1710 = vmatpush1.msra.mxu0 0.0
        %1711 = vmatprep.subr.mxu0 0.0
        %1712 = vmatpush1.msra.mxu0 0.0
        %1713 = vmatprep.subr.mxu0 0.0
        %1714 = vmatpush1.msra.mxu0 0.0
        %1715 = vmatprep.subr.mxu0 0.0
        %1716 = vmatpush1.msra.mxu0 0.0
        %1717 = vmatprep.subr.mxu0 0.0
        %1718 = vmatpush1.msra.mxu0 0.0
        %1719 = vmatprep.subr.mxu0 0.0
        %1720 = vmatpush1.msra.mxu0 0.0
        %1721 = vmatprep.subr.mxu0 0.0
        %1722 = vmatpush1.msra.mxu0 0.0
        %1723 = vmatprep.subr.mxu0 0.0
        %1724 = vmatpush1.msra.mxu0 0.0
        %1725 = vmatprep.subr.mxu0 0.0
        %1726 = vmatpush1.msra.mxu0 0.0
        %1727 = vmatprep.subr.mxu0 0.0
        %1728 = vmatpush1.msra.mxu0 0.0
        %1729 = vmatprep.subr.mxu0 0.0
        %1730 = vmatpush1.msra.mxu0 0.0
        %1731 = vmatprep.subr.mxu0 0.0
        %1732 = vmatpush1.msra.mxu0 0.0
        %1733 = vmatprep.subr.mxu0 0.0
        %1734 = vmatpush1.msra.mxu0 0.0
        %1735 = vmatprep.subr.mxu0 0.0
        %1736 = vmatpush1.msra.mxu0 0.0
        %1737 = vmatprep.subr.mxu0 0.0
        %1738 = vmatpush1.msra.mxu0 0.0
        %1739 = vmatprep.subr.mxu0 0.0
        %1740 = vmatpush1.msra.mxu0 0.0
        %1741 = vmatprep.subr.mxu0 0.0
        %1742 = vmatpush1.msra.mxu0 0.0
        %1743 = vmatprep.subr.mxu0 0.0
        %1744 = vmatpush1.msra.mxu0 0.0
        %1745 = vmatprep.subr.mxu0 0.0
        %1746 = vmatpush1.msra.mxu0 0.0
        %1747 = vmatprep.subr.mxu0 0.0
        %1748 = vmatpush1.msra.mxu0 0.0
        %1749 = vmatprep.subr.mxu0 0.0
        %1750 = vmatpush1.msra.mxu0 0.0
        %1751 = vmatprep.subr.mxu0 0.0
        %1752 = vmatpush1.msra.mxu0 0.0
        %1753 = vmatprep.subr.mxu0 0.0
        %1754 = vmatpush1.msra.mxu0 0.0
        %1755 = vmatprep.subr.mxu0 0.0
        %1756 = vmatpush1.msra.mxu0 0.0
        %1757 = vmatprep.subr.mxu0 0.0
        %1758 = vmatpush1.msra.mxu0 0.0
        %1759 = vmatprep.subr.mxu0 0.0
        %1760 = vmatpush1.msra.mxu0 0.0
        %1761 = vmatprep.subr.mxu0 0.0
        %1762 = vmatpush1.msra.mxu0 0.0
        %1763 = vmatprep.subr.mxu0 0.0
        %1764 = vmatpush1.msra.mxu0 0.0
        %1765 = vmatprep.mubr.f32.mxu0 0.0
        %1766 = vmatmul.mubr.f32.gmra.mrb[0].mxu0 %v1699
        %v1767 = vpop.f32.mrb[0].mxu0
        %v1768 = vadd.f32 0.0, %v1767
        %v1769 = vpop.f32.mrb[0].mxu0
        %1770 = vdwg.mxu0
        %v1772 = vsel %vm655, %v1695, 0
        %1774 = vmatprep.subr.mxu0 0.0
        %1775 = vmatpush1.msra.mxu0 %v1360
        %1776 = vmatprep.subr.mxu0 0.0
        %1777 = vmatpush1.msra.mxu0 0.0
        %1778 = vmatprep.subr.mxu0 0.0
        %1779 = vmatpush1.msra.mxu0 0.0
        %1780 = vmatprep.subr.mxu0 0.0
        %1781 = vmatpush1.msra.mxu0 0.0
        %1782 = vmatprep.subr.mxu0 0.0
        %1783 = vmatpush1.msra.mxu0 0.0
        %1784 = vmatprep.subr.mxu0 0.0
        %1785 = vmatpush1.msra.mxu0 0.0
        %1786 = vmatprep.subr.mxu0 0.0
        %1787 = vmatpush1.msra.mxu0 0.0
        %1788 = vmatprep.subr.mxu0 0.0
        %1789 = vmatpush1.msra.mxu0 0.0
        %1790 = vmatprep.subr.mxu0 0.0
        %1791 = vmatpush1.msra.mxu0 0.0
        %1792 = vmatprep.subr.mxu0 0.0
        %1793 = vmatpush1.msra.mxu0 0.0
        %1794 = vmatprep.subr.mxu0 0.0
        %1795 = vmatpush1.msra.mxu0 0.0
        %1796 = vmatprep.subr.mxu0 0.0
        %1797 = vmatpush1.msra.mxu0 0.0
        %1798 = vmatprep.subr.mxu0 0.0
        %1799 = vmatpush1.msra.mxu0 0.0
        %1800 = vmatprep.subr.mxu0 0.0
        %1801 = vmatpush1.msra.mxu0 0.0
        %1802 = vmatprep.subr.mxu0 0.0
        %1803 = vmatpush1.msra.mxu0 0.0
        %1804 = vmatprep.subr.mxu0 0.0
        %1805 = vmatpush1.msra.mxu0 0.0
        %1806 = vmatprep.subr.mxu0 0.0
        %1807 = vmatpush1.msra.mxu0 0.0
        %1808 = vmatprep.subr.mxu0 0.0
        %1809 = vmatpush1.msra.mxu0 0.0
        %1810 = vmatprep.subr.mxu0 0.0
        %1811 = vmatpush1.msra.mxu0 0.0
        %1812 = vmatprep.subr.mxu0 0.0
        %1813 = vmatpush1.msra.mxu0 0.0
        %1814 = vmatprep.subr.mxu0 0.0
        %1815 = vmatpush1.msra.mxu0 0.0
        %1816 = vmatprep.subr.mxu0 0.0
        %1817 = vmatpush1.msra.mxu0 0.0
        %1818 = vmatprep.subr.mxu0 0.0
        %1819 = vmatpush1.msra.mxu0 0.0
        %1820 = vmatprep.subr.mxu0 0.0
        %1821 = vmatpush1.msra.mxu0 0.0
        %1822 = vmatprep.subr.mxu0 0.0
        %1823 = vmatpush1.msra.mxu0 0.0
        %1824 = vmatprep.subr.mxu0 0.0
        %1825 = vmatpush1.msra.mxu0 0.0
        %1826 = vmatprep.subr.mxu0 0.0
        %1827 = vmatpush1.msra.mxu0 0.0
        %1828 = vmatprep.subr.mxu0 0.0
        %1829 = vmatpush1.msra.mxu0 0.0
        %1830 = vmatprep.subr.mxu0 0.0
        %1831 = vmatpush1.msra.mxu0 0.0
        %1832 = vmatprep.subr.mxu0 0.0
        %1833 = vmatpush1.msra.mxu0 0.0
        %1834 = vmatprep.subr.mxu0 0.0
        %1835 = vmatpush1.msra.mxu0 0.0
        %1836 = vmatprep.subr.mxu0 0.0
        %1837 = vmatpush1.msra.mxu0 0.0
        %1838 = vmatprep.mubr.f32.mxu0 0.0
        %1839 = vmatmul.mubr.f32.gmra.mrb[0].mxu0 %v1772
        %v1840 = vpop.f32.mrb[0].mxu0
        %v1841 = vadd.f32 0.0, %v1840
        %v1842 = vpop.f32.mrb[0].mxu0
        %1843 = vdwg.mxu0
        %v1845 = vsel %vm655, %v1696, 0
        %1847 = vmatprep.subr.mxu0 0.0
        %1848 = vmatpush1.msra.mxu0 %v1361
        %1849 = vmatprep.subr.mxu0 0.0
        %1850 = vmatpush1.msra.mxu0 0.0
        %1851 = vmatprep.subr.mxu0 0.0
        %1852 = vmatpush1.msra.mxu0 0.0
        %1853 = vmatprep.subr.mxu0 0.0
        %1854 = vmatpush1.msra.mxu0 0.0
        %1855 = vmatprep.subr.mxu0 0.0
        %1856 = vmatpush1.msra.mxu0 0.0
        %1857 = vmatprep.subr.mxu0 0.0
        %1858 = vmatpush1.msra.mxu0 0.0
        %1859 = vmatprep.subr.mxu0 0.0
        %1860 = vmatpush1.msra.mxu0 0.0
        %1861 = vmatprep.subr.mxu0 0.0
        %1862 = vmatpush1.msra.mxu0 0.0
        %1863 = vmatprep.subr.mxu0 0.0
        %1864 = vmatpush1.msra.mxu0 0.0
        %1865 = vmatprep.subr.mxu0 0.0
        %1866 = vmatpush1.msra.mxu0 0.0
        %1867 = vmatprep.subr.mxu0 0.0
        %1868 = vmatpush1.msra.mxu0 0.0
        %1869 = vmatprep.subr.mxu0 0.0
        %1870 = vmatpush1.msra.mxu0 0.0
        %1871 = vmatprep.subr.mxu0 0.0
        %1872 = vmatpush1.msra.mxu0 0.0
        %1873 = vmatprep.subr.mxu0 0.0
        %1874 = vmatpush1.msra.mxu0 0.0
        %1875 = vmatprep.subr.mxu0 0.0
        %1876 = vmatpush1.msra.mxu0 0.0
        %1877 = vmatprep.subr.mxu0 0.0
        %1878 = vmatpush1.msra.mxu0 0.0
        %1879 = vmatprep.subr.mxu0 0.0
        %1880 = vmatpush1.msra.mxu0 0.0
        %1881 = vmatprep.subr.mxu0 0.0
        %1882 = vmatpush1.msra.mxu0 0.0
        %1883 = vmatprep.subr.mxu0 0.0
        %1884 = vmatpush1.msra.mxu0 0.0
        %1885 = vmatprep.subr.mxu0 0.0
        %1886 = vmatpush1.msra.mxu0 0.0
        %1887 = vmatprep.subr.mxu0 0.0
        %1888 = vmatpush1.msra.mxu0 0.0
        %1889 = vmatprep.subr.mxu0 0.0
        %1890 = vmatpush1.msra.mxu0 0.0
        %1891 = vmatprep.subr.mxu0 0.0
        %1892 = vmatpush1.msra.mxu0 0.0
        %1893 = vmatprep.subr.mxu0 0.0
        %1894 = vmatpush1.msra.mxu0 0.0
        %1895 = vmatprep.subr.mxu0 0.0
        %1896 = vmatpush1.msra.mxu0 0.0
        %1897 = vmatprep.subr.mxu0 0.0
        %1898 = vmatpush1.msra.mxu0 0.0
        %1899 = vmatprep.subr.mxu0 0.0
        %1900 = vmatpush1.msra.mxu0 0.0
        %1901 = vmatprep.subr.mxu0 0.0
        %1902 = vmatpush1.msra.mxu0 0.0
        %1903 = vmatprep.subr.mxu0 0.0
        %1904 = vmatpush1.msra.mxu0 0.0
        %1905 = vmatprep.subr.mxu0 0.0
        %1906 = vmatpush1.msra.mxu0 0.0
        %1907 = vmatprep.subr.mxu0 0.0
        %1908 = vmatpush1.msra.mxu0 0.0
        %1909 = vmatprep.subr.mxu0 0.0
        %1910 = vmatpush1.msra.mxu0 0.0
        %1911 = vmatprep.mubr.f32.mxu0 0.0
        %1912 = vmatmul.mubr.f32.gmra.mrb[0].mxu0 %v1845
        %v1913 = vpop.f32.mrb[0].mxu0
        %v1914 = vadd.f32 0.0, %v1913
        %v1915 = vpop.f32.mrb[0].mxu0
        %1916 = vdwg.mxu0
        %v1918 = vsel %vm655, %v1697, 0
        %1920 = vmatprep.subr.mxu0 0.0
        %1921 = vmatpush1.msra.mxu0 %v1362
        %1922 = vmatprep.subr.mxu0 0.0
        %1923 = vmatpush1.msra.mxu0 0.0
        %1924 = vmatprep.subr.mxu0 0.0
        %1925 = vmatpush1.msra.mxu0 0.0
        %1926 = vmatprep.subr.mxu0 0.0
        %1927 = vmatpush1.msra.mxu0 0.0
        %1928 = vmatprep.subr.mxu0 0.0
        %1929 = vmatpush1.msra.mxu0 0.0
        %1930 = vmatprep.subr.mxu0 0.0
        %1931 = vmatpush1.msra.mxu0 0.0
        %1932 = vmatprep.subr.mxu0 0.0
        %1933 = vmatpush1.msra.mxu0 0.0
        %1934 = vmatprep.subr.mxu0 0.0
        %1935 = vmatpush1.msra.mxu0 0.0
        %1936 = vmatprep.subr.mxu0 0.0
        %1937 = vmatpush1.msra.mxu0 0.0
        %1938 = vmatprep.subr.mxu0 0.0
        %1939 = vmatpush1.msra.mxu0 0.0
        %1940 = vmatprep.subr.mxu0 0.0
        %1941 = vmatpush1.msra.mxu0 0.0
        %1942 = vmatprep.subr.mxu0 0.0
        %1943 = vmatpush1.msra.mxu0 0.0
        %1944 = vmatprep.subr.mxu0 0.0
        %1945 = vmatpush1.msra.mxu0 0.0
        %1946 = vmatprep.subr.mxu0 0.0
        %1947 = vmatpush1.msra.mxu0 0.0
        %1948 = vmatprep.subr.mxu0 0.0
        %1949 = vmatpush1.msra.mxu0 0.0
        %1950 = vmatprep.subr.mxu0 0.0
        %1951 = vmatpush1.msra.mxu0 0.0
        %1952 = vmatprep.subr.mxu0 0.0
        %1953 = vmatpush1.msra.mxu0 0.0
        %1954 = vmatprep.subr.mxu0 0.0
        %1955 = vmatpush1.msra.mxu0 0.0
        %1956 = vmatprep.subr.mxu0 0.0
        %1957 = vmatpush1.msra.mxu0 0.0
        %1958 = vmatprep.subr.mxu0 0.0
        %1959 = vmatpush1.msra.mxu0 0.0
        %1960 = vmatprep.subr.mxu0 0.0
        %1961 = vmatpush1.msra.mxu0 0.0
        %1962 = vmatprep.subr.mxu0 0.0
        %1963 = vmatpush1.msra.mxu0 0.0
        %1964 = vmatprep.subr.mxu0 0.0
        %1965 = vmatpush1.msra.mxu0 0.0
        %1966 = vmatprep.subr.mxu0 0.0
        %1967 = vmatpush1.msra.mxu0 0.0
        %1968 = vmatprep.subr.mxu0 0.0
        %1969 = vmatpush1.msra.mxu0 0.0
        %1970 = vmatprep.subr.mxu0 0.0
        %1971 = vmatpush1.msra.mxu0 0.0
        %1972 = vmatprep.subr.mxu0 0.0
        %1973 = vmatpush1.msra.mxu0 0.0
        %1974 = vmatprep.subr.mxu0 0.0
        %1975 = vmatpush1.msra.mxu0 0.0
        %1976 = vmatprep.subr.mxu0 0.0
        %1977 = vmatpush1.msra.mxu0 0.0
        %1978 = vmatprep.subr.mxu0 0.0
        %1979 = vmatpush1.msra.mxu0 0.0
        %1980 = vmatprep.subr.mxu0 0.0
        %1981 = vmatpush1.msra.mxu0 0.0
        %1982 = vmatprep.subr.mxu0 0.0
        %1983 = vmatpush1.msra.mxu0 0.0
        %1984 = vmatprep.mubr.f32.mxu0 0.0
        %1985 = vmatmul.mubr.f32.gmra.mrb[0].mxu0 %v1918
        %v1986 = vpop.f32.mrb[0].mxu0
        %v1987 = vadd.f32 0.0, %v1986
        %v1988 = vpop.f32.mrb[0].mxu0
        %1989 = vdwg.mxu0
        %1994 = vrot.lane.b32.xlu0 %v1768, 8
        %v1995 = vpop.permute.xlu0 %1994
        %1996 = vrot.lane.b32.xlu0 %v1841, 8
        %v1997 = vpop.permute.xlu0 %1996
        %1998 = vrot.lane.b32.xlu0 %v1914, 8
        %v1999 = vpop.permute.xlu0 %1998
        %2000 = vrot.lane.b32.xlu0 %v1987, 8
        %v2001 = vpop.permute.xlu0 %2000
        %vm2006 = vcmask 123968
        %2007 = vst.msk [vmem:[#allocation5] sm:$0x3] %vm2006, %v1995
        %2008 = vst.msk [vmem:[#allocation5 + $0x2] sm:$0x3] %vm2006, %v1997
        %2009 = vst.msk [vmem:[#allocation5 + $0x4] sm:$0x3] %vm2006, %v1999
        %2010 = vst.msk [vmem:[#allocation5 + $0x6] sm:$0x3] %vm2006, %v2001
        %v2011 = vld [vmem:[#allocation2 + $0x4] sm:$0x3]
        %v2012 = vld [vmem:[#allocation2 + $0xc] sm:$0x3]
        %v2013 = vld [vmem:[#allocation2 + $0x14] sm:$0x3]
        %v2014 = vld [vmem:[#allocation2 + $0x1c] sm:$0x3]
        %v2015 = vld [vmem:[#allocation3] sm:$0xff]
        %v2016 = vld [vmem:[#allocation3 + $0x8] sm:$0xff]
        %v2017 = vld [vmem:[#allocation3 + $0x10] sm:$0xff]
        %v2018 = vld [vmem:[#allocation3 + $0x18] sm:$0xff]
        %v2019 = vld [vmem:[#allocation4] sm:$0xff]
        %v2020 = vld [vmem:[#allocation4 + $0x8] sm:$0xff]
        %v2021 = vld [vmem:[#allocation4 + $0x10] sm:$0xff]
        %v2022 = vld [vmem:[#allocation4 + $0x18] sm:$0xff]
        %v2024 = vsel %vm655, %v2011, 0
        %v2027 = vsel %vm655, %v2015, 0
        %2029 = vmatprep.subr.mxu0 0.0
        %2030 = vmatpush1.xpose.msra.mxu0 %v2027
        %2031 = vmatprep.subr.mxu0 0.0
        %2032 = vmatpush1.xpose.msra.mxu0 0.0
        %2033 = vmatprep.subr.mxu0 0.0
        %2034 = vmatpush1.xpose.msra.mxu0 0.0
        %2035 = vmatprep.subr.mxu0 0.0
        %2036 = vmatpush1.xpose.msra.mxu0 0.0
        %2037 = vmatprep.subr.mxu0 0.0
        %2038 = vmatpush1.xpose.msra.mxu0 0.0
        %2039 = vmatprep.subr.mxu0 0.0
        %2040 = vmatpush1.xpose.msra.mxu0 0.0
        %2041 = vmatprep.subr.mxu0 0.0
        %2042 = vmatpush1.xpose.msra.mxu0 0.0
        %2043 = vmatprep.subr.mxu0 0.0
        %2044 = vmatpush1.xpose.msra.mxu0 0.0
        %2045 = vmatprep.subr.mxu0 0.0
        %2046 = vmatpush1.xpose.msra.mxu0 0.0
        %2047 = vmatprep.subr.mxu0 0.0
        %2048 = vmatpush1.xpose.msra.mxu0 0.0
        %2049 = vmatprep.subr.mxu0 0.0
        %2050 = vmatpush1.xpose.msra.mxu0 0.0
        %2051 = vmatprep.subr.mxu0 0.0
        %2052 = vmatpush1.xpose.msra.mxu0 0.0
        %2053 = vmatprep.subr.mxu0 0.0
        %2054 = vmatpush1.xpose.msra.mxu0 0.0
        %2055 = vmatprep.subr.mxu0 0.0
        %2056 = vmatpush1.xpose.msra.mxu0 0.0
        %2057 = vmatprep.subr.mxu0 0.0
        %2058 = vmatpush1.xpose.msra.mxu0 0.0
        %2059 = vmatprep.subr.mxu0 0.0
        %2060 = vmatpush1.xpose.msra.mxu0 0.0
        %2061 = vmatprep.subr.mxu0 0.0
        %2062 = vmatpush1.xpose.msra.mxu0 0.0
        %2063 = vmatprep.subr.mxu0 0.0
        %2064 = vmatpush1.xpose.msra.mxu0 0.0
        %2065 = vmatprep.subr.mxu0 0.0
        %2066 = vmatpush1.xpose.msra.mxu0 0.0
        %2067 = vmatprep.subr.mxu0 0.0
        %2068 = vmatpush1.xpose.msra.mxu0 0.0
        %2069 = vmatprep.subr.mxu0 0.0
        %2070 = vmatpush1.xpose.msra.mxu0 0.0
        %2071 = vmatprep.subr.mxu0 0.0
        %2072 = vmatpush1.xpose.msra.mxu0 0.0
        %2073 = vmatprep.subr.mxu0 0.0
        %2074 = vmatpush1.xpose.msra.mxu0 0.0
        %2075 = vmatprep.subr.mxu0 0.0
        %2076 = vmatpush1.xpose.msra.mxu0 0.0
        %2077 = vmatprep.subr.mxu0 0.0
        %2078 = vmatpush1.xpose.msra.mxu0 0.0
        %2079 = vmatprep.subr.mxu0 0.0
        %2080 = vmatpush1.xpose.msra.mxu0 0.0
        %2081 = vmatprep.subr.mxu0 0.0
        %2082 = vmatpush1.xpose.msra.mxu0 0.0
        %2083 = vmatprep.subr.mxu0 0.0
        %2084 = vmatpush1.xpose.msra.mxu0 0.0
        %2085 = vmatprep.subr.mxu0 0.0
        %2086 = vmatpush1.xpose.msra.mxu0 0.0
        %2087 = vmatprep.subr.mxu0 0.0
        %2088 = vmatpush1.xpose.msra.mxu0 0.0
        %2089 = vmatprep.subr.mxu0 0.0
        %2090 = vmatpush1.xpose.msra.mxu0 0.0
        %2091 = vmatprep.subr.mxu0 0.0
        %2092 = vmatpush1.xpose.msra.mxu0 0.0
        %2093 = vmatprep.mubr.f32.mxu0 0.0
        %2094 = vmatmul.mubr.f32.gmra.mrb[0].mxu0 %v2024
        %v2095 = vpop.f32.mrb[0].mxu0
        %v2096 = vadd.f32 0.0, %v2095
        %v2097 = vpop.f32.mrb[0].mxu0
        %2098 = vdwg.mxu0
        %v2100 = vsel %vm655, %v2012, 0
        %v2103 = vsel %vm655, %v2016, 0
        %2105 = vmatprep.subr.mxu0 0.0
        %2106 = vmatpush1.xpose.msra.mxu0 %v2103
        %2107 = vmatprep.subr.mxu0 0.0
        %2108 = vmatpush1.xpose.msra.mxu0 0.0
        %2109 = vmatprep.subr.mxu0 0.0
        %2110 = vmatpush1.xpose.msra.mxu0 0.0
        %2111 = vmatprep.subr.mxu0 0.0
        %2112 = vmatpush1.xpose.msra.mxu0 0.0
        %2113 = vmatprep.subr.mxu0 0.0
        %2114 = vmatpush1.xpose.msra.mxu0 0.0
        %2115 = vmatprep.subr.mxu0 0.0
        %2116 = vmatpush1.xpose.msra.mxu0 0.0
        %2117 = vmatprep.subr.mxu0 0.0
        %2118 = vmatpush1.xpose.msra.mxu0 0.0
        %2119 = vmatprep.subr.mxu0 0.0
        %2120 = vmatpush1.xpose.msra.mxu0 0.0
        %2121 = vmatprep.subr.mxu0 0.0
        %2122 = vmatpush1.xpose.msra.mxu0 0.0
        %2123 = vmatprep.subr.mxu0 0.0
        %2124 = vmatpush1.xpose.msra.mxu0 0.0
        %2125 = vmatprep.subr.mxu0 0.0
        %2126 = vmatpush1.xpose.msra.mxu0 0.0
        %2127 = vmatprep.subr.mxu0 0.0
        %2128 = vmatpush1.xpose.msra.mxu0 0.0
        %2129 = vmatprep.subr.mxu0 0.0
        %2130 = vmatpush1.xpose.msra.mxu0 0.0
        %2131 = vmatprep.subr.mxu0 0.0
        %2132 = vmatpush1.xpose.msra.mxu0 0.0
        %2133 = vmatprep.subr.mxu0 0.0
        %2134 = vmatpush1.xpose.msra.mxu0 0.0
        %2135 = vmatprep.subr.mxu0 0.0
        %2136 = vmatpush1.xpose.msra.mxu0 0.0
        %2137 = vmatprep.subr.mxu0 0.0
        %2138 = vmatpush1.xpose.msra.mxu0 0.0
        %2139 = vmatprep.subr.mxu0 0.0
        %2140 = vmatpush1.xpose.msra.mxu0 0.0
        %2141 = vmatprep.subr.mxu0 0.0
        %2142 = vmatpush1.xpose.msra.mxu0 0.0
        %2143 = vmatprep.subr.mxu0 0.0
        %2144 = vmatpush1.xpose.msra.mxu0 0.0
        %2145 = vmatprep.subr.mxu0 0.0
        %2146 = vmatpush1.xpose.msra.mxu0 0.0
        %2147 = vmatprep.subr.mxu0 0.0
        %2148 = vmatpush1.xpose.msra.mxu0 0.0
        %2149 = vmatprep.subr.mxu0 0.0
        %2150 = vmatpush1.xpose.msra.mxu0 0.0
        %2151 = vmatprep.subr.mxu0 0.0
        %2152 = vmatpush1.xpose.msra.mxu0 0.0
        %2153 = vmatprep.subr.mxu0 0.0
        %2154 = vmatpush1.xpose.msra.mxu0 0.0
        %2155 = vmatprep.subr.mxu0 0.0
        %2156 = vmatpush1.xpose.msra.mxu0 0.0
        %2157 = vmatprep.subr.mxu0 0.0
        %2158 = vmatpush1.xpose.msra.mxu0 0.0
        %2159 = vmatprep.subr.mxu0 0.0
        %2160 = vmatpush1.xpose.msra.mxu0 0.0
        %2161 = vmatprep.subr.mxu0 0.0
        %2162 = vmatpush1.xpose.msra.mxu0 0.0
        %2163 = vmatprep.subr.mxu0 0.0
        %2164 = vmatpush1.xpose.msra.mxu0 0.0
        %2165 = vmatprep.subr.mxu0 0.0
        %2166 = vmatpush1.xpose.msra.mxu0 0.0
        %2167 = vmatprep.subr.mxu0 0.0
        %2168 = vmatpush1.xpose.msra.mxu0 0.0
        %2169 = vmatprep.mubr.f32.mxu0 0.0
        %2170 = vmatmul.mubr.f32.gmra.mrb[0].mxu0 %v2100
        %v2171 = vpop.f32.mrb[0].mxu0
        %v2172 = vadd.f32 0.0, %v2171
        %v2173 = vpop.f32.mrb[0].mxu0
        %2174 = vdwg.mxu0
        %v2176 = vsel %vm655, %v2013, 0
        %v2179 = vsel %vm655, %v2017, 0
        %2181 = vmatprep.subr.mxu0 0.0
        %2182 = vmatpush1.xpose.msra.mxu0 %v2179
        %2183 = vmatprep.subr.mxu0 0.0
        %2184 = vmatpush1.xpose.msra.mxu0 0.0
        %2185 = vmatprep.subr.mxu0 0.0
        %2186 = vmatpush1.xpose.msra.mxu0 0.0
        %2187 = vmatprep.subr.mxu0 0.0
        %2188 = vmatpush1.xpose.msra.mxu0 0.0
        %2189 = vmatprep.subr.mxu0 0.0
        %2190 = vmatpush1.xpose.msra.mxu0 0.0
        %2191 = vmatprep.subr.mxu0 0.0
        %2192 = vmatpush1.xpose.msra.mxu0 0.0
        %2193 = vmatprep.subr.mxu0 0.0
        %2194 = vmatpush1.xpose.msra.mxu0 0.0
        %2195 = vmatprep.subr.mxu0 0.0
        %2196 = vmatpush1.xpose.msra.mxu0 0.0
        %2197 = vmatprep.subr.mxu0 0.0
        %2198 = vmatpush1.xpose.msra.mxu0 0.0
        %2199 = vmatprep.subr.mxu0 0.0
        %2200 = vmatpush1.xpose.msra.mxu0 0.0
        %2201 = vmatprep.subr.mxu0 0.0
        %2202 = vmatpush1.xpose.msra.mxu0 0.0
        %2203 = vmatprep.subr.mxu0 0.0
        %2204 = vmatpush1.xpose.msra.mxu0 0.0
        %2205 = vmatprep.subr.mxu0 0.0
        %2206 = vmatpush1.xpose.msra.mxu0 0.0
        %2207 = vmatprep.subr.mxu0 0.0
        %2208 = vmatpush1.xpose.msra.mxu0 0.0
        %2209 = vmatprep.subr.mxu0 0.0
        %2210 = vmatpush1.xpose.msra.mxu0 0.0
        %2211 = vmatprep.subr.mxu0 0.0
        %2212 = vmatpush1.xpose.msra.mxu0 0.0
        %2213 = vmatprep.subr.mxu0 0.0
        %2214 = vmatpush1.xpose.msra.mxu0 0.0
        %2215 = vmatprep.subr.mxu0 0.0
        %2216 = vmatpush1.xpose.msra.mxu0 0.0
        %2217 = vmatprep.subr.mxu0 0.0
        %2218 = vmatpush1.xpose.msra.mxu0 0.0
        %2219 = vmatprep.subr.mxu0 0.0
        %2220 = vmatpush1.xpose.msra.mxu0 0.0
        %2221 = vmatprep.subr.mxu0 0.0
        %2222 = vmatpush1.xpose.msra.mxu0 0.0
        %2223 = vmatprep.subr.mxu0 0.0
        %2224 = vmatpush1.xpose.msra.mxu0 0.0
        %2225 = vmatprep.subr.mxu0 0.0
        %2226 = vmatpush1.xpose.msra.mxu0 0.0
        %2227 = vmatprep.subr.mxu0 0.0
        %2228 = vmatpush1.xpose.msra.mxu0 0.0
        %2229 = vmatprep.subr.mxu0 0.0
        %2230 = vmatpush1.xpose.msra.mxu0 0.0
        %2231 = vmatprep.subr.mxu0 0.0
        %2232 = vmatpush1.xpose.msra.mxu0 0.0
        %2233 = vmatprep.subr.mxu0 0.0
        %2234 = vmatpush1.xpose.msra.mxu0 0.0
        %2235 = vmatprep.subr.mxu0 0.0
        %2236 = vmatpush1.xpose.msra.mxu0 0.0
        %2237 = vmatprep.subr.mxu0 0.0
        %2238 = vmatpush1.xpose.msra.mxu0 0.0
        %2239 = vmatprep.subr.mxu0 0.0
        %2240 = vmatpush1.xpose.msra.mxu0 0.0
        %2241 = vmatprep.subr.mxu0 0.0
        %2242 = vmatpush1.xpose.msra.mxu0 0.0
        %2243 = vmatprep.subr.mxu0 0.0
        %2244 = vmatpush1.xpose.msra.mxu0 0.0
        %2245 = vmatprep.mubr.f32.mxu0 0.0
        %2246 = vmatmul.mubr.f32.gmra.mrb[0].mxu0 %v2176
        %v2247 = vpop.f32.mrb[0].mxu0
        %v2248 = vadd.f32 0.0, %v2247
        %v2249 = vpop.f32.mrb[0].mxu0
        %2250 = vdwg.mxu0
        %v2252 = vsel %vm655, %v2014, 0
        %v2255 = vsel %vm655, %v2018, 0
        %2257 = vmatprep.subr.mxu0 0.0
        %2258 = vmatpush1.xpose.msra.mxu0 %v2255
        %2259 = vmatprep.subr.mxu0 0.0
        %2260 = vmatpush1.xpose.msra.mxu0 0.0
        %2261 = vmatprep.subr.mxu0 0.0
        %2262 = vmatpush1.xpose.msra.mxu0 0.0
        %2263 = vmatprep.subr.mxu0 0.0
        %2264 = vmatpush1.xpose.msra.mxu0 0.0
        %2265 = vmatprep.subr.mxu0 0.0
        %2266 = vmatpush1.xpose.msra.mxu0 0.0
        %2267 = vmatprep.subr.mxu0 0.0
        %2268 = vmatpush1.xpose.msra.mxu0 0.0
        %2269 = vmatprep.subr.mxu0 0.0
        %2270 = vmatpush1.xpose.msra.mxu0 0.0
        %2271 = vmatprep.subr.mxu0 0.0
        %2272 = vmatpush1.xpose.msra.mxu0 0.0
        %2273 = vmatprep.subr.mxu0 0.0
        %2274 = vmatpush1.xpose.msra.mxu0 0.0
        %2275 = vmatprep.subr.mxu0 0.0
        %2276 = vmatpush1.xpose.msra.mxu0 0.0
        %2277 = vmatprep.subr.mxu0 0.0
        %2278 = vmatpush1.xpose.msra.mxu0 0.0
        %2279 = vmatprep.subr.mxu0 0.0
        %2280 = vmatpush1.xpose.msra.mxu0 0.0
        %2281 = vmatprep.subr.mxu0 0.0
        %2282 = vmatpush1.xpose.msra.mxu0 0.0
        %2283 = vmatprep.subr.mxu0 0.0
        %2284 = vmatpush1.xpose.msra.mxu0 0.0
        %2285 = vmatprep.subr.mxu0 0.0
        %2286 = vmatpush1.xpose.msra.mxu0 0.0
        %2287 = vmatprep.subr.mxu0 0.0
        %2288 = vmatpush1.xpose.msra.mxu0 0.0
        %2289 = vmatprep.subr.mxu0 0.0
        %2290 = vmatpush1.xpose.msra.mxu0 0.0
        %2291 = vmatprep.subr.mxu0 0.0
        %2292 = vmatpush1.xpose.msra.mxu0 0.0
        %2293 = vmatprep.subr.mxu0 0.0
        %2294 = vmatpush1.xpose.msra.mxu0 0.0
        %2295 = vmatprep.subr.mxu0 0.0
        %2296 = vmatpush1.xpose.msra.mxu0 0.0
        %2297 = vmatprep.subr.mxu0 0.0
        %2298 = vmatpush1.xpose.msra.mxu0 0.0
        %2299 = vmatprep.subr.mxu0 0.0
        %2300 = vmatpush1.xpose.msra.mxu0 0.0
        %2301 = vmatprep.subr.mxu0 0.0
        %2302 = vmatpush1.xpose.msra.mxu0 0.0
        %2303 = vmatprep.subr.mxu0 0.0
        %2304 = vmatpush1.xpose.msra.mxu0 0.0
        %2305 = vmatprep.subr.mxu0 0.0
        %2306 = vmatpush1.xpose.msra.mxu0 0.0
        %2307 = vmatprep.subr.mxu0 0.0
        %2308 = vmatpush1.xpose.msra.mxu0 0.0
        %2309 = vmatprep.subr.mxu0 0.0
        %2310 = vmatpush1.xpose.msra.mxu0 0.0
        %2311 = vmatprep.subr.mxu0 0.0
        %2312 = vmatpush1.xpose.msra.mxu0 0.0
        %2313 = vmatprep.subr.mxu0 0.0
        %2314 = vmatpush1.xpose.msra.mxu0 0.0
        %2315 = vmatprep.subr.mxu0 0.0
        %2316 = vmatpush1.xpose.msra.mxu0 0.0
        %2317 = vmatprep.subr.mxu0 0.0
        %2318 = vmatpush1.xpose.msra.mxu0 0.0
        %2319 = vmatprep.subr.mxu0 0.0
        %2320 = vmatpush1.xpose.msra.mxu0 0.0
        %2321 = vmatprep.mubr.f32.mxu0 0.0
        %2322 = vmatmul.mubr.f32.gmra.mrb[0].mxu0 %v2252
        %v2323 = vpop.f32.mrb[0].mxu0
        %v2324 = vadd.f32 0.0, %v2323
        %v2325 = vpop.f32.mrb[0].mxu0
        %2326 = vdwg.mxu0
        %v2327 = vsel %vm1023, %v2096, -inf
        %v2328 = vsel %vm1023, %v2172, -inf
        %v2329 = vsel %vm1023, %v2248, -inf
        %v2330 = vsel %vm1023, %v2324, -inf
        %v2331 = vmax.f32 %v2327, %v2328
        %v2332 = vmax.f32 %v2329, %v2330
        %v2333 = vmax.f32 %v2331, %v2332
        %v2334 = vsub.f32 %v2096, %v2333
        %v2335 = vsub.f32 %v2172, %v2333
        %v2336 = vsub.f32 %v2248, %v2333
        %v2337 = vsub.f32 %v2324, %v2333
        %v2338 = vmul.f32 %v2334, 1.442695
        %v2339 = vpow.pop %v2338
        %v2340 = vmul.f32 %v2335, 1.442695
        %v2341 = vpow.pop %v2340
        %v2342 = vmul.f32 %v2336, 1.442695
        %v2343 = vpow.pop %v2342
        %v2344 = vmul.f32 %v2337, 1.442695
        %v2345 = vpow.pop %v2344
        %v2346 = vsel %vm1023, %v2339, 0.0
        %v2347 = vsel %vm1023, %v2341, 0.0
        %v2348 = vadd.f32 %v2346, %v2347
        %v2349 = vsel %vm1023, %v2343, 0.0
        %v2350 = vadd.f32 %v2348, %v2349
        %v2351 = vsel %vm1023, %v2345, 0.0
        %v2352 = vadd.f32 %v2350, %v2351
        %v2353 = vrcp.pop %v2352
        %v2354 = vmul.f32 %v2339, %v2353
        %v2355 = vmul.f32 %v2341, %v2353
        %v2356 = vmul.f32 %v2343, %v2353
        %v2357 = vmul.f32 %v2345, %v2353
        %v2359 = vsel %vm655, %v2354, 0
        %2361 = vmatprep.subr.mxu0 0.0
        %2362 = vmatpush1.msra.mxu0 %v2019
        %2363 = vmatprep.subr.mxu0 0.0
        %2364 = vmatpush1.msra.mxu0 0.0
        %2365 = vmatprep.subr.mxu0 0.0
        %2366 = vmatpush1.msra.mxu0 0.0
        %2367 = vmatprep.subr.mxu0 0.0
        %2368 = vmatpush1.msra.mxu0 0.0
        %2369 = vmatprep.subr.mxu0 0.0
        %2370 = vmatpush1.msra.mxu0 0.0
        %2371 = vmatprep.subr.mxu0 0.0
        %2372 = vmatpush1.msra.mxu0 0.0
        %2373 = vmatprep.subr.mxu0 0.0
        %2374 = vmatpush1.msra.mxu0 0.0
        %2375 = vmatprep.subr.mxu0 0.0
        %2376 = vmatpush1.msra.mxu0 0.0
        %2377 = vmatprep.subr.mxu0 0.0
        %2378 = vmatpush1.msra.mxu0 0.0
        %2379 = vmatprep.subr.mxu0 0.0
        %2380 = vmatpush1.msra.mxu0 0.0
        %2381 = vmatprep.subr.mxu0 0.0
        %2382 = vmatpush1.msra.mxu0 0.0
        %2383 = vmatprep.subr.mxu0 0.0
        %2384 = vmatpush1.msra.mxu0 0.0
        %2385 = vmatprep.subr.mxu0 0.0
        %2386 = vmatpush1.msra.mxu0 0.0
        %2387 = vmatprep.subr.mxu0 0.0
        %2388 = vmatpush1.msra.mxu0 0.0
        %2389 = vmatprep.subr.mxu0 0.0
        %2390 = vmatpush1.msra.mxu0 0.0
        %2391 = vmatprep.subr.mxu0 0.0
        %2392 = vmatpush1.msra.mxu0 0.0
        %2393 = vmatprep.subr.mxu0 0.0
        %2394 = vmatpush1.msra.mxu0 0.0
        %2395 = vmatprep.subr.mxu0 0.0
        %2396 = vmatpush1.msra.mxu0 0.0
        %2397 = vmatprep.subr.mxu0 0.0
        %2398 = vmatpush1.msra.mxu0 0.0
        %2399 = vmatprep.subr.mxu0 0.0
        %2400 = vmatpush1.msra.mxu0 0.0
        %2401 = vmatprep.subr.mxu0 0.0
        %2402 = vmatpush1.msra.mxu0 0.0
        %2403 = vmatprep.subr.mxu0 0.0
        %2404 = vmatpush1.msra.mxu0 0.0
        %2405 = vmatprep.subr.mxu0 0.0
        %2406 = vmatpush1.msra.mxu0 0.0
        %2407 = vmatprep.subr.mxu0 0.0
        %2408 = vmatpush1.msra.mxu0 0.0
        %2409 = vmatprep.subr.mxu0 0.0
        %2410 = vmatpush1.msra.mxu0 0.0
        %2411 = vmatprep.subr.mxu0 0.0
        %2412 = vmatpush1.msra.mxu0 0.0
        %2413 = vmatprep.subr.mxu0 0.0
        %2414 = vmatpush1.msra.mxu0 0.0
        %2415 = vmatprep.subr.mxu0 0.0
        %2416 = vmatpush1.msra.mxu0 0.0
        %2417 = vmatprep.subr.mxu0 0.0
        %2418 = vmatpush1.msra.mxu0 0.0
        %2419 = vmatprep.subr.mxu0 0.0
        %2420 = vmatpush1.msra.mxu0 0.0
        %2421 = vmatprep.subr.mxu0 0.0
        %2422 = vmatpush1.msra.mxu0 0.0
        %2423 = vmatprep.subr.mxu0 0.0
        %2424 = vmatpush1.msra.mxu0 0.0
        %2425 = vmatprep.mubr.f32.mxu0 0.0
        %2426 = vmatmul.mubr.f32.gmra.mrb[0].mxu0 %v2359
        %v2427 = vpop.f32.mrb[0].mxu0
        %v2428 = vadd.f32 0.0, %v2427
        %v2429 = vpop.f32.mrb[0].mxu0
        %2430 = vdwg.mxu0
        %v2432 = vsel %vm655, %v2355, 0
        %2434 = vmatprep.subr.mxu0 0.0
        %2435 = vmatpush1.msra.mxu0 %v2020
        %2436 = vmatprep.subr.mxu0 0.0
        %2437 = vmatpush1.msra.mxu0 0.0
        %2438 = vmatprep.subr.mxu0 0.0
        %2439 = vmatpush1.msra.mxu0 0.0
        %2440 = vmatprep.subr.mxu0 0.0
        %2441 = vmatpush1.msra.mxu0 0.0
        %2442 = vmatprep.subr.mxu0 0.0
        %2443 = vmatpush1.msra.mxu0 0.0
        %2444 = vmatprep.subr.mxu0 0.0
        %2445 = vmatpush1.msra.mxu0 0.0
        %2446 = vmatprep.subr.mxu0 0.0
        %2447 = vmatpush1.msra.mxu0 0.0
        %2448 = vmatprep.subr.mxu0 0.0
        %2449 = vmatpush1.msra.mxu0 0.0
        %2450 = vmatprep.subr.mxu0 0.0
        %2451 = vmatpush1.msra.mxu0 0.0
        %2452 = vmatprep.subr.mxu0 0.0
        %2453 = vmatpush1.msra.mxu0 0.0
        %2454 = vmatprep.subr.mxu0 0.0
        %2455 = vmatpush1.msra.mxu0 0.0
        %2456 = vmatprep.subr.mxu0 0.0
        %2457 = vmatpush1.msra.mxu0 0.0
        %2458 = vmatprep.subr.mxu0 0.0
        %2459 = vmatpush1.msra.mxu0 0.0
        %2460 = vmatprep.subr.mxu0 0.0
        %2461 = vmatpush1.msra.mxu0 0.0
        %2462 = vmatprep.subr.mxu0 0.0
        %2463 = vmatpush1.msra.mxu0 0.0
        %2464 = vmatprep.subr.mxu0 0.0
        %2465 = vmatpush1.msra.mxu0 0.0
        %2466 = vmatprep.subr.mxu0 0.0
        %2467 = vmatpush1.msra.mxu0 0.0
        %2468 = vmatprep.subr.mxu0 0.0
        %2469 = vmatpush1.msra.mxu0 0.0
        %2470 = vmatprep.subr.mxu0 0.0
        %2471 = vmatpush1.msra.mxu0 0.0
        %2472 = vmatprep.subr.mxu0 0.0
        %2473 = vmatpush1.msra.mxu0 0.0
        %2474 = vmatprep.subr.mxu0 0.0
        %2475 = vmatpush1.msra.mxu0 0.0
        %2476 = vmatprep.subr.mxu0 0.0
        %2477 = vmatpush1.msra.mxu0 0.0
        %2478 = vmatprep.subr.mxu0 0.0
        %2479 = vmatpush1.msra.mxu0 0.0
        %2480 = vmatprep.subr.mxu0 0.0
        %2481 = vmatpush1.msra.mxu0 0.0
        %2482 = vmatprep.subr.mxu0 0.0
        %2483 = vmatpush1.msra.mxu0 0.0
        %2484 = vmatprep.subr.mxu0 0.0
        %2485 = vmatpush1.msra.mxu0 0.0
        %2486 = vmatprep.subr.mxu0 0.0
        %2487 = vmatpush1.msra.mxu0 0.0
        %2488 = vmatprep.subr.mxu0 0.0
        %2489 = vmatpush1.msra.mxu0 0.0
        %2490 = vmatprep.subr.mxu0 0.0
        %2491 = vmatpush1.msra.mxu0 0.0
        %2492 = vmatprep.subr.mxu0 0.0
        %2493 = vmatpush1.msra.mxu0 0.0
        %2494 = vmatprep.subr.mxu0 0.0
        %2495 = vmatpush1.msra.mxu0 0.0
        %2496 = vmatprep.subr.mxu0 0.0
        %2497 = vmatpush1.msra.mxu0 0.0
        %2498 = vmatprep.mubr.f32.mxu0 0.0
        %2499 = vmatmul.mubr.f32.gmra.mrb[0].mxu0 %v2432
        %v2500 = vpop.f32.mrb[0].mxu0
        %v2501 = vadd.f32 0.0, %v2500
        %v2502 = vpop.f32.mrb[0].mxu0
        %2503 = vdwg.mxu0
        %v2505 = vsel %vm655, %v2356, 0
        %2507 = vmatprep.subr.mxu0 0.0
        %2508 = vmatpush1.msra.mxu0 %v2021
        %2509 = vmatprep.subr.mxu0 0.0
        %2510 = vmatpush1.msra.mxu0 0.0
        %2511 = vmatprep.subr.mxu0 0.0
        %2512 = vmatpush1.msra.mxu0 0.0
        %2513 = vmatprep.subr.mxu0 0.0
        %2514 = vmatpush1.msra.mxu0 0.0
        %2515 = vmatprep.subr.mxu0 0.0
        %2516 = vmatpush1.msra.mxu0 0.0
        %2517 = vmatprep.subr.mxu0 0.0
        %2518 = vmatpush1.msra.mxu0 0.0
        %2519 = vmatprep.subr.mxu0 0.0
        %2520 = vmatpush1.msra.mxu0 0.0
        %2521 = vmatprep.subr.mxu0 0.0
        %2522 = vmatpush1.msra.mxu0 0.0
        %2523 = vmatprep.subr.mxu0 0.0
        %2524 = vmatpush1.msra.mxu0 0.0
        %2525 = vmatprep.subr.mxu0 0.0
        %2526 = vmatpush1.msra.mxu0 0.0
        %2527 = vmatprep.subr.mxu0 0.0
        %2528 = vmatpush1.msra.mxu0 0.0
        %2529 = vmatprep.subr.mxu0 0.0
        %2530 = vmatpush1.msra.mxu0 0.0
        %2531 = vmatprep.subr.mxu0 0.0
        %2532 = vmatpush1.msra.mxu0 0.0
        %2533 = vmatprep.subr.mxu0 0.0
        %2534 = vmatpush1.msra.mxu0 0.0
        %2535 = vmatprep.subr.mxu0 0.0
        %2536 = vmatpush1.msra.mxu0 0.0
        %2537 = vmatprep.subr.mxu0 0.0
        %2538 = vmatpush1.msra.mxu0 0.0
        %2539 = vmatprep.subr.mxu0 0.0
        %2540 = vmatpush1.msra.mxu0 0.0
        %2541 = vmatprep.subr.mxu0 0.0
        %2542 = vmatpush1.msra.mxu0 0.0
        %2543 = vmatprep.subr.mxu0 0.0
        %2544 = vmatpush1.msra.mxu0 0.0
        %2545 = vmatprep.subr.mxu0 0.0
        %2546 = vmatpush1.msra.mxu0 0.0
        %2547 = vmatprep.subr.mxu0 0.0
        %2548 = vmatpush1.msra.mxu0 0.0
        %2549 = vmatprep.subr.mxu0 0.0
        %2550 = vmatpush1.msra.mxu0 0.0
        %2551 = vmatprep.subr.mxu0 0.0
        %2552 = vmatpush1.msra.mxu0 0.0
        %2553 = vmatprep.subr.mxu0 0.0
        %2554 = vmatpush1.msra.mxu0 0.0
        %2555 = vmatprep.subr.mxu0 0.0
        %2556 = vmatpush1.msra.mxu0 0.0
        %2557 = vmatprep.subr.mxu0 0.0
        %2558 = vmatpush1.msra.mxu0 0.0
        %2559 = vmatprep.subr.mxu0 0.0
        %2560 = vmatpush1.msra.mxu0 0.0
        %2561 = vmatprep.subr.mxu0 0.0
        %2562 = vmatpush1.msra.mxu0 0.0
        %2563 = vmatprep.subr.mxu0 0.0
        %2564 = vmatpush1.msra.mxu0 0.0
        %2565 = vmatprep.subr.mxu0 0.0
        %2566 = vmatpush1.msra.mxu0 0.0
        %2567 = vmatprep.subr.mxu0 0.0
        %2568 = vmatpush1.msra.mxu0 0.0
        %2569 = vmatprep.subr.mxu0 0.0
        %2570 = vmatpush1.msra.mxu0 0.0
        %2571 = vmatprep.mubr.f32.mxu0 0.0
        %2572 = vmatmul.mubr.f32.gmra.mrb[0].mxu0 %v2505
        %v2573 = vpop.f32.mrb[0].mxu0
        %v2574 = vadd.f32 0.0, %v2573
        %v2575 = vpop.f32.mrb[0].mxu0
        %2576 = vdwg.mxu0
        %v2578 = vsel %vm655, %v2357, 0
        %2580 = vmatprep.subr.mxu0 0.0
        %2581 = vmatpush1.msra.mxu0 %v2022
        %2582 = vmatprep.subr.mxu0 0.0
        %2583 = vmatpush1.msra.mxu0 0.0
        %2584 = vmatprep.subr.mxu0 0.0
        %2585 = vmatpush1.msra.mxu0 0.0
        %2586 = vmatprep.subr.mxu0 0.0
        %2587 = vmatpush1.msra.mxu0 0.0
        %2588 = vmatprep.subr.mxu0 0.0
        %2589 = vmatpush1.msra.mxu0 0.0
        %2590 = vmatprep.subr.mxu0 0.0
        %2591 = vmatpush1.msra.mxu0 0.0
        %2592 = vmatprep.subr.mxu0 0.0
        %2593 = vmatpush1.msra.mxu0 0.0
        %2594 = vmatprep.subr.mxu0 0.0
        %2595 = vmatpush1.msra.mxu0 0.0
        %2596 = vmatprep.subr.mxu0 0.0
        %2597 = vmatpush1.msra.mxu0 0.0
        %2598 = vmatprep.subr.mxu0 0.0
        %2599 = vmatpush1.msra.mxu0 0.0
        %2600 = vmatprep.subr.mxu0 0.0
        %2601 = vmatpush1.msra.mxu0 0.0
        %2602 = vmatprep.subr.mxu0 0.0
        %2603 = vmatpush1.msra.mxu0 0.0
        %2604 = vmatprep.subr.mxu0 0.0
        %2605 = vmatpush1.msra.mxu0 0.0
        %2606 = vmatprep.subr.mxu0 0.0
        %2607 = vmatpush1.msra.mxu0 0.0
        %2608 = vmatprep.subr.mxu0 0.0
        %2609 = vmatpush1.msra.mxu0 0.0
        %2610 = vmatprep.subr.mxu0 0.0
        %2611 = vmatpush1.msra.mxu0 0.0
        %2612 = vmatprep.subr.mxu0 0.0
        %2613 = vmatpush1.msra.mxu0 0.0
        %2614 = vmatprep.subr.mxu0 0.0
        %2615 = vmatpush1.msra.mxu0 0.0
        %2616 = vmatprep.subr.mxu0 0.0
        %2617 = vmatpush1.msra.mxu0 0.0
        %2618 = vmatprep.subr.mxu0 0.0
        %2619 = vmatpush1.msra.mxu0 0.0
        %2620 = vmatprep.subr.mxu0 0.0
        %2621 = vmatpush1.msra.mxu0 0.0
        %2622 = vmatprep.subr.mxu0 0.0
        %2623 = vmatpush1.msra.mxu0 0.0
        %2624 = vmatprep.subr.mxu0 0.0
        %2625 = vmatpush1.msra.mxu0 0.0
        %2626 = vmatprep.subr.mxu0 0.0
        %2627 = vmatpush1.msra.mxu0 0.0
        %2628 = vmatprep.subr.mxu0 0.0
        %2629 = vmatpush1.msra.mxu0 0.0
        %2630 = vmatprep.subr.mxu0 0.0
        %2631 = vmatpush1.msra.mxu0 0.0
        %2632 = vmatprep.subr.mxu0 0.0
        %2633 = vmatpush1.msra.mxu0 0.0
        %2634 = vmatprep.subr.mxu0 0.0
        %2635 = vmatpush1.msra.mxu0 0.0
        %2636 = vmatprep.subr.mxu0 0.0
        %2637 = vmatpush1.msra.mxu0 0.0
        %2638 = vmatprep.subr.mxu0 0.0
        %2639 = vmatpush1.msra.mxu0 0.0
        %2640 = vmatprep.subr.mxu0 0.0
        %2641 = vmatpush1.msra.mxu0 0.0
        %2642 = vmatprep.subr.mxu0 0.0
        %2643 = vmatpush1.msra.mxu0 0.0
        %2644 = vmatprep.mubr.f32.mxu0 0.0
        %2645 = vmatmul.mubr.f32.gmra.mrb[0].mxu0 %v2578
        %v2646 = vpop.f32.mrb[0].mxu0
        %v2647 = vadd.f32 0.0, %v2646
        %v2648 = vpop.f32.mrb[0].mxu0
        %2649 = vdwg.mxu0
        %2654 = vrot.lane.b32.xlu0 %v2428, 16
        %v2655 = vpop.permute.xlu0 %2654
        %2656 = vrot.lane.b32.xlu0 %v2501, 16
        %v2657 = vpop.permute.xlu0 %2656
        %2658 = vrot.lane.b32.xlu0 %v2574, 16
        %v2659 = vpop.permute.xlu0 %2658
        %2660 = vrot.lane.b32.xlu0 %v2647, 16
        %v2661 = vpop.permute.xlu0 %2660
        %vm2666 = vcmask 189568
        %2667 = vst.msk [vmem:[#allocation5] sm:$0x3] %vm2666, %v2655
        %2668 = vst.msk [vmem:[#allocation5 + $0x2] sm:$0x3] %vm2666, %v2657
        %2669 = vst.msk [vmem:[#allocation5 + $0x4] sm:$0x3] %vm2666, %v2659
        %2670 = vst.msk [vmem:[#allocation5 + $0x6] sm:$0x3] %vm2666, %v2661
        %v2671 = vld [vmem:[#allocation2 + $0x6] sm:$0x3]
        %v2672 = vld [vmem:[#allocation2 + $0xe] sm:$0x3]
        %v2673 = vld [vmem:[#allocation2 + $0x16] sm:$0x3]
        %v2674 = vld [vmem:[#allocation2 + $0x1e] sm:$0x3]
        %v2675 = vld [vmem:[#allocation3] sm:$0xff]
        %v2676 = vld [vmem:[#allocation3 + $0x8] sm:$0xff]
        %v2677 = vld [vmem:[#allocation3 + $0x10] sm:$0xff]
        %v2678 = vld [vmem:[#allocation3 + $0x18] sm:$0xff]
        %v2679 = vld [vmem:[#allocation4] sm:$0xff]
        %v2680 = vld [vmem:[#allocation4 + $0x8] sm:$0xff]
        %v2681 = vld [vmem:[#allocation4 + $0x10] sm:$0xff]
        %v2682 = vld [vmem:[#allocation4 + $0x18] sm:$0xff]
        %v2684 = vsel %vm655, %v2671, 0
        %v2687 = vsel %vm655, %v2675, 0
        %2689 = vmatprep.subr.mxu0 0.0
        %2690 = vmatpush1.xpose.msra.mxu0 %v2687
        %2691 = vmatprep.subr.mxu0 0.0
        %2692 = vmatpush1.xpose.msra.mxu0 0.0
        %2693 = vmatprep.subr.mxu0 0.0
        %2694 = vmatpush1.xpose.msra.mxu0 0.0
        %2695 = vmatprep.subr.mxu0 0.0
        %2696 = vmatpush1.xpose.msra.mxu0 0.0
        %2697 = vmatprep.subr.mxu0 0.0
        %2698 = vmatpush1.xpose.msra.mxu0 0.0
        %2699 = vmatprep.subr.mxu0 0.0
        %2700 = vmatpush1.xpose.msra.mxu0 0.0
        %2701 = vmatprep.subr.mxu0 0.0
        %2702 = vmatpush1.xpose.msra.mxu0 0.0
        %2703 = vmatprep.subr.mxu0 0.0
        %2704 = vmatpush1.xpose.msra.mxu0 0.0
        %2705 = vmatprep.subr.mxu0 0.0
        %2706 = vmatpush1.xpose.msra.mxu0 0.0
        %2707 = vmatprep.subr.mxu0 0.0
        %2708 = vmatpush1.xpose.msra.mxu0 0.0
        %2709 = vmatprep.subr.mxu0 0.0
        %2710 = vmatpush1.xpose.msra.mxu0 0.0
        %2711 = vmatprep.subr.mxu0 0.0
        %2712 = vmatpush1.xpose.msra.mxu0 0.0
        %2713 = vmatprep.subr.mxu0 0.0
        %2714 = vmatpush1.xpose.msra.mxu0 0.0
        %2715 = vmatprep.subr.mxu0 0.0
        %2716 = vmatpush1.xpose.msra.mxu0 0.0
        %2717 = vmatprep.subr.mxu0 0.0
        %2718 = vmatpush1.xpose.msra.mxu0 0.0
        %2719 = vmatprep.subr.mxu0 0.0
        %2720 = vmatpush1.xpose.msra.mxu0 0.0
        %2721 = vmatprep.subr.mxu0 0.0
        %2722 = vmatpush1.xpose.msra.mxu0 0.0
        %2723 = vmatprep.subr.mxu0 0.0
        %2724 = vmatpush1.xpose.msra.mxu0 0.0
        %2725 = vmatprep.subr.mxu0 0.0
        %2726 = vmatpush1.xpose.msra.mxu0 0.0
        %2727 = vmatprep.subr.mxu0 0.0
        %2728 = vmatpush1.xpose.msra.mxu0 0.0
        %2729 = vmatprep.subr.mxu0 0.0
        %2730 = vmatpush1.xpose.msra.mxu0 0.0
        %2731 = vmatprep.subr.mxu0 0.0
        %2732 = vmatpush1.xpose.msra.mxu0 0.0
        %2733 = vmatprep.subr.mxu0 0.0
        %2734 = vmatpush1.xpose.msra.mxu0 0.0
        %2735 = vmatprep.subr.mxu0 0.0
        %2736 = vmatpush1.xpose.msra.mxu0 0.0
        %2737 = vmatprep.subr.mxu0 0.0
        %2738 = vmatpush1.xpose.msra.mxu0 0.0
        %2739 = vmatprep.subr.mxu0 0.0
        %2740 = vmatpush1.xpose.msra.mxu0 0.0
        %2741 = vmatprep.subr.mxu0 0.0
        %2742 = vmatpush1.xpose.msra.mxu0 0.0
        %2743 = vmatprep.subr.mxu0 0.0
        %2744 = vmatpush1.xpose.msra.mxu0 0.0
        %2745 = vmatprep.subr.mxu0 0.0
        %2746 = vmatpush1.xpose.msra.mxu0 0.0
        %2747 = vmatprep.subr.mxu0 0.0
        %2748 = vmatpush1.xpose.msra.mxu0 0.0
        %2749 = vmatprep.subr.mxu0 0.0
        %2750 = vmatpush1.xpose.msra.mxu0 0.0
        %2751 = vmatprep.subr.mxu0 0.0
        %2752 = vmatpush1.xpose.msra.mxu0 0.0
        %2753 = vmatprep.mubr.f32.mxu0 0.0
        %2754 = vmatmul.mubr.f32.gmra.mrb[0].mxu0 %v2684
        %v2755 = vpop.f32.mrb[0].mxu0
        %v2756 = vadd.f32 0.0, %v2755
        %v2757 = vpop.f32.mrb[0].mxu0
        %2758 = vdwg.mxu0
        %v2760 = vsel %vm655, %v2672, 0
        %v2763 = vsel %vm655, %v2676, 0
        %2765 = vmatprep.subr.mxu0 0.0
        %2766 = vmatpush1.xpose.msra.mxu0 %v2763
        %2767 = vmatprep.subr.mxu0 0.0
        %2768 = vmatpush1.xpose.msra.mxu0 0.0
        %2769 = vmatprep.subr.mxu0 0.0
        %2770 = vmatpush1.xpose.msra.mxu0 0.0
        %2771 = vmatprep.subr.mxu0 0.0
        %2772 = vmatpush1.xpose.msra.mxu0 0.0
        %2773 = vmatprep.subr.mxu0 0.0
        %2774 = vmatpush1.xpose.msra.mxu0 0.0
        %2775 = vmatprep.subr.mxu0 0.0
        %2776 = vmatpush1.xpose.msra.mxu0 0.0
        %2777 = vmatprep.subr.mxu0 0.0
        %2778 = vmatpush1.xpose.msra.mxu0 0.0
        %2779 = vmatprep.subr.mxu0 0.0
        %2780 = vmatpush1.xpose.msra.mxu0 0.0
        %2781 = vmatprep.subr.mxu0 0.0
        %2782 = vmatpush1.xpose.msra.mxu0 0.0
        %2783 = vmatprep.subr.mxu0 0.0
        %2784 = vmatpush1.xpose.msra.mxu0 0.0
        %2785 = vmatprep.subr.mxu0 0.0
        %2786 = vmatpush1.xpose.msra.mxu0 0.0
        %2787 = vmatprep.subr.mxu0 0.0
        %2788 = vmatpush1.xpose.msra.mxu0 0.0
        %2789 = vmatprep.subr.mxu0 0.0
        %2790 = vmatpush1.xpose.msra.mxu0 0.0
        %2791 = vmatprep.subr.mxu0 0.0
        %2792 = vmatpush1.xpose.msra.mxu0 0.0
        %2793 = vmatprep.subr.mxu0 0.0
        %2794 = vmatpush1.xpose.msra.mxu0 0.0
        %2795 = vmatprep.subr.mxu0 0.0
        %2796 = vmatpush1.xpose.msra.mxu0 0.0
        %2797 = vmatprep.subr.mxu0 0.0
        %2798 = vmatpush1.xpose.msra.mxu0 0.0
        %2799 = vmatprep.subr.mxu0 0.0
        %2800 = vmatpush1.xpose.msra.mxu0 0.0
        %2801 = vmatprep.subr.mxu0 0.0
        %2802 = vmatpush1.xpose.msra.mxu0 0.0
        %2803 = vmatprep.subr.mxu0 0.0
        %2804 = vmatpush1.xpose.msra.mxu0 0.0
        %2805 = vmatprep.subr.mxu0 0.0
        %2806 = vmatpush1.xpose.msra.mxu0 0.0
        %2807 = vmatprep.subr.mxu0 0.0
        %2808 = vmatpush1.xpose.msra.mxu0 0.0
        %2809 = vmatprep.subr.mxu0 0.0
        %2810 = vmatpush1.xpose.msra.mxu0 0.0
        %2811 = vmatprep.subr.mxu0 0.0
        %2812 = vmatpush1.xpose.msra.mxu0 0.0
        %2813 = vmatprep.subr.mxu0 0.0
        %2814 = vmatpush1.xpose.msra.mxu0 0.0
        %2815 = vmatprep.subr.mxu0 0.0
        %2816 = vmatpush1.xpose.msra.mxu0 0.0
        %2817 = vmatprep.subr.mxu0 0.0
        %2818 = vmatpush1.xpose.msra.mxu0 0.0
        %2819 = vmatprep.subr.mxu0 0.0
        %2820 = vmatpush1.xpose.msra.mxu0 0.0
        %2821 = vmatprep.subr.mxu0 0.0
        %2822 = vmatpush1.xpose.msra.mxu0 0.0
        %2823 = vmatprep.subr.mxu0 0.0
        %2824 = vmatpush1.xpose.msra.mxu0 0.0
        %2825 = vmatprep.subr.mxu0 0.0
        %2826 = vmatpush1.xpose.msra.mxu0 0.0
        %2827 = vmatprep.subr.mxu0 0.0
        %2828 = vmatpush1.xpose.msra.mxu0 0.0
        %2829 = vmatprep.mubr.f32.mxu0 0.0
        %2830 = vmatmul.mubr.f32.gmra.mrb[0].mxu0 %v2760
        %v2831 = vpop.f32.mrb[0].mxu0
        %v2832 = vadd.f32 0.0, %v2831
        %v2833 = vpop.f32.mrb[0].mxu0
        %2834 = vdwg.mxu0
        %v2836 = vsel %vm655, %v2673, 0
        %v2839 = vsel %vm655, %v2677, 0
        %2841 = vmatprep.subr.mxu0 0.0
        %2842 = vmatpush1.xpose.msra.mxu0 %v2839
        %2843 = vmatprep.subr.mxu0 0.0
        %2844 = vmatpush1.xpose.msra.mxu0 0.0
        %2845 = vmatprep.subr.mxu0 0.0
        %2846 = vmatpush1.xpose.msra.mxu0 0.0
        %2847 = vmatprep.subr.mxu0 0.0
        %2848 = vmatpush1.xpose.msra.mxu0 0.0
        %2849 = vmatprep.subr.mxu0 0.0
        %2850 = vmatpush1.xpose.msra.mxu0 0.0
        %2851 = vmatprep.subr.mxu0 0.0
        %2852 = vmatpush1.xpose.msra.mxu0 0.0
        %2853 = vmatprep.subr.mxu0 0.0
        %2854 = vmatpush1.xpose.msra.mxu0 0.0
        %2855 = vmatprep.subr.mxu0 0.0
        %2856 = vmatpush1.xpose.msra.mxu0 0.0
        %2857 = vmatprep.subr.mxu0 0.0
        %2858 = vmatpush1.xpose.msra.mxu0 0.0
        %2859 = vmatprep.subr.mxu0 0.0
        %2860 = vmatpush1.xpose.msra.mxu0 0.0
        %2861 = vmatprep.subr.mxu0 0.0
        %2862 = vmatpush1.xpose.msra.mxu0 0.0
        %2863 = vmatprep.subr.mxu0 0.0
        %2864 = vmatpush1.xpose.msra.mxu0 0.0
        %2865 = vmatprep.subr.mxu0 0.0
        %2866 = vmatpush1.xpose.msra.mxu0 0.0
        %2867 = vmatprep.subr.mxu0 0.0
        %2868 = vmatpush1.xpose.msra.mxu0 0.0
        %2869 = vmatprep.subr.mxu0 0.0
        %2870 = vmatpush1.xpose.msra.mxu0 0.0
        %2871 = vmatprep.subr.mxu0 0.0
        %2872 = vmatpush1.xpose.msra.mxu0 0.0
        %2873 = vmatprep.subr.mxu0 0.0
        %2874 = vmatpush1.xpose.msra.mxu0 0.0
        %2875 = vmatprep.subr.mxu0 0.0
        %2876 = vmatpush1.xpose.msra.mxu0 0.0
        %2877 = vmatprep.subr.mxu0 0.0
        %2878 = vmatpush1.xpose.msra.mxu0 0.0
        %2879 = vmatprep.subr.mxu0 0.0
        %2880 = vmatpush1.xpose.msra.mxu0 0.0
        %2881 = vmatprep.subr.mxu0 0.0
        %2882 = vmatpush1.xpose.msra.mxu0 0.0
        %2883 = vmatprep.subr.mxu0 0.0
        %2884 = vmatpush1.xpose.msra.mxu0 0.0
        %2885 = vmatprep.subr.mxu0 0.0
        %2886 = vmatpush1.xpose.msra.mxu0 0.0
        %2887 = vmatprep.subr.mxu0 0.0
        %2888 = vmatpush1.xpose.msra.mxu0 0.0
        %2889 = vmatprep.subr.mxu0 0.0
        %2890 = vmatpush1.xpose.msra.mxu0 0.0
        %2891 = vmatprep.subr.mxu0 0.0
        %2892 = vmatpush1.xpose.msra.mxu0 0.0
        %2893 = vmatprep.subr.mxu0 0.0
        %2894 = vmatpush1.xpose.msra.mxu0 0.0
        %2895 = vmatprep.subr.mxu0 0.0
        %2896 = vmatpush1.xpose.msra.mxu0 0.0
        %2897 = vmatprep.subr.mxu0 0.0
        %2898 = vmatpush1.xpose.msra.mxu0 0.0
        %2899 = vmatprep.subr.mxu0 0.0
        %2900 = vmatpush1.xpose.msra.mxu0 0.0
        %2901 = vmatprep.subr.mxu0 0.0
        %2902 = vmatpush1.xpose.msra.mxu0 0.0
        %2903 = vmatprep.subr.mxu0 0.0
        %2904 = vmatpush1.xpose.msra.mxu0 0.0
        %2905 = vmatprep.mubr.f32.mxu0 0.0
        %2906 = vmatmul.mubr.f32.gmra.mrb[0].mxu0 %v2836
        %v2907 = vpop.f32.mrb[0].mxu0
        %v2908 = vadd.f32 0.0, %v2907
        %v2909 = vpop.f32.mrb[0].mxu0
        %2910 = vdwg.mxu0
        %v2912 = vsel %vm655, %v2674, 0
        %v2915 = vsel %vm655, %v2678, 0
        %2917 = vmatprep.subr.mxu0 0.0
        %2918 = vmatpush1.xpose.msra.mxu0 %v2915
        %2919 = vmatprep.subr.mxu0 0.0
        %2920 = vmatpush1.xpose.msra.mxu0 0.0
        %2921 = vmatprep.subr.mxu0 0.0
        %2922 = vmatpush1.xpose.msra.mxu0 0.0
        %2923 = vmatprep.subr.mxu0 0.0
        %2924 = vmatpush1.xpose.msra.mxu0 0.0
        %2925 = vmatprep.subr.mxu0 0.0
        %2926 = vmatpush1.xpose.msra.mxu0 0.0
        %2927 = vmatprep.subr.mxu0 0.0
        %2928 = vmatpush1.xpose.msra.mxu0 0.0
        %2929 = vmatprep.subr.mxu0 0.0
        %2930 = vmatpush1.xpose.msra.mxu0 0.0
        %2931 = vmatprep.subr.mxu0 0.0
        %2932 = vmatpush1.xpose.msra.mxu0 0.0
        %2933 = vmatprep.subr.mxu0 0.0
        %2934 = vmatpush1.xpose.msra.mxu0 0.0
        %2935 = vmatprep.subr.mxu0 0.0
        %2936 = vmatpush1.xpose.msra.mxu0 0.0
        %2937 = vmatprep.subr.mxu0 0.0
        %2938 = vmatpush1.xpose.msra.mxu0 0.0
        %2939 = vmatprep.subr.mxu0 0.0
        %2940 = vmatpush1.xpose.msra.mxu0 0.0
        %2941 = vmatprep.subr.mxu0 0.0
        %2942 = vmatpush1.xpose.msra.mxu0 0.0
        %2943 = vmatprep.subr.mxu0 0.0
        %2944 = vmatpush1.xpose.msra.mxu0 0.0
        %2945 = vmatprep.subr.mxu0 0.0
        %2946 = vmatpush1.xpose.msra.mxu0 0.0
        %2947 = vmatprep.subr.mxu0 0.0
        %2948 = vmatpush1.xpose.msra.mxu0 0.0
        %2949 = vmatprep.subr.mxu0 0.0
        %2950 = vmatpush1.xpose.msra.mxu0 0.0
        %2951 = vmatprep.subr.mxu0 0.0
        %2952 = vmatpush1.xpose.msra.mxu0 0.0
        %2953 = vmatprep.subr.mxu0 0.0
        %2954 = vmatpush1.xpose.msra.mxu0 0.0
        %2955 = vmatprep.subr.mxu0 0.0
        %2956 = vmatpush1.xpose.msra.mxu0 0.0
        %2957 = vmatprep.subr.mxu0 0.0
        %2958 = vmatpush1.xpose.msra.mxu0 0.0
        %2959 = vmatprep.subr.mxu0 0.0
        %2960 = vmatpush1.xpose.msra.mxu0 0.0
        %2961 = vmatprep.subr.mxu0 0.0
        %2962 = vmatpush1.xpose.msra.mxu0 0.0
        %2963 = vmatprep.subr.mxu0 0.0
        %2964 = vmatpush1.xpose.msra.mxu0 0.0
        %2965 = vmatprep.subr.mxu0 0.0
        %2966 = vmatpush1.xpose.msra.mxu0 0.0
        %2967 = vmatprep.subr.mxu0 0.0
        %2968 = vmatpush1.xpose.msra.mxu0 0.0
        %2969 = vmatprep.subr.mxu0 0.0
        %2970 = vmatpush1.xpose.msra.mxu0 0.0
        %2971 = vmatprep.subr.mxu0 0.0
        %2972 = vmatpush1.xpose.msra.mxu0 0.0
        %2973 = vmatprep.subr.mxu0 0.0
        %2974 = vmatpush1.xpose.msra.mxu0 0.0
        %2975 = vmatprep.subr.mxu0 0.0
        %2976 = vmatpush1.xpose.msra.mxu0 0.0
        %2977 = vmatprep.subr.mxu0 0.0
        %2978 = vmatpush1.xpose.msra.mxu0 0.0
        %2979 = vmatprep.subr.mxu0 0.0
        %2980 = vmatpush1.xpose.msra.mxu0 0.0
        %2981 = vmatprep.mubr.f32.mxu0 0.0
        %2982 = vmatmul.mubr.f32.gmra.mrb[0].mxu0 %v2912
        %v2983 = vpop.f32.mrb[0].mxu0
        %v2984 = vadd.f32 0.0, %v2983
        %v2985 = vpop.f32.mrb[0].mxu0
        %2986 = vdwg.mxu0
        %v2987 = vsel %vm1023, %v2756, -inf
        %v2988 = vsel %vm1023, %v2832, -inf
        %v2989 = vsel %vm1023, %v2908, -inf
        %v2990 = vsel %vm1023, %v2984, -inf
        %v2991 = vmax.f32 %v2987, %v2988
        %v2992 = vmax.f32 %v2989, %v2990
        %v2993 = vmax.f32 %v2991, %v2992
        %v2994 = vsub.f32 %v2756, %v2993
        %v2995 = vsub.f32 %v2832, %v2993
        %v2996 = vsub.f32 %v2908, %v2993
        %v2997 = vsub.f32 %v2984, %v2993
        %v2998 = vmul.f32 %v2994, 1.442695
        %v2999 = vpow.pop %v2998
        %v3000 = vmul.f32 %v2995, 1.442695
        %v3001 = vpow.pop %v3000
        %v3002 = vmul.f32 %v2996, 1.442695
        %v3003 = vpow.pop %v3002
        %v3004 = vmul.f32 %v2997, 1.442695
        %v3005 = vpow.pop %v3004
        %v3006 = vsel %vm1023, %v2999, 0.0
        %v3007 = vsel %vm1023, %v3001, 0.0
        %v3008 = vadd.f32 %v3006, %v3007
        %v3009 = vsel %vm1023, %v3003, 0.0
        %v3010 = vadd.f32 %v3008, %v3009
        %v3011 = vsel %vm1023, %v3005, 0.0
        %v3012 = vadd.f32 %v3010, %v3011
        %v3013 = vrcp.pop %v3012
        %v3014 = vmul.f32 %v2999, %v3013
        %v3015 = vmul.f32 %v3001, %v3013
        %v3016 = vmul.f32 %v3003, %v3013
        %v3017 = vmul.f32 %v3005, %v3013
        %v3019 = vsel %vm655, %v3014, 0
        %3021 = vmatprep.subr.mxu0 0.0
        %3022 = vmatpush1.msra.mxu0 %v2679
        %3023 = vmatprep.subr.mxu0 0.0
        %3024 = vmatpush1.msra.mxu0 0.0
        %3025 = vmatprep.subr.mxu0 0.0
        %3026 = vmatpush1.msra.mxu0 0.0
        %3027 = vmatprep.subr.mxu0 0.0
        %3028 = vmatpush1.msra.mxu0 0.0
        %3029 = vmatprep.subr.mxu0 0.0
        %3030 = vmatpush1.msra.mxu0 0.0
        %3031 = vmatprep.subr.mxu0 0.0
        %3032 = vmatpush1.msra.mxu0 0.0
        %3033 = vmatprep.subr.mxu0 0.0
        %3034 = vmatpush1.msra.mxu0 0.0
        %3035 = vmatprep.subr.mxu0 0.0
        %3036 = vmatpush1.msra.mxu0 0.0
        %3037 = vmatprep.subr.mxu0 0.0
        %3038 = vmatpush1.msra.mxu0 0.0
        %3039 = vmatprep.subr.mxu0 0.0
        %3040 = vmatpush1.msra.mxu0 0.0
        %3041 = vmatprep.subr.mxu0 0.0
        %3042 = vmatpush1.msra.mxu0 0.0
        %3043 = vmatprep.subr.mxu0 0.0
        %3044 = vmatpush1.msra.mxu0 0.0
        %3045 = vmatprep.subr.mxu0 0.0
        %3046 = vmatpush1.msra.mxu0 0.0
        %3047 = vmatprep.subr.mxu0 0.0
        %3048 = vmatpush1.msra.mxu0 0.0
        %3049 = vmatprep.subr.mxu0 0.0
        %3050 = vmatpush1.msra.mxu0 0.0
        %3051 = vmatprep.subr.mxu0 0.0
        %3052 = vmatpush1.msra.mxu0 0.0
        %3053 = vmatprep.subr.mxu0 0.0
        %3054 = vmatpush1.msra.mxu0 0.0
        %3055 = vmatprep.subr.mxu0 0.0
        %3056 = vmatpush1.msra.mxu0 0.0
        %3057 = vmatprep.subr.mxu0 0.0
        %3058 = vmatpush1.msra.mxu0 0.0
        %3059 = vmatprep.subr.mxu0 0.0
        %3060 = vmatpush1.msra.mxu0 0.0
        %3061 = vmatprep.subr.mxu0 0.0
        %3062 = vmatpush1.msra.mxu0 0.0
        %3063 = vmatprep.subr.mxu0 0.0
        %3064 = vmatpush1.msra.mxu0 0.0
        %3065 = vmatprep.subr.mxu0 0.0
        %3066 = vmatpush1.msra.mxu0 0.0
        %3067 = vmatprep.subr.mxu0 0.0
        %3068 = vmatpush1.msra.mxu0 0.0
        %3069 = vmatprep.subr.mxu0 0.0
        %3070 = vmatpush1.msra.mxu0 0.0
        %3071 = vmatprep.subr.mxu0 0.0
        %3072 = vmatpush1.msra.mxu0 0.0
        %3073 = vmatprep.subr.mxu0 0.0
        %3074 = vmatpush1.msra.mxu0 0.0
        %3075 = vmatprep.subr.mxu0 0.0
        %3076 = vmatpush1.msra.mxu0 0.0
        %3077 = vmatprep.subr.mxu0 0.0
        %3078 = vmatpush1.msra.mxu0 0.0
        %3079 = vmatprep.subr.mxu0 0.0
        %3080 = vmatpush1.msra.mxu0 0.0
        %3081 = vmatprep.subr.mxu0 0.0
        %3082 = vmatpush1.msra.mxu0 0.0
        %3083 = vmatprep.subr.mxu0 0.0
        %3084 = vmatpush1.msra.mxu0 0.0
        %3085 = vmatprep.mubr.f32.mxu0 0.0
        %3086 = vmatmul.mubr.f32.gmra.mrb[0].mxu0 %v3019
        %v3087 = vpop.f32.mrb[0].mxu0
        %v3088 = vadd.f32 0.0, %v3087
        %v3089 = vpop.f32.mrb[0].mxu0
        %3090 = vdwg.mxu0
        %v3092 = vsel %vm655, %v3015, 0
        %3094 = vmatprep.subr.mxu0 0.0
        %3095 = vmatpush1.msra.mxu0 %v2680
        %3096 = vmatprep.subr.mxu0 0.0
        %3097 = vmatpush1.msra.mxu0 0.0
        %3098 = vmatprep.subr.mxu0 0.0
        %3099 = vmatpush1.msra.mxu0 0.0
        %3100 = vmatprep.subr.mxu0 0.0
        %3101 = vmatpush1.msra.mxu0 0.0
        %3102 = vmatprep.subr.mxu0 0.0
        %3103 = vmatpush1.msra.mxu0 0.0
        %3104 = vmatprep.subr.mxu0 0.0
        %3105 = vmatpush1.msra.mxu0 0.0
        %3106 = vmatprep.subr.mxu0 0.0
        %3107 = vmatpush1.msra.mxu0 0.0
        %3108 = vmatprep.subr.mxu0 0.0
        %3109 = vmatpush1.msra.mxu0 0.0
        %3110 = vmatprep.subr.mxu0 0.0
        %3111 = vmatpush1.msra.mxu0 0.0
        %3112 = vmatprep.subr.mxu0 0.0
        %3113 = vmatpush1.msra.mxu0 0.0
        %3114 = vmatprep.subr.mxu0 0.0
        %3115 = vmatpush1.msra.mxu0 0.0
        %3116 = vmatprep.subr.mxu0 0.0
        %3117 = vmatpush1.msra.mxu0 0.0
        %3118 = vmatprep.subr.mxu0 0.0
        %3119 = vmatpush1.msra.mxu0 0.0
        %3120 = vmatprep.subr.mxu0 0.0
        %3121 = vmatpush1.msra.mxu0 0.0
        %3122 = vmatprep.subr.mxu0 0.0
        %3123 = vmatpush1.msra.mxu0 0.0
        %3124 = vmatprep.subr.mxu0 0.0
        %3125 = vmatpush1.msra.mxu0 0.0
        %3126 = vmatprep.subr.mxu0 0.0
        %3127 = vmatpush1.msra.mxu0 0.0
        %3128 = vmatprep.subr.mxu0 0.0
        %3129 = vmatpush1.msra.mxu0 0.0
        %3130 = vmatprep.subr.mxu0 0.0
        %3131 = vmatpush1.msra.mxu0 0.0
        %3132 = vmatprep.subr.mxu0 0.0
        %3133 = vmatpush1.msra.mxu0 0.0
        %3134 = vmatprep.subr.mxu0 0.0
        %3135 = vmatpush1.msra.mxu0 0.0
        %3136 = vmatprep.subr.mxu0 0.0
        %3137 = vmatpush1.msra.mxu0 0.0
        %3138 = vmatprep.subr.mxu0 0.0
        %3139 = vmatpush1.msra.mxu0 0.0
        %3140 = vmatprep.subr.mxu0 0.0
        %3141 = vmatpush1.msra.mxu0 0.0
        %3142 = vmatprep.subr.mxu0 0.0
        %3143 = vmatpush1.msra.mxu0 0.0
        %3144 = vmatprep.subr.mxu0 0.0
        %3145 = vmatpush1.msra.mxu0 0.0
        %3146 = vmatprep.subr.mxu0 0.0
        %3147 = vmatpush1.msra.mxu0 0.0
        %3148 = vmatprep.subr.mxu0 0.0
        %3149 = vmatpush1.msra.mxu0 0.0
        %3150 = vmatprep.subr.mxu0 0.0
        %3151 = vmatpush1.msra.mxu0 0.0
        %3152 = vmatprep.subr.mxu0 0.0
        %3153 = vmatpush1.msra.mxu0 0.0
        %3154 = vmatprep.subr.mxu0 0.0
        %3155 = vmatpush1.msra.mxu0 0.0
        %3156 = vmatprep.subr.mxu0 0.0
        %3157 = vmatpush1.msra.mxu0 0.0
        %3158 = vmatprep.mubr.f32.mxu0 0.0
        %3159 = vmatmul.mubr.f32.gmra.mrb[0].mxu0 %v3092
        %v3160 = vpop.f32.mrb[0].mxu0
        %v3161 = vadd.f32 0.0, %v3160
        %v3162 = vpop.f32.mrb[0].mxu0
        %3163 = vdwg.mxu0
        %v3165 = vsel %vm655, %v3016, 0
        %3167 = vmatprep.subr.mxu0 0.0
        %3168 = vmatpush1.msra.mxu0 %v2681
        %3169 = vmatprep.subr.mxu0 0.0
        %3170 = vmatpush1.msra.mxu0 0.0
        %3171 = vmatprep.subr.mxu0 0.0
        %3172 = vmatpush1.msra.mxu0 0.0
        %3173 = vmatprep.subr.mxu0 0.0
        %3174 = vmatpush1.msra.mxu0 0.0
        %3175 = vmatprep.subr.mxu0 0.0
        %3176 = vmatpush1.msra.mxu0 0.0
        %3177 = vmatprep.subr.mxu0 0.0
        %3178 = vmatpush1.msra.mxu0 0.0
        %3179 = vmatprep.subr.mxu0 0.0
        %3180 = vmatpush1.msra.mxu0 0.0
        %3181 = vmatprep.subr.mxu0 0.0
        %3182 = vmatpush1.msra.mxu0 0.0
        %3183 = vmatprep.subr.mxu0 0.0
        %3184 = vmatpush1.msra.mxu0 0.0
        %3185 = vmatprep.subr.mxu0 0.0
        %3186 = vmatpush1.msra.mxu0 0.0
        %3187 = vmatprep.subr.mxu0 0.0
        %3188 = vmatpush1.msra.mxu0 0.0
        %3189 = vmatprep.subr.mxu0 0.0
        %3190 = vmatpush1.msra.mxu0 0.0
        %3191 = vmatprep.subr.mxu0 0.0
        %3192 = vmatpush1.msra.mxu0 0.0
        %3193 = vmatprep.subr.mxu0 0.0
        %3194 = vmatpush1.msra.mxu0 0.0
        %3195 = vmatprep.subr.mxu0 0.0
        %3196 = vmatpush1.msra.mxu0 0.0
        %3197 = vmatprep.subr.mxu0 0.0
        %3198 = vmatpush1.msra.mxu0 0.0
        %3199 = vmatprep.subr.mxu0 0.0
        %3200 = vmatpush1.msra.mxu0 0.0
        %3201 = vmatprep.subr.mxu0 0.0
        %3202 = vmatpush1.msra.mxu0 0.0
        %3203 = vmatprep.subr.mxu0 0.0
        %3204 = vmatpush1.msra.mxu0 0.0
        %3205 = vmatprep.subr.mxu0 0.0
        %3206 = vmatpush1.msra.mxu0 0.0
        %3207 = vmatprep.subr.mxu0 0.0
        %3208 = vmatpush1.msra.mxu0 0.0
        %3209 = vmatprep.subr.mxu0 0.0
        %3210 = vmatpush1.msra.mxu0 0.0
        %3211 = vmatprep.subr.mxu0 0.0
        %3212 = vmatpush1.msra.mxu0 0.0
        %3213 = vmatprep.subr.mxu0 0.0
        %3214 = vmatpush1.msra.mxu0 0.0
        %3215 = vmatprep.subr.mxu0 0.0
        %3216 = vmatpush1.msra.mxu0 0.0
        %3217 = vmatprep.subr.mxu0 0.0
        %3218 = vmatpush1.msra.mxu0 0.0
        %3219 = vmatprep.subr.mxu0 0.0
        %3220 = vmatpush1.msra.mxu0 0.0
        %3221 = vmatprep.subr.mxu0 0.0
        %3222 = vmatpush1.msra.mxu0 0.0
        %3223 = vmatprep.subr.mxu0 0.0
        %3224 = vmatpush1.msra.mxu0 0.0
        %3225 = vmatprep.subr.mxu0 0.0
        %3226 = vmatpush1.msra.mxu0 0.0
        %3227 = vmatprep.subr.mxu0 0.0
        %3228 = vmatpush1.msra.mxu0 0.0
        %3229 = vmatprep.subr.mxu0 0.0
        %3230 = vmatpush1.msra.mxu0 0.0
        %3231 = vmatprep.mubr.f32.mxu0 0.0
        %3232 = vmatmul.mubr.f32.gmra.mrb[0].mxu0 %v3165
        %v3233 = vpop.f32.mrb[0].mxu0
        %v3234 = vadd.f32 0.0, %v3233
        %v3235 = vpop.f32.mrb[0].mxu0
        %3236 = vdwg.mxu0
        %v3238 = vsel %vm655, %v3017, 0
        %3240 = vmatprep.subr.mxu0 0.0
        %3241 = vmatpush1.msra.mxu0 %v2682
        %3242 = vmatprep.subr.mxu0 0.0
        %3243 = vmatpush1.msra.mxu0 0.0
        %3244 = vmatprep.subr.mxu0 0.0
        %3245 = vmatpush1.msra.mxu0 0.0
        %3246 = vmatprep.subr.mxu0 0.0
        %3247 = vmatpush1.msra.mxu0 0.0
        %3248 = vmatprep.subr.mxu0 0.0
        %3249 = vmatpush1.msra.mxu0 0.0
        %3250 = vmatprep.subr.mxu0 0.0
        %3251 = vmatpush1.msra.mxu0 0.0
        %3252 = vmatprep.subr.mxu0 0.0
        %3253 = vmatpush1.msra.mxu0 0.0
        %3254 = vmatprep.subr.mxu0 0.0
        %3255 = vmatpush1.msra.mxu0 0.0
        %3256 = vmatprep.subr.mxu0 0.0
        %3257 = vmatpush1.msra.mxu0 0.0
        %3258 = vmatprep.subr.mxu0 0.0
        %3259 = vmatpush1.msra.mxu0 0.0
        %3260 = vmatprep.subr.mxu0 0.0
        %3261 = vmatpush1.msra.mxu0 0.0
        %3262 = vmatprep.subr.mxu0 0.0
        %3263 = vmatpush1.msra.mxu0 0.0
        %3264 = vmatprep.subr.mxu0 0.0
        %3265 = vmatpush1.msra.mxu0 0.0
        %3266 = vmatprep.subr.mxu0 0.0
        %3267 = vmatpush1.msra.mxu0 0.0
        %3268 = vmatprep.subr.mxu0 0.0
        %3269 = vmatpush1.msra.mxu0 0.0
        %3270 = vmatprep.subr.mxu0 0.0
        %3271 = vmatpush1.msra.mxu0 0.0
        %3272 = vmatprep.subr.mxu0 0.0
        %3273 = vmatpush1.msra.mxu0 0.0
        %3274 = vmatprep.subr.mxu0 0.0
        %3275 = vmatpush1.msra.mxu0 0.0
        %3276 = vmatprep.subr.mxu0 0.0
        %3277 = vmatpush1.msra.mxu0 0.0
        %3278 = vmatprep.subr.mxu0 0.0
        %3279 = vmatpush1.msra.mxu0 0.0
        %3280 = vmatprep.subr.mxu0 0.0
        %3281 = vmatpush1.msra.mxu0 0.0
        %3282 = vmatprep.subr.mxu0 0.0
        %3283 = vmatpush1.msra.mxu0 0.0
        %3284 = vmatprep.subr.mxu0 0.0
        %3285 = vmatpush1.msra.mxu0 0.0
        %3286 = vmatprep.subr.mxu0 0.0
        %3287 = vmatpush1.msra.mxu0 0.0
        %3288 = vmatprep.subr.mxu0 0.0
        %3289 = vmatpush1.msra.mxu0 0.0
        %3290 = vmatprep.subr.mxu0 0.0
        %3291 = vmatpush1.msra.mxu0 0.0
        %3292 = vmatprep.subr.mxu0 0.0
        %3293 = vmatpush1.msra.mxu0 0.0
        %3294 = vmatprep.subr.mxu0 0.0
        %3295 = vmatpush1.msra.mxu0 0.0
        %3296 = vmatprep.subr.mxu0 0.0
        %3297 = vmatpush1.msra.mxu0 0.0
        %3298 = vmatprep.subr.mxu0 0.0
        %3299 = vmatpush1.msra.mxu0 0.0
        %3300 = vmatprep.subr.mxu0 0.0
        %3301 = vmatpush1.msra.mxu0 0.0
        %3302 = vmatprep.subr.mxu0 0.0
        %3303 = vmatpush1.msra.mxu0 0.0
        %3304 = vmatprep.mubr.f32.mxu0 0.0
        %3305 = vmatmul.mubr.f32.gmra.mrb[0].mxu0 %v3238
        %v3306 = vpop.f32.mrb[0].mxu0
        %v3307 = vadd.f32 0.0, %v3306
        %v3308 = vpop.f32.mrb[0].mxu0
        %3309 = vdwg.mxu0
        %3314 = vrot.lane.b32.xlu0 %v3088, 24
        %v3315 = vpop.permute.xlu0 %3314
        %3316 = vrot.lane.b32.xlu0 %v3161, 24
        %v3317 = vpop.permute.xlu0 %3316
        %3318 = vrot.lane.b32.xlu0 %v3234, 24
        %v3319 = vpop.permute.xlu0 %3318
        %3320 = vrot.lane.b32.xlu0 %v3307, 24
        %v3321 = vpop.permute.xlu0 %3320
        %vm3326 = vcmask 255168
        %3327 = vst.msk [vmem:[#allocation5] sm:$0x3] %vm3326, %v3315
        %3328 = vst.msk [vmem:[#allocation5 + $0x2] sm:$0x3] %vm3326, %v3317
        %3329 = vst.msk [vmem:[#allocation5 + $0x4] sm:$0x3] %vm3326, %v3319
        %3330 = vst.msk [vmem:[#allocation5 + $0x6] sm:$0x3] %vm3326, %v3321
        %v3331 = vld [vmem:[#allocation14] sm:$0xff]
        %v3332 = vld [vmem:[#allocation14 + $0x8] sm:$0xff]
        %v3333 = vld [vmem:[#allocation14 + $0x10] sm:$0xff]
        %v3334 = vld [vmem:[#allocation14 + $0x18] sm:$0xff]
        %v3335 = vld [vmem:[%s8] sm:$0x1]
        %v3336 = vld [vmem:[#allocation5] sm:$0x3]
        %v3338 = vlaneseq
        %v3339 = vshrl.u32 %v3338, 7
        %v3340 = vsub.s32 0, %v3339
        %v3341 = vrot.slane %v3335, %v3340
        %v3344 = vsel %vm418, %v3336, 0
        %3346 = vmatprep.subr.mxu0 0.0
        %3347 = vmatpush1.msra.mxu0 %v3331
        %3348 = vmatprep.subr.mxu0 0.0
        %3349 = vmatpush1.msra.mxu0 %v3332
        %3350 = vmatprep.subr.mxu0 0.0
        %3351 = vmatpush1.msra.mxu0 %v3333
        %3352 = vmatprep.subr.mxu0 0.0
        %3353 = vmatpush1.msra.mxu0 %v3334
        %3354 = vmatprep.subr.mxu0 0.0
        %3355 = vmatpush1.msra.mxu0 0.0
        %3356 = vmatprep.subr.mxu0 0.0
        %3357 = vmatpush1.msra.mxu0 0.0
        %3358 = vmatprep.subr.mxu0 0.0
        %3359 = vmatpush1.msra.mxu0 0.0
        %3360 = vmatprep.subr.mxu0 0.0
        %3361 = vmatpush1.msra.mxu0 0.0
        %3362 = vmatprep.subr.mxu0 0.0
        %3363 = vmatpush1.msra.mxu0 0.0
        %3364 = vmatprep.subr.mxu0 0.0
        %3365 = vmatpush1.msra.mxu0 0.0
        %3366 = vmatprep.subr.mxu0 0.0
        %3367 = vmatpush1.msra.mxu0 0.0
        %3368 = vmatprep.subr.mxu0 0.0
        %3369 = vmatpush1.msra.mxu0 0.0
        %3370 = vmatprep.subr.mxu0 0.0
        %3371 = vmatpush1.msra.mxu0 0.0
        %3372 = vmatprep.subr.mxu0 0.0
        %3373 = vmatpush1.msra.mxu0 0.0
        %3374 = vmatprep.subr.mxu0 0.0
        %3375 = vmatpush1.msra.mxu0 0.0
        %3376 = vmatprep.subr.mxu0 0.0
        %3377 = vmatpush1.msra.mxu0 0.0
        %3378 = vmatprep.subr.mxu0 0.0
        %3379 = vmatpush1.msra.mxu0 0.0
        %3380 = vmatprep.subr.mxu0 0.0
        %3381 = vmatpush1.msra.mxu0 0.0
        %3382 = vmatprep.subr.mxu0 0.0
        %3383 = vmatpush1.msra.mxu0 0.0
        %3384 = vmatprep.subr.mxu0 0.0
        %3385 = vmatpush1.msra.mxu0 0.0
        %3386 = vmatprep.subr.mxu0 0.0
        %3387 = vmatpush1.msra.mxu0 0.0
        %3388 = vmatprep.subr.mxu0 0.0
        %3389 = vmatpush1.msra.mxu0 0.0
        %3390 = vmatprep.subr.mxu0 0.0
        %3391 = vmatpush1.msra.mxu0 0.0
        %3392 = vmatprep.subr.mxu0 0.0
        %3393 = vmatpush1.msra.mxu0 0.0
        %3394 = vmatprep.subr.mxu0 0.0
        %3395 = vmatpush1.msra.mxu0 0.0
        %3396 = vmatprep.subr.mxu0 0.0
        %3397 = vmatpush1.msra.mxu0 0.0
        %3398 = vmatprep.subr.mxu0 0.0
        %3399 = vmatpush1.msra.mxu0 0.0
        %3400 = vmatprep.subr.mxu0 0.0
        %3401 = vmatpush1.msra.mxu0 0.0
        %3402 = vmatprep.subr.mxu0 0.0
        %3403 = vmatpush1.msra.mxu0 0.0
        %3404 = vmatprep.subr.mxu0 0.0
        %3405 = vmatpush1.msra.mxu0 0.0
        %3406 = vmatprep.subr.mxu0 0.0
        %3407 = vmatpush1.msra.mxu0 0.0
        %3408 = vmatprep.subr.mxu0 0.0
        %3409 = vmatpush1.msra.mxu0 0.0
        %3410 = vmatprep.mubr.f32.mxu0 0.0
        %3411 = vmatmul.mubr.f32.gmra.mrb[0].mxu0 %v3344
        %v3412 = vpop.f32.mrb[0].mxu0
        %v3413 = vadd.f32 %v3341, %v3412
        %v3414 = vpop.f32.mrb[0].mxu0
        %3415 = vdwg.mxu0
        %vm3416 = vcmask 254976
        %3417 = vst.msk [vmem:[%s405] sm:$0x3] %vm3416, %v3413
        %s3418 = scalar_lea.vmem [#allocation5], 2
        %v3419 = vld [vmem:[%s3418] sm:$0x3]
        %v3421 = vsel %vm418, %v3419, 0
        %3423 = vmatprep.subr.mxu0 0.0
        %3424 = vmatpush1.msra.mxu0 %v3331
        %3425 = vmatprep.subr.mxu0 0.0
        %3426 = vmatpush1.msra.mxu0 %v3332
        %3427 = vmatprep.subr.mxu0 0.0
        %3428 = vmatpush1.msra.mxu0 %v3333
        %3429 = vmatprep.subr.mxu0 0.0
        %3430 = vmatpush1.msra.mxu0 %v3334
        %3431 = vmatprep.subr.mxu0 0.0
        %3432 = vmatpush1.msra.mxu0 0.0
        %3433 = vmatprep.subr.mxu0 0.0
        %3434 = vmatpush1.msra.mxu0 0.0
        %3435 = vmatprep.subr.mxu0 0.0
        %3436 = vmatpush1.msra.mxu0 0.0
        %3437 = vmatprep.subr.mxu0 0.0
        %3438 = vmatpush1.msra.mxu0 0.0
        %3439 = vmatprep.subr.mxu0 0.0
        %3440 = vmatpush1.msra.mxu0 0.0
        %3441 = vmatprep.subr.mxu0 0.0
        %3442 = vmatpush1.msra.mxu0 0.0
        %3443 = vmatprep.subr.mxu0 0.0
        %3444 = vmatpush1.msra.mxu0 0.0
        %3445 = vmatprep.subr.mxu0 0.0
        %3446 = vmatpush1.msra.mxu0 0.0
        %3447 = vmatprep.subr.mxu0 0.0
        %3448 = vmatpush1.msra.mxu0 0.0
        %3449 = vmatprep.subr.mxu0 0.0
        %3450 = vmatpush1.msra.mxu0 0.0
        %3451 = vmatprep.subr.mxu0 0.0
        %3452 = vmatpush1.msra.mxu0 0.0
        %3453 = vmatprep.subr.mxu0 0.0
        %3454 = vmatpush1.msra.mxu0 0.0
        %3455 = vmatprep.subr.mxu0 0.0
        %3456 = vmatpush1.msra.mxu0 0.0
        %3457 = vmatprep.subr.mxu0 0.0
        %3458 = vmatpush1.msra.mxu0 0.0
        %3459 = vmatprep.subr.mxu0 0.0
        %3460 = vmatpush1.msra.mxu0 0.0
        %3461 = vmatprep.subr.mxu0 0.0
        %3462 = vmatpush1.msra.mxu0 0.0
        %3463 = vmatprep.subr.mxu0 0.0
        %3464 = vmatpush1.msra.mxu0 0.0
        %3465 = vmatprep.subr.mxu0 0.0
        %3466 = vmatpush1.msra.mxu0 0.0
        %3467 = vmatprep.subr.mxu0 0.0
        %3468 = vmatpush1.msra.mxu0 0.0
        %3469 = vmatprep.subr.mxu0 0.0
        %3470 = vmatpush1.msra.mxu0 0.0
        %3471 = vmatprep.subr.mxu0 0.0
        %3472 = vmatpush1.msra.mxu0 0.0
        %3473 = vmatprep.subr.mxu0 0.0
        %3474 = vmatpush1.msra.mxu0 0.0
        %3475 = vmatprep.subr.mxu0 0.0
        %3476 = vmatpush1.msra.mxu0 0.0
        %3477 = vmatprep.subr.mxu0 0.0
        %3478 = vmatpush1.msra.mxu0 0.0
        %3479 = vmatprep.subr.mxu0 0.0
        %3480 = vmatpush1.msra.mxu0 0.0
        %3481 = vmatprep.subr.mxu0 0.0
        %3482 = vmatpush1.msra.mxu0 0.0
        %3483 = vmatprep.subr.mxu0 0.0
        %3484 = vmatpush1.msra.mxu0 0.0
        %3485 = vmatprep.subr.mxu0 0.0
        %3486 = vmatpush1.msra.mxu0 0.0
        %3487 = vmatprep.mubr.f32.mxu0 0.0
        %3488 = vmatmul.mubr.f32.gmra.mrb[0].mxu0 %v3421
        %v3489 = vpop.f32.mrb[0].mxu0
        %v3490 = vadd.f32 %v3341, %v3489
        %v3491 = vpop.f32.mrb[0].mxu0
        %3492 = vdwg.mxu0
        %s3493 = scalar_lea.vmem %s405, 2 [#allocation15]
        %3494 = vst.msk [vmem:[%s3493] sm:$0x3] %vm3416, %v3490
        %s3495 = scalar_lea.vmem [#allocation5], 4
        %v3496 = vld [vmem:[%s3495] sm:$0x3]
        %v3498 = vsel %vm418, %v3496, 0
        %3500 = vmatprep.subr.mxu0 0.0
        %3501 = vmatpush1.msra.mxu0 %v3331
        %3502 = vmatprep.subr.mxu0 0.0
        %3503 = vmatpush1.msra.mxu0 %v3332
        %3504 = vmatprep.subr.mxu0 0.0
        %3505 = vmatpush1.msra.mxu0 %v3333
        %3506 = vmatprep.subr.mxu0 0.0
        %3507 = vmatpush1.msra.mxu0 %v3334
        %3508 = vmatprep.subr.mxu0 0.0
        %3509 = vmatpush1.msra.mxu0 0.0
        %3510 = vmatprep.subr.mxu0 0.0
        %3511 = vmatpush1.msra.mxu0 0.0
        %3512 = vmatprep.subr.mxu0 0.0
        %3513 = vmatpush1.msra.mxu0 0.0
        %3514 = vmatprep.subr.mxu0 0.0
        %3515 = vmatpush1.msra.mxu0 0.0
        %3516 = vmatprep.subr.mxu0 0.0
        %3517 = vmatpush1.msra.mxu0 0.0
        %3518 = vmatprep.subr.mxu0 0.0
        %3519 = vmatpush1.msra.mxu0 0.0
        %3520 = vmatprep.subr.mxu0 0.0
        %3521 = vmatpush1.msra.mxu0 0.0
        %3522 = vmatprep.subr.mxu0 0.0
        %3523 = vmatpush1.msra.mxu0 0.0
        %3524 = vmatprep.subr.mxu0 0.0
        %3525 = vmatpush1.msra.mxu0 0.0
        %3526 = vmatprep.subr.mxu0 0.0
        %3527 = vmatpush1.msra.mxu0 0.0
        %3528 = vmatprep.subr.mxu0 0.0
        %3529 = vmatpush1.msra.mxu0 0.0
        %3530 = vmatprep.subr.mxu0 0.0
        %3531 = vmatpush1.msra.mxu0 0.0
        %3532 = vmatprep.subr.mxu0 0.0
        %3533 = vmatpush1.msra.mxu0 0.0
        %3534 = vmatprep.subr.mxu0 0.0
        %3535 = vmatpush1.msra.mxu0 0.0
        %3536 = vmatprep.subr.mxu0 0.0
        %3537 = vmatpush1.msra.mxu0 0.0
        %3538 = vmatprep.subr.mxu0 0.0
        %3539 = vmatpush1.msra.mxu0 0.0
        %3540 = vmatprep.subr.mxu0 0.0
        %3541 = vmatpush1.msra.mxu0 0.0
        %3542 = vmatprep.subr.mxu0 0.0
        %3543 = vmatpush1.msra.mxu0 0.0
        %3544 = vmatprep.subr.mxu0 0.0
        %3545 = vmatpush1.msra.mxu0 0.0
        %3546 = vmatprep.subr.mxu0 0.0
        %3547 = vmatpush1.msra.mxu0 0.0
        %3548 = vmatprep.subr.mxu0 0.0
        %3549 = vmatpush1.msra.mxu0 0.0
        %3550 = vmatprep.subr.mxu0 0.0
        %3551 = vmatpush1.msra.mxu0 0.0
        %3552 = vmatprep.subr.mxu0 0.0
        %3553 = vmatpush1.msra.mxu0 0.0
        %3554 = vmatprep.subr.mxu0 0.0
        %3555 = vmatpush1.msra.mxu0 0.0
        %3556 = vmatprep.subr.mxu0 0.0
        %3557 = vmatpush1.msra.mxu0 0.0
        %3558 = vmatprep.subr.mxu0 0.0
        %3559 = vmatpush1.msra.mxu0 0.0
        %3560 = vmatprep.subr.mxu0 0.0
        %3561 = vmatpush1.msra.mxu0 0.0
        %3562 = vmatprep.subr.mxu0 0.0
        %3563 = vmatpush1.msra.mxu0 0.0
        %3564 = vmatprep.mubr.f32.mxu0 0.0
        %3565 = vmatmul.mubr.f32.gmra.mrb[0].mxu0 %v3498
        %v3566 = vpop.f32.mrb[0].mxu0
        %v3567 = vadd.f32 %v3341, %v3566
        %v3568 = vpop.f32.mrb[0].mxu0
        %3569 = vdwg.mxu0
        %s3570 = scalar_lea.vmem %s405, 4 [#allocation15]
        %3571 = vst.msk [vmem:[%s3570] sm:$0x3] %vm3416, %v3567
        %s3572 = scalar_lea.vmem [#allocation5], 6
        %v3573 = vld [vmem:[%s3572] sm:$0x3]
        %v3575 = vsel %vm418, %v3573, 0
        %3577 = vmatprep.subr.mxu0 0.0
        %3578 = vmatpush1.msra.mxu0 %v3331
        %3579 = vmatprep.subr.mxu0 0.0
        %3580 = vmatpush1.msra.mxu0 %v3332
        %3581 = vmatprep.subr.mxu0 0.0
        %3582 = vmatpush1.msra.mxu0 %v3333
        %3583 = vmatprep.subr.mxu0 0.0
        %3584 = vmatpush1.msra.mxu0 %v3334
        %3585 = vmatprep.subr.mxu0 0.0
        %3586 = vmatpush1.msra.mxu0 0.0
        %3587 = vmatprep.subr.mxu0 0.0
        %3588 = vmatpush1.msra.mxu0 0.0
        %3589 = vmatprep.subr.mxu0 0.0
        %3590 = vmatpush1.msra.mxu0 0.0
        %3591 = vmatprep.subr.mxu0 0.0
        %3592 = vmatpush1.msra.mxu0 0.0
        %3593 = vmatprep.subr.mxu0 0.0
        %3594 = vmatpush1.msra.mxu0 0.0
        %3595 = vmatprep.subr.mxu0 0.0
        %3596 = vmatpush1.msra.mxu0 0.0
        %3597 = vmatprep.subr.mxu0 0.0
        %3598 = vmatpush1.msra.mxu0 0.0
        %3599 = vmatprep.subr.mxu0 0.0
        %3600 = vmatpush1.msra.mxu0 0.0
        %3601 = vmatprep.subr.mxu0 0.0
        %3602 = vmatpush1.msra.mxu0 0.0
        %3603 = vmatprep.subr.mxu0 0.0
        %3604 = vmatpush1.msra.mxu0 0.0
        %3605 = vmatprep.subr.mxu0 0.0
        %3606 = vmatpush1.msra.mxu0 0.0
        %3607 = vmatprep.subr.mxu0 0.0
        %3608 = vmatpush1.msra.mxu0 0.0
        %3609 = vmatprep.subr.mxu0 0.0
        %3610 = vmatpush1.msra.mxu0 0.0
        %3611 = vmatprep.subr.mxu0 0.0
        %3612 = vmatpush1.msra.mxu0 0.0
        %3613 = vmatprep.subr.mxu0 0.0
        %3614 = vmatpush1.msra.mxu0 0.0
        %3615 = vmatprep.subr.mxu0 0.0
        %3616 = vmatpush1.msra.mxu0 0.0
        %3617 = vmatprep.subr.mxu0 0.0
        %3618 = vmatpush1.msra.mxu0 0.0
        %3619 = vmatprep.subr.mxu0 0.0
        %3620 = vmatpush1.msra.mxu0 0.0
        %3621 = vmatprep.subr.mxu0 0.0
        %3622 = vmatpush1.msra.mxu0 0.0
        %3623 = vmatprep.subr.mxu0 0.0
        %3624 = vmatpush1.msra.mxu0 0.0
        %3625 = vmatprep.subr.mxu0 0.0
        %3626 = vmatpush1.msra.mxu0 0.0
        %3627 = vmatprep.subr.mxu0 0.0
        %3628 = vmatpush1.msra.mxu0 0.0
        %3629 = vmatprep.subr.mxu0 0.0
        %3630 = vmatpush1.msra.mxu0 0.0
        %3631 = vmatprep.subr.mxu0 0.0
        %3632 = vmatpush1.msra.mxu0 0.0
        %3633 = vmatprep.subr.mxu0 0.0
        %3634 = vmatpush1.msra.mxu0 0.0
        %3635 = vmatprep.subr.mxu0 0.0
        %3636 = vmatpush1.msra.mxu0 0.0
        %3637 = vmatprep.subr.mxu0 0.0
        %3638 = vmatpush1.msra.mxu0 0.0
        %3639 = vmatprep.subr.mxu0 0.0
        %3640 = vmatpush1.msra.mxu0 0.0
        %3641 = vmatprep.mubr.f32.mxu0 0.0
        %3642 = vmatmul.mubr.f32.gmra.mrb[0].mxu0 %v3575
        %v3643 = vpop.f32.mrb[0].mxu0
        %v3644 = vadd.f32 %v3341, %v3643
        %v3645 = vpop.f32.mrb[0].mxu0
        %3646 = vdwg.mxu0
        %s3647 = scalar_lea.vmem %s405, 6 [#allocation15]
        %3648 = vst.msk [vmem:[%s3647] sm:$0x3] %vm3416, %v3644
        %s3649 = sand.u32 %s230, 1
        %s3650 = scalar_lea.sflag [#allocation8], %s3649
        %s3651 = sand.u32 %s230, 1
        %s3652 = smul.addr %s3651, 8
        %s3653 = scalar_lea.vmem [#allocation15], %s3652
        // Predicated region
        $region77: #{tpu_custom_call.1} parent=55 // pred_check
          %p3654 = pneg %p240
        $region78: #{tpu_custom_call.1} parent=55 // pred_check_branch
          %3656 = sbr.rel (%p3654) target = $region80
        $region79: #{tpu_custom_call.1} parent=55 // pred_region
          %s3658 = ssub.s32 128, 128
          %3659 = vsyncadd %s3650, %s3658
          %s3660 = smul.addr %s28, 4
          %s3661 = smul.addr %s3660, 32
          %s3662 = scalar_lea.hbm %s9, %s3661
          %s3663 = sshll.u32 %s3653, 4
          %s3664 = int_to_ptr.vmem [resolvable:$true] %s3663
          %3669 = dma.vmem_to_hbm [thread:$0]  %s3664, 128, %s3662, %s3650, 32, 32, 2
        $region80: #{tpu_custom_call.1} parent=55 // pred_fallthru
          _
      $region56: #{tpu_custom_call.1} parent=5 // pred_fallthru
        _
      %p3670 = scmp.le.s32.totalorder 2, %s23
      // Predicated region
      $region81: #{tpu_custom_call.1} parent=5 // pred_check
        %p3671 = pneg %p3670
      $region82: #{tpu_custom_call.1} parent=5 // pred_check_branch
        %3673 = sbr.rel (%p3671) target = $region84
      $region83: #{tpu_custom_call.1} parent=5 // pred_region
        %s3674 = ssub.s32 %s23, 2
        // Predicated region
        $region85: #{tpu_custom_call.1} parent=83 // pred_check
          %p3675 = pneg %p246
        $region86: #{tpu_custom_call.1} parent=83 // pred_check_branch
          %3677 = sbr.rel (%p3675) target = $region88
        $region87: #{tpu_custom_call.1} parent=83 // pred_region
          %s3678 = sand.u32 %s231, 1
          %s3679 = scalar_lea.sflag [#allocation8], %s3678
          %s3680 = sand.u32 %s231, 1
          %s3681 = smul.addr %s3680, 8
          %s3682 = scalar_lea.vmem [#allocation15], %s3681
          %3683 = dma.done %s3679, 128
        $region88: #{tpu_custom_call.1} parent=83 // pred_fallthru
          _
      $region84: #{tpu_custom_call.1} parent=5 // pred_fallthru
        _
    $region6: #{tpu_custom_call.1} parent=1 // loop_footer
      %s27 = sadd.s32 1, %s23
    $region7: #{tpu_custom_call.1} parent=1 // loop_footer_branch
      %22 = sbr.rel target = $region3
    $region8: #{tpu_custom_call.1} parent=1 // loop_exit
      _
    %3684 = vsyncpa [#allocation7], 1
    %s3685 = scalar_lea.sflag [#allocation7], 1
    %3686 = vsyncpa %s3685, 1
    %3687 = vsyncpa [#allocation10], 1
    %3688 = vsyncpa [#allocation13], 1
    %3689 = vsyncpa [#allocation8], 1
    %s3690 = scalar_lea.sflag [#allocation8], 1
    %3691 = vsyncpa %s3690, 1

</llo_original>
